<compile_context>
chip_gen: v5e
topology: v5e:2x2
jax: 0.10.0
libtpu: 0.0.40
codegen_flags: <defaults>
</compile_context>

<pallas_src>
import functools

import jax
import jax.numpy as jnp
from jax.experimental import pallas as pl
from jax.experimental.pallas import tpu as pltpu


def _round_up(x, m):
    return (x + m - 1) // m * m


def _fit_axis(a, axis, target):
    """Zero-pad or crop `a` along `axis` so its size is exactly `target`."""
    cur = a.shape[axis]
    if cur < target:
        pad = [(0, 0)] * a.ndim
        pad[axis] = (0, target - cur)
        return jnp.pad(a, pad)
    if cur > target:
        return jax.lax.slice_in_dim(a, 0, target, axis=axis)
    return a


def _pick_cout_tile(coutp):
    if coutp <= 512:
        return coutp
    for t in (512, 256, 128):
        if coutp % t == 0:
            return t
    return 128


# ---------------------------------------------------------------------------
# Pallas kernels
# ---------------------------------------------------------------------------
def conv_im2col_kernel(x_ref, w_ref, b_ref, *refs, k, s, Ho, Wo,
                       apply_relu, with_stats):
    """Fused im2col + matmul + bias (+ optional ReLU, + optional BN stats).

    x_ref:   (s*s, Hq, Wq, Cin)   phase-decomposed padded input of one image
                                  (x_ref[rh*s+rw, i, j, c] = x_pad[s*i+rh, s*j+rw, c]).
    w_ref:   (k*k*Cin, tn)        weights, K ordered (kh, kw, cin).
    b_ref:   (1, tn)              bias.
    y_ref:   (1, Ho*Wo, tn)       conv output block.
    sum_ref/sumsq_ref: (1, 1, tn) per-channel partial sums (BN statistics).
    patches_ref: VMEM scratch     (Ho*Wo, k*k*Cin).
    """
    if with_stats:
        y_ref, sum_ref, sumsq_ref, patches_ref = refs
    else:
        y_ref, patches_ref = refs

    # Gather the k*k shifted windows straight out of VMEM (no HBM im2col).
    # All slice starts are static Python ints -> plain vector loads/stores.
    for oh in range(Ho):
        pieces = []
        for kh in range(k):
            ah, rh = kh // s, kh % s
            for kw in range(k):
                aw, rw = kw // s, kw % s
                pieces.append(x_ref[rh * s + rw, ah + oh, aw:aw + Wo, :])
        row = pieces[0] if len(pieces) == 1 else jnp.concatenate(pieces, axis=-1)
        patches_ref[oh * Wo:(oh + 1) * Wo, :] = row

    # Single MXU matmul over the whole (kh, kw, cin) reduction.
    y = jnp.dot(patches_ref[...], w_ref[...],
                preferred_element_type=jnp.float32)
    y = y + b_ref[...]

    if with_stats:
        # Per-channel partial sums for BatchNorm (post-bias, pre-ReLU).
        sum_ref[0] = jnp.sum(y, axis=0, keepdims=True)
        sumsq_ref[0] = jnp.sum(y * y, axis=0, keepdims=True)

    if apply_relu:
        y = jnp.maximum(y, 0.0)
    y_ref[0] = y.astype(y_ref.dtype)


def affine_relu_kernel(y_ref, scale_ref, shift_ref, o_ref, *, apply_relu):
    """Elementwise y * scale + shift (folded BatchNorm), optional ReLU."""
    out = y_ref[...] * scale_ref[...] + shift_ref[...]
    if apply_relu:
        out = jnp.maximum(out, 0.0)
    o_ref[...] = out.astype(o_ref.dtype)


# ---------------------------------------------------------------------------
# Pallas wrappers
# ---------------------------------------------------------------------------
def _conv2d_pallas(x_ph, w2d, b2d, *, n, ho, wo, k, s, apply_relu, with_stats):
    _, hq, wq, cin = x_ph.shape
    kc, coutp = w2d.shape
    mo = ho * wo
    tn = _pick_cout_tile(coutp)
    n_co = coutp // tn

    out_shape = [jax.ShapeDtypeStruct((n, mo, coutp), jnp.float32)]
    out_specs = [pl.BlockSpec((1, mo, tn), lambda i, j: (i, 0, j))]
    if with_stats:
        stat_shape = jax.ShapeDtypeStruct((n, 1, coutp), jnp.float32)
        stat_spec = pl.BlockSpec((1, 1, tn), lambda i, j: (i, 0, j))
        out_shape += [stat_shape, stat_shape]
        out_specs += [stat_spec, stat_spec]

    kernel = functools.partial(conv_im2col_kernel, k=k, s=s, Ho=ho, Wo=wo,
                               apply_relu=apply_relu, with_stats=with_stats)

    # Rough double-buffered VMEM working set; raise the scoped limit only when
    # it would exceed the ~32 MiB default (keeps v5e/v7x defaults untouched
    # for small shapes).
    xblk = (s * s) * hq * wq * cin * 4
    est = 2 * (xblk + kc * tn * 4 + mo * tn * 4 + 3 * tn * 4) + mo * kc * 4
    cp = dict(dimension_semantics=("parallel", "parallel"))
    if est > 30 * (1 << 20):
        cp["vmem_limit_bytes"] = min(int(est * 1.4), 64 * (1 << 20))

    # Grid: (image, cout-tile).  cout is the inner axis so the phased input
    # block index is unchanged across it and is not re-fetched.
    res = pl.pallas_call(
        kernel,
        out_shape=tuple(out_shape),
        grid_spec=pltpu.PrefetchScalarGridSpec(
            num_scalar_prefetch=0,
            grid=(n, n_co),
            in_specs=[
                pl.BlockSpec((s * s, hq, wq, cin), lambda i, j: (i, 0, 0, 0)),
                pl.BlockSpec((kc, tn), lambda i, j: (0, j)),
                pl.BlockSpec((1, tn), lambda i, j: (0, j)),
            ],
            out_specs=tuple(out_specs),
            scratch_shapes=[pltpu.VMEM((mo, kc), jnp.float32)],
        ),
        compiler_params=pltpu.CompilerParams(**cp),
    )(x_ph, w2d, b2d)
    return res


def _affine_relu_pallas(y2d, scale, shift, apply_relu, tm=512):
    r, c = y2d.shape                       # c = padded Cout, multiple of 128
    tm = min(tm, _round_up(r, 8))
    rp = _round_up(r, tm)
    yp = jnp.pad(y2d, ((0, rp - r), (0, 0))) if rp != r else y2d
    out = pl.pallas_call(
        functools.partial(affine_relu_kernel, apply_relu=apply_relu),
        out_shape=jax.ShapeDtypeStruct((rp, c), jnp.float32),
        grid_spec=pltpu.PrefetchScalarGridSpec(
            num_scalar_prefetch=0,
            grid=(rp // tm,),
            in_specs=[
                pl.BlockSpec((tm, c), lambda i: (i, 0)),
                pl.BlockSpec((1, c), lambda i: (0, 0)),
                pl.BlockSpec((1, c), lambda i: (0, 0)),
            ],
            out_specs=pl.BlockSpec((tm, c), lambda i: (i, 0)),
        ),
        compiler_params=pltpu.CompilerParams(
            dimension_semantics=("parallel",)),
    )(yp, scale.reshape(1, c), shift.reshape(1, c))
    return out[:r] if rp != r else out


# ---------------------------------------------------------------------------
# Conv2d module (JAX / Pallas)
# ---------------------------------------------------------------------------
class Conv2dPallas:
    def __init__(self, key, in_channels, out_channels, kernel_size, stride=1,
                 relu=True, same_padding=False, bn=False):
        self.in_channels = in_channels
        self.out_channels = out_channels
        self.kernel_size = kernel_size
        self.stride = stride
        self.padding = int((kernel_size - 1) / 2) if same_padding else 0
        self.relu = relu
        self.bn = bn

        # Deterministic init mimicking PyTorch's default (U(+/- 1/sqrt(fan_in))).
        k1, k2 = jax.random.split(key)
        fan_in = in_channels * kernel_size * kernel_size
        bound = 1.0 / float(fan_in) ** 0.5
        self.weight = jax.random.uniform(
            k1, (out_channels, in_channels, kernel_size, kernel_size),
            jnp.float32, -bound, bound)        # OIHW, like torch
        self.bias = jax.random.uniform(k2, (out_channels,), jnp.float32,
                                       -bound, bound)
        if bn:
            self.gamma = jnp.ones((out_channels,), jnp.float32)
            self.beta = jnp.zeros((out_channels,), jnp.float32)
            self.eps = 1e-3                    # nn.BatchNorm2d(eps=0.001)

    def __call__(self, x):
        # x: (N, Cin, H, W)  -- NCHW, matching the PyTorch module.
        n, cin, h, w = x.shape
        k, s, p = self.kernel_size, self.stride, self.padding
        cout = self.out_channels
        ho = (h + 2 * p - k) // s + 1
        wo = (w + 2 * p - k) // s + 1
        hq = ho + (k - 1) // s
        wq = wo + (k - 1) // s
        coutp = _round_up(cout, 128)
        # TODO(synk): for very narrow Cout (e.g. 8) >90% of the padded MXU /
        # store lanes are zeros; a Wo*Cout lane packing would recover them.

        # ---- layout prep (single cheap pass; replaces the k^2 HBM im2col) --
        x_nhwc = jnp.transpose(x, (0, 2, 3, 1))
        x_pad = jnp.pad(x_nhwc, ((0, 0), (p, p), (p, p), (0, 0)))
        x_pad = _fit_axis(x_pad, 1, s * hq)
        x_pad = _fit_axis(x_pad, 2, s * wq)
        # Phase decomposition so the kernel only needs unit-stride windows:
        #   x_ph[n*s*s + rh*s + rw, i, j, c] = x_pad[n, s*i+rh, s*j+rw, c]
        x_ph = x_pad.reshape(n, hq, s, wq, s, cin)
        x_ph = x_ph.transpose(0, 2, 4, 1, 3, 5).reshape(n * s * s, hq, wq, cin)

        # Weights: OIHW -> (kh, kw, cin, cout) -> (k*k*cin, coutp)
        w2d = jnp.transpose(self.weight, (2, 3, 1, 0)).reshape(k * k * cin, cout)
        w2d = jnp.pad(w2d, ((0, 0), (0, coutp - cout)))
        b2d = jnp.pad(self.bias, (0, coutp - cout)).reshape(1, coutp)

        relu_in_conv = self.relu and not self.bn
        res = _conv2d_pallas(x_ph, w2d, b2d, n=n, ho=ho, wo=wo, k=k, s=s,
                             apply_relu=relu_in_conv, with_stats=self.bn)
        y = res[0]                                 # (n, ho*wo, coutp)

        if self.bn:
            # BatchNorm2d in training mode (momentum=0): batch statistics,
            # biased variance, eps=1e-3.  Stats come fused from the conv
            # kernel; only the tiny (Cout,) finalize runs in plain JAX.
            colsum, colsumsq = res[1], res[2]      # (n, 1, coutp)
            m_total = float(n * ho * wo)
            mean = jnp.sum(colsum, axis=(0, 1)) / m_total
            var = jnp.sum(colsumsq, axis=(0, 1)) / m_total - mean * mean
            inv_std = jax.lax.rsqrt(var + self.eps)
            gamma = jnp.pad(self.gamma, (0, coutp - cout))
            beta = jnp.pad(self.beta, (0, coutp - cout))
            scale = inv_std * gamma
            shift = beta - mean * scale
            y = _affine_relu_pallas(y.reshape(n * ho * wo, coutp),
                                    scale, shift, self.relu)
            y = y.reshape(n, ho * wo, coutp)

        # Back to NCHW to match the PyTorch module's output contract.
        y = y[:, :, :cout].reshape(n, ho, wo, cout).transpose(0, 3, 1, 2)
        return y


# ---------------------------------------------------------------------------
# Reference (plain JAX) for verification
# ---------------------------------------------------------------------------
def _reference(x, mod: Conv2dPallas):
    s, p = mod.stride, mod.padding
    y = jax.lax.conv_general_dilated(
        x, mod.weight, (s, s), [(p, p), (p, p)],
        dimension_numbers=("NCHW", "OIHW", "NCHW"))
    y = y + mod.bias[None, :, None, None]
    if mod.bn:
        mean = jnp.mean(y, axis=(0, 2, 3), keepdims=True)
        var = jnp.mean((y - mean) ** 2, axis=(0, 2, 3), keepdims=True)
        y = (y - mean) * jax.lax.rsqrt(var + mod.eps)
    if mod.relu:
        y = jnp.maximum(y, 0.0)
    return y


if __name__ == "__main__":
    key = jax.random.PRNGKey(0)
    kx, kw1, kw2 = jax.random.split(key, 3)

    x = jax.random.normal(kx, (2, 4, 16, 16), jnp.float32)  # NCHW

    # Config 1: conv + ReLU, same padding, stride 1
    m1 = Conv2dPallas(kw1, 4, 8, 3, stride=1, relu=True, same_padding=True,
                      bn=False)
    out1 = jax.block_until_ready(m1(x))
    ref1 = _reference(x, m1)
    assert out1.shape == (2, 8, 16, 16)
    assert jnp.allclose(out1, ref1, atol=1e-4, rtol=1e-4)

    # Config 2: conv + BN + ReLU, stride 2, no padding
    m2 = Conv2dPallas(kw2, 4, 8, 3, stride=2, relu=True, same_padding=False,
                      bn=True)
    out2 = jax.block_until_ready(m2(x))
    ref2 = _reference(x, m2)
    assert out2.shape == (2, 8, 7, 7)
    assert jnp.allclose(out2, ref2, atol=1e-4, rtol=1e-4)

    print("KERNEL_OK")
</pallas_src>

<mosaic_0001>
module attributes {stable_mosaic.version = 11 : i64} {
  func.func @conv_im2col_kernel(%arg0: i32, %arg1: i32, %arg2: memref<1x18x18x4xf32, #tpu.memory_space<vmem>>, %arg3: memref<36x128xf32, #tpu.memory_space<vmem>>, %arg4: memref<1x128xf32, #tpu.memory_space<vmem>>, %arg5: memref<1x256x128xf32, #tpu.memory_space<vmem>>, %arg6: memref<256x36xf32, #tpu.memory_space<vmem>>) attributes {dimension_semantics = [#tpu.dimension_semantics<parallel>, #tpu.dimension_semantics<parallel>], iteration_bounds = array<i64: 2, 1>, scalar_prefetch = 0 : i64, scratch_operands = 1 : i64, tpu.core_type = #tpu.core_type<tc>, window_params = [{transform_indices = @transform_0, window_bounds = array<i64: 1, 18, 18, 4>}, {transform_indices = @transform_1, window_bounds = array<i64: 36, 128>}, {transform_indices = @transform_2, window_bounds = array<i64: 1, 128>}, {transform_indices = @transform_3, window_bounds = array<i64: 1, 256, 128>}]} {
    %c0 = arith.constant 0 : index
    %c0_0 = arith.constant 0 : index
    %c0_1 = arith.constant 0 : index
    %c0_2 = arith.constant 0 : index
    %0 = vector.load %arg2[%c0, %c0_0, %c0_1, %c0_2] : memref<1x18x18x4xf32, #tpu.memory_space<vmem>>, vector<1x1x16x4xf32>
    %1 = vector.shape_cast %0 : vector<1x1x16x4xf32> to vector<16x4xf32>
    %c0_3 = arith.constant 0 : index
    %c0_4 = arith.constant 0 : index
    %c1 = arith.constant 1 : index
    %c0_5 = arith.constant 0 : index
    %2 = vector.load %arg2[%c0_3, %c0_4, %c1, %c0_5] : memref<1x18x18x4xf32, #tpu.memory_space<vmem>>, vector<1x1x16x4xf32>
    %3 = vector.shape_cast %2 : vector<1x1x16x4xf32> to vector<16x4xf32>
    %c0_6 = arith.constant 0 : index
    %c0_7 = arith.constant 0 : index
    %c2 = arith.constant 2 : index
    %c0_8 = arith.constant 0 : index
    %4 = vector.load %arg2[%c0_6, %c0_7, %c2, %c0_8] : memref<1x18x18x4xf32, #tpu.memory_space<vmem>>, vector<1x1x16x4xf32>
    %5 = vector.shape_cast %4 : vector<1x1x16x4xf32> to vector<16x4xf32>
    %c0_9 = arith.constant 0 : index
    %c1_10 = arith.constant 1 : index
    %c0_11 = arith.constant 0 : index
    %c0_12 = arith.constant 0 : index
    %6 = vector.load %arg2[%c0_9, %c1_10, %c0_11, %c0_12] : memref<1x18x18x4xf32, #tpu.memory_space<vmem>>, vector<1x1x16x4xf32>
    %7 = vector.shape_cast %6 : vector<1x1x16x4xf32> to vector<16x4xf32>
    %c0_13 = arith.constant 0 : index
    %c1_14 = arith.constant 1 : index
    %c1_15 = arith.constant 1 : index
    %c0_16 = arith.constant 0 : index
    %8 = vector.load %arg2[%c0_13, %c1_14, %c1_15, %c0_16] : memref<1x18x18x4xf32, #tpu.memory_space<vmem>>, vector<1x1x16x4xf32>
    %9 = vector.shape_cast %8 : vector<1x1x16x4xf32> to vector<16x4xf32>
    %c0_17 = arith.constant 0 : index
    %c1_18 = arith.constant 1 : index
    %c2_19 = arith.constant 2 : index
    %c0_20 = arith.constant 0 : index
    %10 = vector.load %arg2[%c0_17, %c1_18, %c2_19, %c0_20] : memref<1x18x18x4xf32, #tpu.memory_space<vmem>>, vector<1x1x16x4xf32>
    %11 = vector.shape_cast %10 : vector<1x1x16x4xf32> to vector<16x4xf32>
    %c0_21 = arith.constant 0 : index
    %c2_22 = arith.constant 2 : index
    %c0_23 = arith.constant 0 : index
    %c0_24 = arith.constant 0 : index
    %12 = vector.load %arg2[%c0_21, %c2_22, %c0_23, %c0_24] : memref<1x18x18x4xf32, #tpu.memory_space<vmem>>, vector<1x1x16x4xf32>
    %13 = vector.shape_cast %12 : vector<1x1x16x4xf32> to vector<16x4xf32>
    %c0_25 = arith.constant 0 : index
    %c2_26 = arith.constant 2 : index
    %c1_27 = arith.constant 1 : index
    %c0_28 = arith.constant 0 : index
    %14 = vector.load %arg2[%c0_25, %c2_26, %c1_27, %c0_28] : memref<1x18x18x4xf32, #tpu.memory_space<vmem>>, vector<1x1x16x4xf32>
    %15 = vector.shape_cast %14 : vector<1x1x16x4xf32> to vector<16x4xf32>
    %c0_29 = arith.constant 0 : index
    %c2_30 = arith.constant 2 : index
    %c2_31 = arith.constant 2 : index
    %c0_32 = arith.constant 0 : index
    %16 = vector.load %arg2[%c0_29, %c2_30, %c2_31, %c0_32] : memref<1x18x18x4xf32, #tpu.memory_space<vmem>>, vector<1x1x16x4xf32>
    %17 = vector.shape_cast %16 : vector<1x1x16x4xf32> to vector<16x4xf32>
    %18 = tpu.concatenate %1, %3, %5, %7, %9, %11, %13, %15, %17 in 1 : vector<16x4xf32>, vector<16x4xf32>, vector<16x4xf32>, vector<16x4xf32>, vector<16x4xf32>, vector<16x4xf32>, vector<16x4xf32>, vector<16x4xf32>, vector<16x4xf32> -> vector<16x36xf32>
    %c0_33 = arith.constant 0 : index
    %c0_34 = arith.constant 0 : index
    %19 = vector.load %arg6[%c0_33, %c0_34] : memref<256x36xf32, #tpu.memory_space<vmem>>, vector<16x36xf32>
    tpu.vector_store %arg6[%c0_33, %c0_34], %18 {strides = array<i32>} : memref<256x36xf32, #tpu.memory_space<vmem>>, vector<16x36xf32>,
    %c0_35 = arith.constant 0 : index
    %c1_36 = arith.constant 1 : index
    %c0_37 = arith.constant 0 : index
    %c0_38 = arith.constant 0 : index
    %20 = vector.load %arg2[%c0_35, %c1_36, %c0_37, %c0_38] : memref<1x18x18x4xf32, #tpu.memory_space<vmem>>, vector<1x1x16x4xf32>
    %21 = vector.shape_cast %20 : vector<1x1x16x4xf32> to vector<16x4xf32>
    %c0_39 = arith.constant 0 : index
    %c1_40 = arith.constant 1 : index
    %c1_41 = arith.constant 1 : index
    %c0_42 = arith.constant 0 : index
    %22 = vector.load %arg2[%c0_39, %c1_40, %c1_41, %c0_42] : memref<1x18x18x4xf32, #tpu.memory_space<vmem>>, vector<1x1x16x4xf32>
    %23 = vector.shape_cast %22 : vector<1x1x16x4xf32> to vector<16x4xf32>
    %c0_43 = arith.constant 0 : index
    %c1_44 = arith.constant 1 : index
    %c2_45 = arith.constant 2 : index
    %c0_46 = arith.constant 0 : index
    %24 = vector.load %arg2[%c0_43, %c1_44, %c2_45, %c0_46] : memref<1x18x18x4xf32, #tpu.memory_space<vmem>>, vector<1x1x16x4xf32>
    %25 = vector.shape_cast %24 : vector<1x1x16x4xf32> to vector<16x4xf32>
    %c0_47 = arith.constant 0 : index
    %c2_48 = arith.constant 2 : index
    %c0_49 = arith.constant 0 : index
    %c0_50 = arith.constant 0 : index
    %26 = vector.load %arg2[%c0_47, %c2_48, %c0_49, %c0_50] : memref<1x18x18x4xf32, #tpu.memory_space<vmem>>, vector<1x1x16x4xf32>
    %27 = vector.shape_cast %26 : vector<1x1x16x4xf32> to vector<16x4xf32>
    %c0_51 = arith.constant 0 : index
    %c2_52 = arith.constant 2 : index
    %c1_53 = arith.constant 1 : index
    %c0_54 = arith.constant 0 : index
    %28 = vector.load %arg2[%c0_51, %c2_52, %c1_53, %c0_54] : memref<1x18x18x4xf32, #tpu.memory_space<vmem>>, vector<1x1x16x4xf32>
    %29 = vector.shape_cast %28 : vector<1x1x16x4xf32> to vector<16x4xf32>
    %c0_55 = arith.constant 0 : index
    %c2_56 = arith.constant 2 : index
    %c2_57 = arith.constant 2 : index
    %c0_58 = arith.constant 0 : index
    %30 = vector.load %arg2[%c0_55, %c2_56, %c2_57, %c0_58] : memref<1x18x18x4xf32, #tpu.memory_space<vmem>>, vector<1x1x16x4xf32>
    %31 = vector.shape_cast %30 : vector<1x1x16x4xf32> to vector<16x4xf32>
    %c0_59 = arith.constant 0 : index
    %c3 = arith.constant 3 : index
    %c0_60 = arith.constant 0 : index
    %c0_61 = arith.constant 0 : index
    %32 = vector.load %arg2[%c0_59, %c3, %c0_60, %c0_61] : memref<1x18x18x4xf32, #tpu.memory_space<vmem>>, vector<1x1x16x4xf32>
    %33 = vector.shape_cast %32 : vector<1x1x16x4xf32> to vector<16x4xf32>
    %c0_62 = arith.constant 0 : index
    %c3_63 = arith.constant 3 : index
    %c1_64 = arith.constant 1 : index
    %c0_65 = arith.constant 0 : index
    %34 = vector.load %arg2[%c0_62, %c3_63, %c1_64, %c0_65] : memref<1x18x18x4xf32, #tpu.memory_space<vmem>>, vector<1x1x16x4xf32>
    %35 = vector.shape_cast %34 : vector<1x1x16x4xf32> to vector<16x4xf32>
    %c0_66 = arith.constant 0 : index
    %c3_67 = arith.constant 3 : index
    %c2_68 = arith.constant 2 : index
    %c0_69 = arith.constant 0 : index
    %36 = vector.load %arg2[%c0_66, %c3_67, %c2_68, %c0_69] : memref<1x18x18x4xf32, #tpu.memory_space<vmem>>, vector<1x1x16x4xf32>
    %37 = vector.shape_cast %36 : vector<1x1x16x4xf32> to vector<16x4xf32>
    %38 = tpu.concatenate %21, %23, %25, %27, %29, %31, %33, %35, %37 in 1 : vector<16x4xf32>, vector<16x4xf32>, vector<16x4xf32>, vector<16x4xf32>, vector<16x4xf32>, vector<16x4xf32>, vector<16x4xf32>, vector<16x4xf32>, vector<16x4xf32> -> vector<16x36xf32>
    %c16 = arith.constant 16 : index
    %c0_70 = arith.constant 0 : index
    %39 = vector.load %arg6[%c16, %c0_70] : memref<256x36xf32, #tpu.memory_space<vmem>>, vector<16x36xf32>
    tpu.vector_store %arg6[%c16, %c0_70], %38 {strides = array<i32>} : memref<256x36xf32, #tpu.memory_space<vmem>>, vector<16x36xf32>,
    %c0_71 = arith.constant 0 : index
    %c2_72 = arith.constant 2 : index
    %c0_73 = arith.constant 0 : index
    %c0_74 = arith.constant 0 : index
    %40 = vector.load %arg2[%c0_71, %c2_72, %c0_73, %c0_74] : memref<1x18x18x4xf32, #tpu.memory_space<vmem>>, vector<1x1x16x4xf32>
    %41 = vector.shape_cast %40 : vector<1x1x16x4xf32> to vector<16x4xf32>
    %c0_75 = arith.constant 0 : index
    %c2_76 = arith.constant 2 : index
    %c1_77 = arith.constant 1 : index
    %c0_78 = arith.constant 0 : index
    %42 = vector.load %arg2[%c0_75, %c2_76, %c1_77, %c0_78] : memref<1x18x18x4xf32, #tpu.memory_space<vmem>>, vector<1x1x16x4xf32>
    %43 = vector.shape_cast %42 : vector<1x1x16x4xf32> to vector<16x4xf32>
    %c0_79 = arith.constant 0 : index
    %c2_80 = arith.constant 2 : index
    %c2_81 = arith.constant 2 : index
    %c0_82 = arith.constant 0 : index
    %44 = vector.load %arg2[%c0_79, %c2_80, %c2_81, %c0_82] : memref<1x18x18x4xf32, #tpu.memory_space<vmem>>, vector<1x1x16x4xf32>
    %45 = vector.shape_cast %44 : vector<1x1x16x4xf32> to vector<16x4xf32>
    %c0_83 = arith.constant 0 : index
    %c3_84 = arith.constant 3 : index
    %c0_85 = arith.constant 0 : index
    %c0_86 = arith.constant 0 : index
    %46 = vector.load %arg2[%c0_83, %c3_84, %c0_85, %c0_86] : memref<1x18x18x4xf32, #tpu.memory_space<vmem>>, vector<1x1x16x4xf32>
    %47 = vector.shape_cast %46 : vector<1x1x16x4xf32> to vector<16x4xf32>
    %c0_87 = arith.constant 0 : index
    %c3_88 = arith.constant 3 : index
    %c1_89 = arith.constant 1 : index
    %c0_90 = arith.constant 0 : index
    %48 = vector.load %arg2[%c0_87, %c3_88, %c1_89, %c0_90] : memref<1x18x18x4xf32, #tpu.memory_space<vmem>>, vector<1x1x16x4xf32>
    %49 = vector.shape_cast %48 : vector<1x1x16x4xf32> to vector<16x4xf32>
    %c0_91 = arith.constant 0 : index
    %c3_92 = arith.constant 3 : index
    %c2_93 = arith.constant 2 : index
    %c0_94 = arith.constant 0 : index
    %50 = vector.load %arg2[%c0_91, %c3_92, %c2_93, %c0_94] : memref<1x18x18x4xf32, #tpu.memory_space<vmem>>, vector<1x1x16x4xf32>
    %51 = vector.shape_cast %50 : vector<1x1x16x4xf32> to vector<16x4xf32>
    %c0_95 = arith.constant 0 : index
    %c4 = arith.constant 4 : index
    %c0_96 = arith.constant 0 : index
    %c0_97 = arith.constant 0 : index
    %52 = vector.load %arg2[%c0_95, %c4, %c0_96, %c0_97] : memref<1x18x18x4xf32, #tpu.memory_space<vmem>>, vector<1x1x16x4xf32>
    %53 = vector.shape_cast %52 : vector<1x1x16x4xf32> to vector<16x4xf32>
    %c0_98 = arith.constant 0 : index
    %c4_99 = arith.constant 4 : index
    %c1_100 = arith.constant 1 : index
    %c0_101 = arith.constant 0 : index
    %54 = vector.load %arg2[%c0_98, %c4_99, %c1_100, %c0_101] : memref<1x18x18x4xf32, #tpu.memory_space<vmem>>, vector<1x1x16x4xf32>
    %55 = vector.shape_cast %54 : vector<1x1x16x4xf32> to vector<16x4xf32>
    %c0_102 = arith.constant 0 : index
    %c4_103 = arith.constant 4 : index
    %c2_104 = arith.constant 2 : index
    %c0_105 = arith.constant 0 : index
    %56 = vector.load %arg2[%c0_102, %c4_103, %c2_104, %c0_105] : memref<1x18x18x4xf32, #tpu.memory_space<vmem>>, vector<1x1x16x4xf32>
    %57 = vector.shape_cast %56 : vector<1x1x16x4xf32> to vector<16x4xf32>
    %58 = tpu.concatenate %41, %43, %45, %47, %49, %51, %53, %55, %57 in 1 : vector<16x4xf32>, vector<16x4xf32>, vector<16x4xf32>, vector<16x4xf32>, vector<16x4xf32>, vector<16x4xf32>, vector<16x4xf32>, vector<16x4xf32>, vector<16x4xf32> -> vector<16x36xf32>
    %c32 = arith.constant 32 : index
    %c0_106 = arith.constant 0 : index
    %59 = vector.load %arg6[%c32, %c0_106] : memref<256x36xf32, #tpu.memory_space<vmem>>, vector<16x36xf32>
    tpu.vector_store %arg6[%c32, %c0_106], %58 {strides = array<i32>} : memref<256x36xf32, #tpu.memory_space<vmem>>, vector<16x36xf32>,
    %c0_107 = arith.constant 0 : index
    %c3_108 = arith.constant 3 : index
    %c0_109 = arith.constant 0 : index
    %c0_110 = arith.constant 0 : index
    %60 = vector.load %arg2[%c0_107, %c3_108, %c0_109, %c0_110] : memref<1x18x18x4xf32, #tpu.memory_space<vmem>>, vector<1x1x16x4xf32>
    %61 = vector.shape_cast %60 : vector<1x1x16x4xf32> to vector<16x4xf32>
    %c0_111 = arith.constant 0 : index
    %c3_112 = arith.constant 3 : index
    %c1_113 = arith.constant 1 : index
    %c0_114 = arith.constant 0 : index
    %62 = vector.load %arg2[%c0_111, %c3_112, %c1_113, %c0_114] : memref<1x18x18x4xf32, #tpu.memory_space<vmem>>, vector<1x1x16x4xf32>
    %63 = vector.shape_cast %62 : vector<1x1x16x4xf32> to vector<16x4xf32>
    %c0_115 = arith.constant 0 : index
    %c3_116 = arith.constant 3 : index
    %c2_117 = arith.constant 2 : index
    %c0_118 = arith.constant 0 : index
    %64 = vector.load %arg2[%c0_115, %c3_116, %c2_117, %c0_118] : memref<1x18x18x4xf32, #tpu.memory_space<vmem>>, vector<1x1x16x4xf32>
    %65 = vector.shape_cast %64 : vector<1x1x16x4xf32> to vector<16x4xf32>
    %c0_119 = arith.constant 0 : index
    %c4_120 = arith.constant 4 : index
    %c0_121 = arith.constant 0 : index
    %c0_122 = arith.constant 0 : index
    %66 = vector.load %arg2[%c0_119, %c4_120, %c0_121, %c0_122] : memref<1x18x18x4xf32, #tpu.memory_space<vmem>>, vector<1x1x16x4xf32>
    %67 = vector.shape_cast %66 : vector<1x1x16x4xf32> to vector<16x4xf32>
    %c0_123 = arith.constant 0 : index
    %c4_124 = arith.constant 4 : index
    %c1_125 = arith.constant 1 : index
    %c0_126 = arith.constant 0 : index
    %68 = vector.load %arg2[%c0_123, %c4_124, %c1_125, %c0_126] : memref<1x18x18x4xf32, #tpu.memory_space<vmem>>, vector<1x1x16x4xf32>
    %69 = vector.shape_cast %68 : vector<1x1x16x4xf32> to vector<16x4xf32>
    %c0_127 = arith.constant 0 : index
    %c4_128 = arith.constant 4 : index
    %c2_129 = arith.constant 2 : index
    %c0_130 = arith.constant 0 : index
    %70 = vector.load %arg2[%c0_127, %c4_128, %c2_129, %c0_130] : memref<1x18x18x4xf32, #tpu.memory_space<vmem>>, vector<1x1x16x4xf32>
    %71 = vector.shape_cast %70 : vector<1x1x16x4xf32> to vector<16x4xf32>
    %c0_131 = arith.constant 0 : index
    %c5 = arith.constant 5 : index
    %c0_132 = arith.constant 0 : index
    %c0_133 = arith.constant 0 : index
    %72 = vector.load %arg2[%c0_131, %c5, %c0_132, %c0_133] : memref<1x18x18x4xf32, #tpu.memory_space<vmem>>, vector<1x1x16x4xf32>
    %73 = vector.shape_cast %72 : vector<1x1x16x4xf32> to vector<16x4xf32>
    %c0_134 = arith.constant 0 : index
    %c5_135 = arith.constant 5 : index
    %c1_136 = arith.constant 1 : index
    %c0_137 = arith.constant 0 : index
    %74 = vector.load %arg2[%c0_134, %c5_135, %c1_136, %c0_137] : memref<1x18x18x4xf32, #tpu.memory_space<vmem>>, vector<1x1x16x4xf32>
    %75 = vector.shape_cast %74 : vector<1x1x16x4xf32> to vector<16x4xf32>
    %c0_138 = arith.constant 0 : index
    %c5_139 = arith.constant 5 : index
    %c2_140 = arith.constant 2 : index
    %c0_141 = arith.constant 0 : index
    %76 = vector.load %arg2[%c0_138, %c5_139, %c2_140, %c0_141] : memref<1x18x18x4xf32, #tpu.memory_space<vmem>>, vector<1x1x16x4xf32>
    %77 = vector.shape_cast %76 : vector<1x1x16x4xf32> to vector<16x4xf32>
    %78 = tpu.concatenate %61, %63, %65, %67, %69, %71, %73, %75, %77 in 1 : vector<16x4xf32>, vector<16x4xf32>, vector<16x4xf32>, vector<16x4xf32>, vector<16x4xf32>, vector<16x4xf32>, vector<16x4xf32>, vector<16x4xf32>, vector<16x4xf32> -> vector<16x36xf32>
    %c48 = arith.constant 48 : index
    %c0_142 = arith.constant 0 : index
    %79 = vector.load %arg6[%c48, %c0_142] : memref<256x36xf32, #tpu.memory_space<vmem>>, vector<16x36xf32>
    tpu.vector_store %arg6[%c48, %c0_142], %78 {strides = array<i32>} : memref<256x36xf32, #tpu.memory_space<vmem>>, vector<16x36xf32>,
    %c0_143 = arith.constant 0 : index
    %c4_144 = arith.constant 4 : index
    %c0_145 = arith.constant 0 : index
    %c0_146 = arith.constant 0 : index
    %80 = vector.load %arg2[%c0_143, %c4_144, %c0_145, %c0_146] : memref<1x18x18x4xf32, #tpu.memory_space<vmem>>, vector<1x1x16x4xf32>
    %81 = vector.shape_cast %80 : vector<1x1x16x4xf32> to vector<16x4xf32>
    %c0_147 = arith.constant 0 : index
    %c4_148 = arith.constant 4 : index
    %c1_149 = arith.constant 1 : index
    %c0_150 = arith.constant 0 : index
    %82 = vector.load %arg2[%c0_147, %c4_148, %c1_149, %c0_150] : memref<1x18x18x4xf32, #tpu.memory_space<vmem>>, vector<1x1x16x4xf32>
    %83 = vector.shape_cast %82 : vector<1x1x16x4xf32> to vector<16x4xf32>
    %c0_151 = arith.constant 0 : index
    %c4_152 = arith.constant 4 : index
    %c2_153 = arith.constant 2 : index
    %c0_154 = arith.constant 0 : index
    %84 = vector.load %arg2[%c0_151, %c4_152, %c2_153, %c0_154] : memref<1x18x18x4xf32, #tpu.memory_space<vmem>>, vector<1x1x16x4xf32>
    %85 = vector.shape_cast %84 : vector<1x1x16x4xf32> to vector<16x4xf32>
    %c0_155 = arith.constant 0 : index
    %c5_156 = arith.constant 5 : index
    %c0_157 = arith.constant 0 : index
    %c0_158 = arith.constant 0 : index
    %86 = vector.load %arg2[%c0_155, %c5_156, %c0_157, %c0_158] : memref<1x18x18x4xf32, #tpu.memory_space<vmem>>, vector<1x1x16x4xf32>
    %87 = vector.shape_cast %86 : vector<1x1x16x4xf32> to vector<16x4xf32>
    %c0_159 = arith.constant 0 : index
    %c5_160 = arith.constant 5 : index
    %c1_161 = arith.constant 1 : index
    %c0_162 = arith.constant 0 : index
    %88 = vector.load %arg2[%c0_159, %c5_160, %c1_161, %c0_162] : memref<1x18x18x4xf32, #tpu.memory_space<vmem>>, vector<1x1x16x4xf32>
    %89 = vector.shape_cast %88 : vector<1x1x16x4xf32> to vector<16x4xf32>
    %c0_163 = arith.constant 0 : index
    %c5_164 = arith.constant 5 : index
    %c2_165 = arith.constant 2 : index
    %c0_166 = arith.constant 0 : index
    %90 = vector.load %arg2[%c0_163, %c5_164, %c2_165, %c0_166] : memref<1x18x18x4xf32, #tpu.memory_space<vmem>>, vector<1x1x16x4xf32>
    %91 = vector.shape_cast %90 : vector<1x1x16x4xf32> to vector<16x4xf32>
    %c0_167 = arith.constant 0 : index
    %c6 = arith.constant 6 : index
    %c0_168 = arith.constant 0 : index
    %c0_169 = arith.constant 0 : index
    %92 = vector.load %arg2[%c0_167, %c6, %c0_168, %c0_169] : memref<1x18x18x4xf32, #tpu.memory_space<vmem>>, vector<1x1x16x4xf32>
    %93 = vector.shape_cast %92 : vector<1x1x16x4xf32> to vector<16x4xf32>
    %c0_170 = arith.constant 0 : index
    %c6_171 = arith.constant 6 : index
    %c1_172 = arith.constant 1 : index
    %c0_173 = arith.constant 0 : index
    %94 = vector.load %arg2[%c0_170, %c6_171, %c1_172, %c0_173] : memref<1x18x18x4xf32, #tpu.memory_space<vmem>>, vector<1x1x16x4xf32>
    %95 = vector.shape_cast %94 : vector<1x1x16x4xf32> to vector<16x4xf32>
    %c0_174 = arith.constant 0 : index
    %c6_175 = arith.constant 6 : index
    %c2_176 = arith.constant 2 : index
    %c0_177 = arith.constant 0 : index
    %96 = vector.load %arg2[%c0_174, %c6_175, %c2_176, %c0_177] : memref<1x18x18x4xf32, #tpu.memory_space<vmem>>, vector<1x1x16x4xf32>
    %97 = vector.shape_cast %96 : vector<1x1x16x4xf32> to vector<16x4xf32>
    %98 = tpu.concatenate %81, %83, %85, %87, %89, %91, %93, %95, %97 in 1 : vector<16x4xf32>, vector<16x4xf32>, vector<16x4xf32>, vector<16x4xf32>, vector<16x4xf32>, vector<16x4xf32>, vector<16x4xf32>, vector<16x4xf32>, vector<16x4xf32> -> vector<16x36xf32>
    %c64 = arith.constant 64 : index
    %c0_178 = arith.constant 0 : index
    %99 = vector.load %arg6[%c64, %c0_178] : memref<256x36xf32, #tpu.memory_space<vmem>>, vector<16x36xf32>
    tpu.vector_store %arg6[%c64, %c0_178], %98 {strides = array<i32>} : memref<256x36xf32, #tpu.memory_space<vmem>>, vector<16x36xf32>,
    %c0_179 = arith.constant 0 : index
    %c5_180 = arith.constant 5 : index
    %c0_181 = arith.constant 0 : index
    %c0_182 = arith.constant 0 : index
    %100 = vector.load %arg2[%c0_179, %c5_180, %c0_181, %c0_182] : memref<1x18x18x4xf32, #tpu.memory_space<vmem>>, vector<1x1x16x4xf32>
    %101 = vector.shape_cast %100 : vector<1x1x16x4xf32> to vector<16x4xf32>
    %c0_183 = arith.constant 0 : index
    %c5_184 = arith.constant 5 : index
    %c1_185 = arith.constant 1 : index
    %c0_186 = arith.constant 0 : index
    %102 = vector.load %arg2[%c0_183, %c5_184, %c1_185, %c0_186] : memref<1x18x18x4xf32, #tpu.memory_space<vmem>>, vector<1x1x16x4xf32>
    %103 = vector.shape_cast %102 : vector<1x1x16x4xf32> to vector<16x4xf32>
    %c0_187 = arith.constant 0 : index
    %c5_188 = arith.constant 5 : index
    %c2_189 = arith.constant 2 : index
    %c0_190 = arith.constant 0 : index
    %104 = vector.load %arg2[%c0_187, %c5_188, %c2_189, %c0_190] : memref<1x18x18x4xf32, #tpu.memory_space<vmem>>, vector<1x1x16x4xf32>
    %105 = vector.shape_cast %104 : vector<1x1x16x4xf32> to vector<16x4xf32>
    %c0_191 = arith.constant 0 : index
    %c6_192 = arith.constant 6 : index
    %c0_193 = arith.constant 0 : index
    %c0_194 = arith.constant 0 : index
    %106 = vector.load %arg2[%c0_191, %c6_192, %c0_193, %c0_194] : memref<1x18x18x4xf32, #tpu.memory_space<vmem>>, vector<1x1x16x4xf32>
    %107 = vector.shape_cast %106 : vector<1x1x16x4xf32> to vector<16x4xf32>
    %c0_195 = arith.constant 0 : index
    %c6_196 = arith.constant 6 : index
    %c1_197 = arith.constant 1 : index
    %c0_198 = arith.constant 0 : index
    %108 = vector.load %arg2[%c0_195, %c6_196, %c1_197, %c0_198] : memref<1x18x18x4xf32, #tpu.memory_space<vmem>>, vector<1x1x16x4xf32>
    %109 = vector.shape_cast %108 : vector<1x1x16x4xf32> to vector<16x4xf32>
    %c0_199 = arith.constant 0 : index
    %c6_200 = arith.constant 6 : index
    %c2_201 = arith.constant 2 : index
    %c0_202 = arith.constant 0 : index
    %110 = vector.load %arg2[%c0_199, %c6_200, %c2_201, %c0_202] : memref<1x18x18x4xf32, #tpu.memory_space<vmem>>, vector<1x1x16x4xf32>
    %111 = vector.shape_cast %110 : vector<1x1x16x4xf32> to vector<16x4xf32>
    %c0_203 = arith.constant 0 : index
    %c7 = arith.constant 7 : index
    %c0_204 = arith.constant 0 : index
    %c0_205 = arith.constant 0 : index
    %112 = vector.load %arg2[%c0_203, %c7, %c0_204, %c0_205] : memref<1x18x18x4xf32, #tpu.memory_space<vmem>>, vector<1x1x16x4xf32>
    %113 = vector.shape_cast %112 : vector<1x1x16x4xf32> to vector<16x4xf32>
    %c0_206 = arith.constant 0 : index
    %c7_207 = arith.constant 7 : index
    %c1_208 = arith.constant 1 : index
    %c0_209 = arith.constant 0 : index
    %114 = vector.load %arg2[%c0_206, %c7_207, %c1_208, %c0_209] : memref<1x18x18x4xf32, #tpu.memory_space<vmem>>, vector<1x1x16x4xf32>
    %115 = vector.shape_cast %114 : vector<1x1x16x4xf32> to vector<16x4xf32>
    %c0_210 = arith.constant 0 : index
    %c7_211 = arith.constant 7 : index
    %c2_212 = arith.constant 2 : index
    %c0_213 = arith.constant 0 : index
    %116 = vector.load %arg2[%c0_210, %c7_211, %c2_212, %c0_213] : memref<1x18x18x4xf32, #tpu.memory_space<vmem>>, vector<1x1x16x4xf32>
    %117 = vector.shape_cast %116 : vector<1x1x16x4xf32> to vector<16x4xf32>
    %118 = tpu.concatenate %101, %103, %105, %107, %109, %111, %113, %115, %117 in 1 : vector<16x4xf32>, vector<16x4xf32>, vector<16x4xf32>, vector<16x4xf32>, vector<16x4xf32>, vector<16x4xf32>, vector<16x4xf32>, vector<16x4xf32>, vector<16x4xf32> -> vector<16x36xf32>
    %c80 = arith.constant 80 : index
    %c0_214 = arith.constant 0 : index
    %119 = vector.load %arg6[%c80, %c0_214] : memref<256x36xf32, #tpu.memory_space<vmem>>, vector<16x36xf32>
    tpu.vector_store %arg6[%c80, %c0_214], %118 {strides = array<i32>} : memref<256x36xf32, #tpu.memory_space<vmem>>, vector<16x36xf32>,
    %c0_215 = arith.constant 0 : index
    %c6_216 = arith.constant 6 : index
    %c0_217 = arith.constant 0 : index
    %c0_218 = arith.constant 0 : index
    %120 = vector.load %arg2[%c0_215, %c6_216, %c0_217, %c0_218] : memref<1x18x18x4xf32, #tpu.memory_space<vmem>>, vector<1x1x16x4xf32>
    %121 = vector.shape_cast %120 : vector<1x1x16x4xf32> to vector<16x4xf32>
    %c0_219 = arith.constant 0 : index
    %c6_220 = arith.constant 6 : index
    %c1_221 = arith.constant 1 : index
    %c0_222 = arith.constant 0 : index
    %122 = vector.load %arg2[%c0_219, %c6_220, %c1_221, %c0_222] : memref<1x18x18x4xf32, #tpu.memory_space<vmem>>, vector<1x1x16x4xf32>
    %123 = vector.shape_cast %122 : vector<1x1x16x4xf32> to vector<16x4xf32>
    %c0_223 = arith.constant 0 : index
    %c6_224 = arith.constant 6 : index
    %c2_225 = arith.constant 2 : index
    %c0_226 = arith.constant 0 : index
    %124 = vector.load %arg2[%c0_223, %c6_224, %c2_225, %c0_226] : memref<1x18x18x4xf32, #tpu.memory_space<vmem>>, vector<1x1x16x4xf32>
    %125 = vector.shape_cast %124 : vector<1x1x16x4xf32> to vector<16x4xf32>
    %c0_227 = arith.constant 0 : index
    %c7_228 = arith.constant 7 : index
    %c0_229 = arith.constant 0 : index
    %c0_230 = arith.constant 0 : index
    %126 = vector.load %arg2[%c0_227, %c7_228, %c0_229, %c0_230] : memref<1x18x18x4xf32, #tpu.memory_space<vmem>>, vector<1x1x16x4xf32>
    %127 = vector.shape_cast %126 : vector<1x1x16x4xf32> to vector<16x4xf32>
    %c0_231 = arith.constant 0 : index
    %c7_232 = arith.constant 7 : index
    %c1_233 = arith.constant 1 : index
    %c0_234 = arith.constant 0 : index
    %128 = vector.load %arg2[%c0_231, %c7_232, %c1_233, %c0_234] : memref<1x18x18x4xf32, #tpu.memory_space<vmem>>, vector<1x1x16x4xf32>
    %129 = vector.shape_cast %128 : vector<1x1x16x4xf32> to vector<16x4xf32>
    %c0_235 = arith.constant 0 : index
    %c7_236 = arith.constant 7 : index
    %c2_237 = arith.constant 2 : index
    %c0_238 = arith.constant 0 : index
    %130 = vector.load %arg2[%c0_235, %c7_236, %c2_237, %c0_238] : memref<1x18x18x4xf32, #tpu.memory_space<vmem>>, vector<1x1x16x4xf32>
    %131 = vector.shape_cast %130 : vector<1x1x16x4xf32> to vector<16x4xf32>
    %c0_239 = arith.constant 0 : index
    %c8 = arith.constant 8 : index
    %c0_240 = arith.constant 0 : index
    %c0_241 = arith.constant 0 : index
    %132 = vector.load %arg2[%c0_239, %c8, %c0_240, %c0_241] : memref<1x18x18x4xf32, #tpu.memory_space<vmem>>, vector<1x1x16x4xf32>
    %133 = vector.shape_cast %132 : vector<1x1x16x4xf32> to vector<16x4xf32>
    %c0_242 = arith.constant 0 : index
    %c8_243 = arith.constant 8 : index
    %c1_244 = arith.constant 1 : index
    %c0_245 = arith.constant 0 : index
    %134 = vector.load %arg2[%c0_242, %c8_243, %c1_244, %c0_245] : memref<1x18x18x4xf32, #tpu.memory_space<vmem>>, vector<1x1x16x4xf32>
    %135 = vector.shape_cast %134 : vector<1x1x16x4xf32> to vector<16x4xf32>
    %c0_246 = arith.constant 0 : index
    %c8_247 = arith.constant 8 : index
    %c2_248 = arith.constant 2 : index
    %c0_249 = arith.constant 0 : index
    %136 = vector.load %arg2[%c0_246, %c8_247, %c2_248, %c0_249] : memref<1x18x18x4xf32, #tpu.memory_space<vmem>>, vector<1x1x16x4xf32>
    %137 = vector.shape_cast %136 : vector<1x1x16x4xf32> to vector<16x4xf32>
    %138 = tpu.concatenate %121, %123, %125, %127, %129, %131, %133, %135, %137 in 1 : vector<16x4xf32>, vector<16x4xf32>, vector<16x4xf32>, vector<16x4xf32>, vector<16x4xf32>, vector<16x4xf32>, vector<16x4xf32>, vector<16x4xf32>, vector<16x4xf32> -> vector<16x36xf32>
    %c96 = arith.constant 96 : index
    %c0_250 = arith.constant 0 : index
    %139 = vector.load %arg6[%c96, %c0_250] : memref<256x36xf32, #tpu.memory_space<vmem>>, vector<16x36xf32>
    tpu.vector_store %arg6[%c96, %c0_250], %138 {strides = array<i32>} : memref<256x36xf32, #tpu.memory_space<vmem>>, vector<16x36xf32>,
    %c0_251 = arith.constant 0 : index
    %c7_252 = arith.constant 7 : index
    %c0_253 = arith.constant 0 : index
    %c0_254 = arith.constant 0 : index
    %140 = vector.load %arg2[%c0_251, %c7_252, %c0_253, %c0_254] : memref<1x18x18x4xf32, #tpu.memory_space<vmem>>, vector<1x1x16x4xf32>
    %141 = vector.shape_cast %140 : vector<1x1x16x4xf32> to vector<16x4xf32>
    %c0_255 = arith.constant 0 : index
    %c7_256 = arith.constant 7 : index
    %c1_257 = arith.constant 1 : index
    %c0_258 = arith.constant 0 : index
    %142 = vector.load %arg2[%c0_255, %c7_256, %c1_257, %c0_258] : memref<1x18x18x4xf32, #tpu.memory_space<vmem>>, vector<1x1x16x4xf32>
    %143 = vector.shape_cast %142 : vector<1x1x16x4xf32> to vector<16x4xf32>
    %c0_259 = arith.constant 0 : index
    %c7_260 = arith.constant 7 : index
    %c2_261 = arith.constant 2 : index
    %c0_262 = arith.constant 0 : index
    %144 = vector.load %arg2[%c0_259, %c7_260, %c2_261, %c0_262] : memref<1x18x18x4xf32, #tpu.memory_space<vmem>>, vector<1x1x16x4xf32>
    %145 = vector.shape_cast %144 : vector<1x1x16x4xf32> to vector<16x4xf32>
    %c0_263 = arith.constant 0 : index
    %c8_264 = arith.constant 8 : index
    %c0_265 = arith.constant 0 : index
    %c0_266 = arith.constant 0 : index
    %146 = vector.load %arg2[%c0_263, %c8_264, %c0_265, %c0_266] : memref<1x18x18x4xf32, #tpu.memory_space<vmem>>, vector<1x1x16x4xf32>
    %147 = vector.shape_cast %146 : vector<1x1x16x4xf32> to vector<16x4xf32>
    %c0_267 = arith.constant 0 : index
    %c8_268 = arith.constant 8 : index
    %c1_269 = arith.constant 1 : index
    %c0_270 = arith.constant 0 : index
    %148 = vector.load %arg2[%c0_267, %c8_268, %c1_269, %c0_270] : memref<1x18x18x4xf32, #tpu.memory_space<vmem>>, vector<1x1x16x4xf32>
    %149 = vector.shape_cast %148 : vector<1x1x16x4xf32> to vector<16x4xf32>
    %c0_271 = arith.constant 0 : index
    %c8_272 = arith.constant 8 : index
    %c2_273 = arith.constant 2 : index
    %c0_274 = arith.constant 0 : index
    %150 = vector.load %arg2[%c0_271, %c8_272, %c2_273, %c0_274] : memref<1x18x18x4xf32, #tpu.memory_space<vmem>>, vector<1x1x16x4xf32>
    %151 = vector.shape_cast %150 : vector<1x1x16x4xf32> to vector<16x4xf32>
    %c0_275 = arith.constant 0 : index
    %c9 = arith.constant 9 : index
    %c0_276 = arith.constant 0 : index
    %c0_277 = arith.constant 0 : index
    %152 = vector.load %arg2[%c0_275, %c9, %c0_276, %c0_277] : memref<1x18x18x4xf32, #tpu.memory_space<vmem>>, vector<1x1x16x4xf32>
    %153 = vector.shape_cast %152 : vector<1x1x16x4xf32> to vector<16x4xf32>
    %c0_278 = arith.constant 0 : index
    %c9_279 = arith.constant 9 : index
    %c1_280 = arith.constant 1 : index
    %c0_281 = arith.constant 0 : index
    %154 = vector.load %arg2[%c0_278, %c9_279, %c1_280, %c0_281] : memref<1x18x18x4xf32, #tpu.memory_space<vmem>>, vector<1x1x16x4xf32>
    %155 = vector.shape_cast %154 : vector<1x1x16x4xf32> to vector<16x4xf32>
    %c0_282 = arith.constant 0 : index
    %c9_283 = arith.constant 9 : index
    %c2_284 = arith.constant 2 : index
    %c0_285 = arith.constant 0 : index
    %156 = vector.load %arg2[%c0_282, %c9_283, %c2_284, %c0_285] : memref<1x18x18x4xf32, #tpu.memory_space<vmem>>, vector<1x1x16x4xf32>
    %157 = vector.shape_cast %156 : vector<1x1x16x4xf32> to vector<16x4xf32>
    %158 = tpu.concatenate %141, %143, %145, %147, %149, %151, %153, %155, %157 in 1 : vector<16x4xf32>, vector<16x4xf32>, vector<16x4xf32>, vector<16x4xf32>, vector<16x4xf32>, vector<16x4xf32>, vector<16x4xf32>, vector<16x4xf32>, vector<16x4xf32> -> vector<16x36xf32>
    %c112 = arith.constant 112 : index
    %c0_286 = arith.constant 0 : index
    %159 = vector.load %arg6[%c112, %c0_286] : memref<256x36xf32, #tpu.memory_space<vmem>>, vector<16x36xf32>
    tpu.vector_store %arg6[%c112, %c0_286], %158 {strides = array<i32>} : memref<256x36xf32, #tpu.memory_space<vmem>>, vector<16x36xf32>,
    %c0_287 = arith.constant 0 : index
    %c8_288 = arith.constant 8 : index
    %c0_289 = arith.constant 0 : index
    %c0_290 = arith.constant 0 : index
    %160 = vector.load %arg2[%c0_287, %c8_288, %c0_289, %c0_290] : memref<1x18x18x4xf32, #tpu.memory_space<vmem>>, vector<1x1x16x4xf32>
    %161 = vector.shape_cast %160 : vector<1x1x16x4xf32> to vector<16x4xf32>
    %c0_291 = arith.constant 0 : index
    %c8_292 = arith.constant 8 : index
    %c1_293 = arith.constant 1 : index
    %c0_294 = arith.constant 0 : index
    %162 = vector.load %arg2[%c0_291, %c8_292, %c1_293, %c0_294] : memref<1x18x18x4xf32, #tpu.memory_space<vmem>>, vector<1x1x16x4xf32>
    %163 = vector.shape_cast %162 : vector<1x1x16x4xf32> to vector<16x4xf32>
    %c0_295 = arith.constant 0 : index
    %c8_296 = arith.constant 8 : index
    %c2_297 = arith.constant 2 : index
    %c0_298 = arith.constant 0 : index
    %164 = vector.load %arg2[%c0_295, %c8_296, %c2_297, %c0_298] : memref<1x18x18x4xf32, #tpu.memory_space<vmem>>, vector<1x1x16x4xf32>
    %165 = vector.shape_cast %164 : vector<1x1x16x4xf32> to vector<16x4xf32>
    %c0_299 = arith.constant 0 : index
    %c9_300 = arith.constant 9 : index
    %c0_301 = arith.constant 0 : index
    %c0_302 = arith.constant 0 : index
    %166 = vector.load %arg2[%c0_299, %c9_300, %c0_301, %c0_302] : memref<1x18x18x4xf32, #tpu.memory_space<vmem>>, vector<1x1x16x4xf32>
    %167 = vector.shape_cast %166 : vector<1x1x16x4xf32> to vector<16x4xf32>
    %c0_303 = arith.constant 0 : index
    %c9_304 = arith.constant 9 : index
    %c1_305 = arith.constant 1 : index
    %c0_306 = arith.constant 0 : index
    %168 = vector.load %arg2[%c0_303, %c9_304, %c1_305, %c0_306] : memref<1x18x18x4xf32, #tpu.memory_space<vmem>>, vector<1x1x16x4xf32>
    %169 = vector.shape_cast %168 : vector<1x1x16x4xf32> to vector<16x4xf32>
    %c0_307 = arith.constant 0 : index
    %c9_308 = arith.constant 9 : index
    %c2_309 = arith.constant 2 : index
    %c0_310 = arith.constant 0 : index
    %170 = vector.load %arg2[%c0_307, %c9_308, %c2_309, %c0_310] : memref<1x18x18x4xf32, #tpu.memory_space<vmem>>, vector<1x1x16x4xf32>
    %171 = vector.shape_cast %170 : vector<1x1x16x4xf32> to vector<16x4xf32>
    %c0_311 = arith.constant 0 : index
    %c10 = arith.constant 10 : index
    %c0_312 = arith.constant 0 : index
    %c0_313 = arith.constant 0 : index
    %172 = vector.load %arg2[%c0_311, %c10, %c0_312, %c0_313] : memref<1x18x18x4xf32, #tpu.memory_space<vmem>>, vector<1x1x16x4xf32>
    %173 = vector.shape_cast %172 : vector<1x1x16x4xf32> to vector<16x4xf32>
    %c0_314 = arith.constant 0 : index
    %c10_315 = arith.constant 10 : index
    %c1_316 = arith.constant 1 : index
    %c0_317 = arith.constant 0 : index
    %174 = vector.load %arg2[%c0_314, %c10_315, %c1_316, %c0_317] : memref<1x18x18x4xf32, #tpu.memory_space<vmem>>, vector<1x1x16x4xf32>
    %175 = vector.shape_cast %174 : vector<1x1x16x4xf32> to vector<16x4xf32>
    %c0_318 = arith.constant 0 : index
    %c10_319 = arith.constant 10 : index
    %c2_320 = arith.constant 2 : index
    %c0_321 = arith.constant 0 : index
    %176 = vector.load %arg2[%c0_318, %c10_319, %c2_320, %c0_321] : memref<1x18x18x4xf32, #tpu.memory_space<vmem>>, vector<1x1x16x4xf32>
    %177 = vector.shape_cast %176 : vector<1x1x16x4xf32> to vector<16x4xf32>
    %178 = tpu.concatenate %161, %163, %165, %167, %169, %171, %173, %175, %177 in 1 : vector<16x4xf32>, vector<16x4xf32>, vector<16x4xf32>, vector<16x4xf32>, vector<16x4xf32>, vector<16x4xf32>, vector<16x4xf32>, vector<16x4xf32>, vector<16x4xf32> -> vector<16x36xf32>
    %c128 = arith.constant 128 : index
    %c0_322 = arith.constant 0 : index
    %179 = vector.load %arg6[%c128, %c0_322] : memref<256x36xf32, #tpu.memory_space<vmem>>, vector<16x36xf32>
    tpu.vector_store %arg6[%c128, %c0_322], %178 {strides = array<i32>} : memref<256x36xf32, #tpu.memory_space<vmem>>, vector<16x36xf32>,
    %c0_323 = arith.constant 0 : index
    %c9_324 = arith.constant 9 : index
    %c0_325 = arith.constant 0 : index
    %c0_326 = arith.constant 0 : index
    %180 = vector.load %arg2[%c0_323, %c9_324, %c0_325, %c0_326] : memref<1x18x18x4xf32, #tpu.memory_space<vmem>>, vector<1x1x16x4xf32>
    %181 = vector.shape_cast %180 : vector<1x1x16x4xf32> to vector<16x4xf32>
    %c0_327 = arith.constant 0 : index
    %c9_328 = arith.constant 9 : index
    %c1_329 = arith.constant 1 : index
    %c0_330 = arith.constant 0 : index
    %182 = vector.load %arg2[%c0_327, %c9_328, %c1_329, %c0_330] : memref<1x18x18x4xf32, #tpu.memory_space<vmem>>, vector<1x1x16x4xf32>
    %183 = vector.shape_cast %182 : vector<1x1x16x4xf32> to vector<16x4xf32>
    %c0_331 = arith.constant 0 : index
    %c9_332 = arith.constant 9 : index
    %c2_333 = arith.constant 2 : index
    %c0_334 = arith.constant 0 : index
    %184 = vector.load %arg2[%c0_331, %c9_332, %c2_333, %c0_334] : memref<1x18x18x4xf32, #tpu.memory_space<vmem>>, vector<1x1x16x4xf32>
    %185 = vector.shape_cast %184 : vector<1x1x16x4xf32> to vector<16x4xf32>
    %c0_335 = arith.constant 0 : index
    %c10_336 = arith.constant 10 : index
    %c0_337 = arith.constant 0 : index
    %c0_338 = arith.constant 0 : index
    %186 = vector.load %arg2[%c0_335, %c10_336, %c0_337, %c0_338] : memref<1x18x18x4xf32, #tpu.memory_space<vmem>>, vector<1x1x16x4xf32>
    %187 = vector.shape_cast %186 : vector<1x1x16x4xf32> to vector<16x4xf32>
    %c0_339 = arith.constant 0 : index
    %c10_340 = arith.constant 10 : index
    %c1_341 = arith.constant 1 : index
    %c0_342 = arith.constant 0 : index
    %188 = vector.load %arg2[%c0_339, %c10_340, %c1_341, %c0_342] : memref<1x18x18x4xf32, #tpu.memory_space<vmem>>, vector<1x1x16x4xf32>
    %189 = vector.shape_cast %188 : vector<1x1x16x4xf32> to vector<16x4xf32>
    %c0_343 = arith.constant 0 : index
    %c10_344 = arith.constant 10 : index
    %c2_345 = arith.constant 2 : index
    %c0_346 = arith.constant 0 : index
    %190 = vector.load %arg2[%c0_343, %c10_344, %c2_345, %c0_346] : memref<1x18x18x4xf32, #tpu.memory_space<vmem>>, vector<1x1x16x4xf32>
    %191 = vector.shape_cast %190 : vector<1x1x16x4xf32> to vector<16x4xf32>
    %c0_347 = arith.constant 0 : index
    %c11 = arith.constant 11 : index
    %c0_348 = arith.constant 0 : index
    %c0_349 = arith.constant 0 : index
    %192 = vector.load %arg2[%c0_347, %c11, %c0_348, %c0_349] : memref<1x18x18x4xf32, #tpu.memory_space<vmem>>, vector<1x1x16x4xf32>
    %193 = vector.shape_cast %192 : vector<1x1x16x4xf32> to vector<16x4xf32>
    %c0_350 = arith.constant 0 : index
    %c11_351 = arith.constant 11 : index
    %c1_352 = arith.constant 1 : index
    %c0_353 = arith.constant 0 : index
    %194 = vector.load %arg2[%c0_350, %c11_351, %c1_352, %c0_353] : memref<1x18x18x4xf32, #tpu.memory_space<vmem>>, vector<1x1x16x4xf32>
    %195 = vector.shape_cast %194 : vector<1x1x16x4xf32> to vector<16x4xf32>
    %c0_354 = arith.constant 0 : index
    %c11_355 = arith.constant 11 : index
    %c2_356 = arith.constant 2 : index
    %c0_357 = arith.constant 0 : index
    %196 = vector.load %arg2[%c0_354, %c11_355, %c2_356, %c0_357] : memref<1x18x18x4xf32, #tpu.memory_space<vmem>>, vector<1x1x16x4xf32>
    %197 = vector.shape_cast %196 : vector<1x1x16x4xf32> to vector<16x4xf32>
    %198 = tpu.concatenate %181, %183, %185, %187, %189, %191, %193, %195, %197 in 1 : vector<16x4xf32>, vector<16x4xf32>, vector<16x4xf32>, vector<16x4xf32>, vector<16x4xf32>, vector<16x4xf32>, vector<16x4xf32>, vector<16x4xf32>, vector<16x4xf32> -> vector<16x36xf32>
    %c144 = arith.constant 144 : index
    %c0_358 = arith.constant 0 : index
    %199 = vector.load %arg6[%c144, %c0_358] : memref<256x36xf32, #tpu.memory_space<vmem>>, vector<16x36xf32>
    tpu.vector_store %arg6[%c144, %c0_358], %198 {strides = array<i32>} : memref<256x36xf32, #tpu.memory_space<vmem>>, vector<16x36xf32>,
    %c0_359 = arith.constant 0 : index
    %c10_360 = arith.constant 10 : index
    %c0_361 = arith.constant 0 : index
    %c0_362 = arith.constant 0 : index
    %200 = vector.load %arg2[%c0_359, %c10_360, %c0_361, %c0_362] : memref<1x18x18x4xf32, #tpu.memory_space<vmem>>, vector<1x1x16x4xf32>
    %201 = vector.shape_cast %200 : vector<1x1x16x4xf32> to vector<16x4xf32>
    %c0_363 = arith.constant 0 : index
    %c10_364 = arith.constant 10 : index
    %c1_365 = arith.constant 1 : index
    %c0_366 = arith.constant 0 : index
    %202 = vector.load %arg2[%c0_363, %c10_364, %c1_365, %c0_366] : memref<1x18x18x4xf32, #tpu.memory_space<vmem>>, vector<1x1x16x4xf32>
    %203 = vector.shape_cast %202 : vector<1x1x16x4xf32> to vector<16x4xf32>
    %c0_367 = arith.constant 0 : index
    %c10_368 = arith.constant 10 : index
    %c2_369 = arith.constant 2 : index
    %c0_370 = arith.constant 0 : index
    %204 = vector.load %arg2[%c0_367, %c10_368, %c2_369, %c0_370] : memref<1x18x18x4xf32, #tpu.memory_space<vmem>>, vector<1x1x16x4xf32>
    %205 = vector.shape_cast %204 : vector<1x1x16x4xf32> to vector<16x4xf32>
    %c0_371 = arith.constant 0 : index
    %c11_372 = arith.constant 11 : index
    %c0_373 = arith.constant 0 : index
    %c0_374 = arith.constant 0 : index
    %206 = vector.load %arg2[%c0_371, %c11_372, %c0_373, %c0_374] : memref<1x18x18x4xf32, #tpu.memory_space<vmem>>, vector<1x1x16x4xf32>
    %207 = vector.shape_cast %206 : vector<1x1x16x4xf32> to vector<16x4xf32>
    %c0_375 = arith.constant 0 : index
    %c11_376 = arith.constant 11 : index
    %c1_377 = arith.constant 1 : index
    %c0_378 = arith.constant 0 : index
    %208 = vector.load %arg2[%c0_375, %c11_376, %c1_377, %c0_378] : memref<1x18x18x4xf32, #tpu.memory_space<vmem>>, vector<1x1x16x4xf32>
    %209 = vector.shape_cast %208 : vector<1x1x16x4xf32> to vector<16x4xf32>
    %c0_379 = arith.constant 0 : index
    %c11_380 = arith.constant 11 : index
    %c2_381 = arith.constant 2 : index
    %c0_382 = arith.constant 0 : index
    %210 = vector.load %arg2[%c0_379, %c11_380, %c2_381, %c0_382] : memref<1x18x18x4xf32, #tpu.memory_space<vmem>>, vector<1x1x16x4xf32>
    %211 = vector.shape_cast %210 : vector<1x1x16x4xf32> to vector<16x4xf32>
    %c0_383 = arith.constant 0 : index
    %c12 = arith.constant 12 : index
    %c0_384 = arith.constant 0 : index
    %c0_385 = arith.constant 0 : index
    %212 = vector.load %arg2[%c0_383, %c12, %c0_384, %c0_385] : memref<1x18x18x4xf32, #tpu.memory_space<vmem>>, vector<1x1x16x4xf32>
    %213 = vector.shape_cast %212 : vector<1x1x16x4xf32> to vector<16x4xf32>
    %c0_386 = arith.constant 0 : index
    %c12_387 = arith.constant 12 : index
    %c1_388 = arith.constant 1 : index
    %c0_389 = arith.constant 0 : index
    %214 = vector.load %arg2[%c0_386, %c12_387, %c1_388, %c0_389] : memref<1x18x18x4xf32, #tpu.memory_space<vmem>>, vector<1x1x16x4xf32>
    %215 = vector.shape_cast %214 : vector<1x1x16x4xf32> to vector<16x4xf32>
    %c0_390 = arith.constant 0 : index
    %c12_391 = arith.constant 12 : index
    %c2_392 = arith.constant 2 : index
    %c0_393 = arith.constant 0 : index
    %216 = vector.load %arg2[%c0_390, %c12_391, %c2_392, %c0_393] : memref<1x18x18x4xf32, #tpu.memory_space<vmem>>, vector<1x1x16x4xf32>
    %217 = vector.shape_cast %216 : vector<1x1x16x4xf32> to vector<16x4xf32>
    %218 = tpu.concatenate %201, %203, %205, %207, %209, %211, %213, %215, %217 in 1 : vector<16x4xf32>, vector<16x4xf32>, vector<16x4xf32>, vector<16x4xf32>, vector<16x4xf32>, vector<16x4xf32>, vector<16x4xf32>, vector<16x4xf32>, vector<16x4xf32> -> vector<16x36xf32>
    %c160 = arith.constant 160 : index
    %c0_394 = arith.constant 0 : index
    %219 = vector.load %arg6[%c160, %c0_394] : memref<256x36xf32, #tpu.memory_space<vmem>>, vector<16x36xf32>
    tpu.vector_store %arg6[%c160, %c0_394], %218 {strides = array<i32>} : memref<256x36xf32, #tpu.memory_space<vmem>>, vector<16x36xf32>,
    %c0_395 = arith.constant 0 : index
    %c11_396 = arith.constant 11 : index
    %c0_397 = arith.constant 0 : index
    %c0_398 = arith.constant 0 : index
    %220 = vector.load %arg2[%c0_395, %c11_396, %c0_397, %c0_398] : memref<1x18x18x4xf32, #tpu.memory_space<vmem>>, vector<1x1x16x4xf32>
    %221 = vector.shape_cast %220 : vector<1x1x16x4xf32> to vector<16x4xf32>
    %c0_399 = arith.constant 0 : index
    %c11_400 = arith.constant 11 : index
    %c1_401 = arith.constant 1 : index
    %c0_402 = arith.constant 0 : index
    %222 = vector.load %arg2[%c0_399, %c11_400, %c1_401, %c0_402] : memref<1x18x18x4xf32, #tpu.memory_space<vmem>>, vector<1x1x16x4xf32>
    %223 = vector.shape_cast %222 : vector<1x1x16x4xf32> to vector<16x4xf32>
    %c0_403 = arith.constant 0 : index
    %c11_404 = arith.constant 11 : index
    %c2_405 = arith.constant 2 : index
    %c0_406 = arith.constant 0 : index
    %224 = vector.load %arg2[%c0_403, %c11_404, %c2_405, %c0_406] : memref<1x18x18x4xf32, #tpu.memory_space<vmem>>, vector<1x1x16x4xf32>
    %225 = vector.shape_cast %224 : vector<1x1x16x4xf32> to vector<16x4xf32>
    %c0_407 = arith.constant 0 : index
    %c12_408 = arith.constant 12 : index
    %c0_409 = arith.constant 0 : index
    %c0_410 = arith.constant 0 : index
    %226 = vector.load %arg2[%c0_407, %c12_408, %c0_409, %c0_410] : memref<1x18x18x4xf32, #tpu.memory_space<vmem>>, vector<1x1x16x4xf32>
    %227 = vector.shape_cast %226 : vector<1x1x16x4xf32> to vector<16x4xf32>
    %c0_411 = arith.constant 0 : index
    %c12_412 = arith.constant 12 : index
    %c1_413 = arith.constant 1 : index
    %c0_414 = arith.constant 0 : index
    %228 = vector.load %arg2[%c0_411, %c12_412, %c1_413, %c0_414] : memref<1x18x18x4xf32, #tpu.memory_space<vmem>>, vector<1x1x16x4xf32>
    %229 = vector.shape_cast %228 : vector<1x1x16x4xf32> to vector<16x4xf32>
    %c0_415 = arith.constant 0 : index
    %c12_416 = arith.constant 12 : index
    %c2_417 = arith.constant 2 : index
    %c0_418 = arith.constant 0 : index
    %230 = vector.load %arg2[%c0_415, %c12_416, %c2_417, %c0_418] : memref<1x18x18x4xf32, #tpu.memory_space<vmem>>, vector<1x1x16x4xf32>
    %231 = vector.shape_cast %230 : vector<1x1x16x4xf32> to vector<16x4xf32>
    %c0_419 = arith.constant 0 : index
    %c13 = arith.constant 13 : index
    %c0_420 = arith.constant 0 : index
    %c0_421 = arith.constant 0 : index
    %232 = vector.load %arg2[%c0_419, %c13, %c0_420, %c0_421] : memref<1x18x18x4xf32, #tpu.memory_space<vmem>>, vector<1x1x16x4xf32>
    %233 = vector.shape_cast %232 : vector<1x1x16x4xf32> to vector<16x4xf32>
    %c0_422 = arith.constant 0 : index
    %c13_423 = arith.constant 13 : index
    %c1_424 = arith.constant 1 : index
    %c0_425 = arith.constant 0 : index
    %234 = vector.load %arg2[%c0_422, %c13_423, %c1_424, %c0_425] : memref<1x18x18x4xf32, #tpu.memory_space<vmem>>, vector<1x1x16x4xf32>
    %235 = vector.shape_cast %234 : vector<1x1x16x4xf32> to vector<16x4xf32>
    %c0_426 = arith.constant 0 : index
    %c13_427 = arith.constant 13 : index
    %c2_428 = arith.constant 2 : index
    %c0_429 = arith.constant 0 : index
    %236 = vector.load %arg2[%c0_426, %c13_427, %c2_428, %c0_429] : memref<1x18x18x4xf32, #tpu.memory_space<vmem>>, vector<1x1x16x4xf32>
    %237 = vector.shape_cast %236 : vector<1x1x16x4xf32> to vector<16x4xf32>
    %238 = tpu.concatenate %221, %223, %225, %227, %229, %231, %233, %235, %237 in 1 : vector<16x4xf32>, vector<16x4xf32>, vector<16x4xf32>, vector<16x4xf32>, vector<16x4xf32>, vector<16x4xf32>, vector<16x4xf32>, vector<16x4xf32>, vector<16x4xf32> -> vector<16x36xf32>
    %c176 = arith.constant 176 : index
    %c0_430 = arith.constant 0 : index
    %239 = vector.load %arg6[%c176, %c0_430] : memref<256x36xf32, #tpu.memory_space<vmem>>, vector<16x36xf32>
    tpu.vector_store %arg6[%c176, %c0_430], %238 {strides = array<i32>} : memref<256x36xf32, #tpu.memory_space<vmem>>, vector<16x36xf32>,
    %c0_431 = arith.constant 0 : index
    %c12_432 = arith.constant 12 : index
    %c0_433 = arith.constant 0 : index
    %c0_434 = arith.constant 0 : index
    %240 = vector.load %arg2[%c0_431, %c12_432, %c0_433, %c0_434] : memref<1x18x18x4xf32, #tpu.memory_space<vmem>>, vector<1x1x16x4xf32>
    %241 = vector.shape_cast %240 : vector<1x1x16x4xf32> to vector<16x4xf32>
    %c0_435 = arith.constant 0 : index
    %c12_436 = arith.constant 12 : index
    %c1_437 = arith.constant 1 : index
    %c0_438 = arith.constant 0 : index
    %242 = vector.load %arg2[%c0_435, %c12_436, %c1_437, %c0_438] : memref<1x18x18x4xf32, #tpu.memory_space<vmem>>, vector<1x1x16x4xf32>
    %243 = vector.shape_cast %242 : vector<1x1x16x4xf32> to vector<16x4xf32>
    %c0_439 = arith.constant 0 : index
    %c12_440 = arith.constant 12 : index
    %c2_441 = arith.constant 2 : index
    %c0_442 = arith.constant 0 : index
    %244 = vector.load %arg2[%c0_439, %c12_440, %c2_441, %c0_442] : memref<1x18x18x4xf32, #tpu.memory_space<vmem>>, vector<1x1x16x4xf32>
    %245 = vector.shape_cast %244 : vector<1x1x16x4xf32> to vector<16x4xf32>
    %c0_443 = arith.constant 0 : index
    %c13_444 = arith.constant 13 : index
    %c0_445 = arith.constant 0 : index
    %c0_446 = arith.constant 0 : index
    %246 = vector.load %arg2[%c0_443, %c13_444, %c0_445, %c0_446] : memref<1x18x18x4xf32, #tpu.memory_space<vmem>>, vector<1x1x16x4xf32>
    %247 = vector.shape_cast %246 : vector<1x1x16x4xf32> to vector<16x4xf32>
    %c0_447 = arith.constant 0 : index
    %c13_448 = arith.constant 13 : index
    %c1_449 = arith.constant 1 : index
    %c0_450 = arith.constant 0 : index
    %248 = vector.load %arg2[%c0_447, %c13_448, %c1_449, %c0_450] : memref<1x18x18x4xf32, #tpu.memory_space<vmem>>, vector<1x1x16x4xf32>
    %249 = vector.shape_cast %248 : vector<1x1x16x4xf32> to vector<16x4xf32>
    %c0_451 = arith.constant 0 : index
    %c13_452 = arith.constant 13 : index
    %c2_453 = arith.constant 2 : index
    %c0_454 = arith.constant 0 : index
    %250 = vector.load %arg2[%c0_451, %c13_452, %c2_453, %c0_454] : memref<1x18x18x4xf32, #tpu.memory_space<vmem>>, vector<1x1x16x4xf32>
    %251 = vector.shape_cast %250 : vector<1x1x16x4xf32> to vector<16x4xf32>
    %c0_455 = arith.constant 0 : index
    %c14 = arith.constant 14 : index
    %c0_456 = arith.constant 0 : index
    %c0_457 = arith.constant 0 : index
    %252 = vector.load %arg2[%c0_455, %c14, %c0_456, %c0_457] : memref<1x18x18x4xf32, #tpu.memory_space<vmem>>, vector<1x1x16x4xf32>
    %253 = vector.shape_cast %252 : vector<1x1x16x4xf32> to vector<16x4xf32>
    %c0_458 = arith.constant 0 : index
    %c14_459 = arith.constant 14 : index
    %c1_460 = arith.constant 1 : index
    %c0_461 = arith.constant 0 : index
    %254 = vector.load %arg2[%c0_458, %c14_459, %c1_460, %c0_461] : memref<1x18x18x4xf32, #tpu.memory_space<vmem>>, vector<1x1x16x4xf32>
    %255 = vector.shape_cast %254 : vector<1x1x16x4xf32> to vector<16x4xf32>
    %c0_462 = arith.constant 0 : index
    %c14_463 = arith.constant 14 : index
    %c2_464 = arith.constant 2 : index
    %c0_465 = arith.constant 0 : index
    %256 = vector.load %arg2[%c0_462, %c14_463, %c2_464, %c0_465] : memref<1x18x18x4xf32, #tpu.memory_space<vmem>>, vector<1x1x16x4xf32>
    %257 = vector.shape_cast %256 : vector<1x1x16x4xf32> to vector<16x4xf32>
    %258 = tpu.concatenate %241, %243, %245, %247, %249, %251, %253, %255, %257 in 1 : vector<16x4xf32>, vector<16x4xf32>, vector<16x4xf32>, vector<16x4xf32>, vector<16x4xf32>, vector<16x4xf32>, vector<16x4xf32>, vector<16x4xf32>, vector<16x4xf32> -> vector<16x36xf32>
    %c192 = arith.constant 192 : index
    %c0_466 = arith.constant 0 : index
    %259 = vector.load %arg6[%c192, %c0_466] : memref<256x36xf32, #tpu.memory_space<vmem>>, vector<16x36xf32>
    tpu.vector_store %arg6[%c192, %c0_466], %258 {strides = array<i32>} : memref<256x36xf32, #tpu.memory_space<vmem>>, vector<16x36xf32>,
    %c0_467 = arith.constant 0 : index
    %c13_468 = arith.constant 13 : index
    %c0_469 = arith.constant 0 : index
    %c0_470 = arith.constant 0 : index
    %260 = vector.load %arg2[%c0_467, %c13_468, %c0_469, %c0_470] : memref<1x18x18x4xf32, #tpu.memory_space<vmem>>, vector<1x1x16x4xf32>
    %261 = vector.shape_cast %260 : vector<1x1x16x4xf32> to vector<16x4xf32>
    %c0_471 = arith.constant 0 : index
    %c13_472 = arith.constant 13 : index
    %c1_473 = arith.constant 1 : index
    %c0_474 = arith.constant 0 : index
    %262 = vector.load %arg2[%c0_471, %c13_472, %c1_473, %c0_474] : memref<1x18x18x4xf32, #tpu.memory_space<vmem>>, vector<1x1x16x4xf32>
    %263 = vector.shape_cast %262 : vector<1x1x16x4xf32> to vector<16x4xf32>
    %c0_475 = arith.constant 0 : index
    %c13_476 = arith.constant 13 : index
    %c2_477 = arith.constant 2 : index
    %c0_478 = arith.constant 0 : index
    %264 = vector.load %arg2[%c0_475, %c13_476, %c2_477, %c0_478] : memref<1x18x18x4xf32, #tpu.memory_space<vmem>>, vector<1x1x16x4xf32>
    %265 = vector.shape_cast %264 : vector<1x1x16x4xf32> to vector<16x4xf32>
    %c0_479 = arith.constant 0 : index
    %c14_480 = arith.constant 14 : index
    %c0_481 = arith.constant 0 : index
    %c0_482 = arith.constant 0 : index
    %266 = vector.load %arg2[%c0_479, %c14_480, %c0_481, %c0_482] : memref<1x18x18x4xf32, #tpu.memory_space<vmem>>, vector<1x1x16x4xf32>
    %267 = vector.shape_cast %266 : vector<1x1x16x4xf32> to vector<16x4xf32>
    %c0_483 = arith.constant 0 : index
    %c14_484 = arith.constant 14 : index
    %c1_485 = arith.constant 1 : index
    %c0_486 = arith.constant 0 : index
    %268 = vector.load %arg2[%c0_483, %c14_484, %c1_485, %c0_486] : memref<1x18x18x4xf32, #tpu.memory_space<vmem>>, vector<1x1x16x4xf32>
    %269 = vector.shape_cast %268 : vector<1x1x16x4xf32> to vector<16x4xf32>
    %c0_487 = arith.constant 0 : index
    %c14_488 = arith.constant 14 : index
    %c2_489 = arith.constant 2 : index
    %c0_490 = arith.constant 0 : index
    %270 = vector.load %arg2[%c0_487, %c14_488, %c2_489, %c0_490] : memref<1x18x18x4xf32, #tpu.memory_space<vmem>>, vector<1x1x16x4xf32>
    %271 = vector.shape_cast %270 : vector<1x1x16x4xf32> to vector<16x4xf32>
    %c0_491 = arith.constant 0 : index
    %c15 = arith.constant 15 : index
    %c0_492 = arith.constant 0 : index
    %c0_493 = arith.constant 0 : index
    %272 = vector.load %arg2[%c0_491, %c15, %c0_492, %c0_493] : memref<1x18x18x4xf32, #tpu.memory_space<vmem>>, vector<1x1x16x4xf32>
    %273 = vector.shape_cast %272 : vector<1x1x16x4xf32> to vector<16x4xf32>
    %c0_494 = arith.constant 0 : index
    %c15_495 = arith.constant 15 : index
    %c1_496 = arith.constant 1 : index
    %c0_497 = arith.constant 0 : index
    %274 = vector.load %arg2[%c0_494, %c15_495, %c1_496, %c0_497] : memref<1x18x18x4xf32, #tpu.memory_space<vmem>>, vector<1x1x16x4xf32>
    %275 = vector.shape_cast %274 : vector<1x1x16x4xf32> to vector<16x4xf32>
    %c0_498 = arith.constant 0 : index
    %c15_499 = arith.constant 15 : index
    %c2_500 = arith.constant 2 : index
    %c0_501 = arith.constant 0 : index
    %276 = vector.load %arg2[%c0_498, %c15_499, %c2_500, %c0_501] : memref<1x18x18x4xf32, #tpu.memory_space<vmem>>, vector<1x1x16x4xf32>
    %277 = vector.shape_cast %276 : vector<1x1x16x4xf32> to vector<16x4xf32>
    %278 = tpu.concatenate %261, %263, %265, %267, %269, %271, %273, %275, %277 in 1 : vector<16x4xf32>, vector<16x4xf32>, vector<16x4xf32>, vector<16x4xf32>, vector<16x4xf32>, vector<16x4xf32>, vector<16x4xf32>, vector<16x4xf32>, vector<16x4xf32> -> vector<16x36xf32>
    %c208 = arith.constant 208 : index
    %c0_502 = arith.constant 0 : index
    %279 = vector.load %arg6[%c208, %c0_502] : memref<256x36xf32, #tpu.memory_space<vmem>>, vector<16x36xf32>
    tpu.vector_store %arg6[%c208, %c0_502], %278 {strides = array<i32>} : memref<256x36xf32, #tpu.memory_space<vmem>>, vector<16x36xf32>,
    %c0_503 = arith.constant 0 : index
    %c14_504 = arith.constant 14 : index
    %c0_505 = arith.constant 0 : index
    %c0_506 = arith.constant 0 : index
    %280 = vector.load %arg2[%c0_503, %c14_504, %c0_505, %c0_506] : memref<1x18x18x4xf32, #tpu.memory_space<vmem>>, vector<1x1x16x4xf32>
    %281 = vector.shape_cast %280 : vector<1x1x16x4xf32> to vector<16x4xf32>
    %c0_507 = arith.constant 0 : index
    %c14_508 = arith.constant 14 : index
    %c1_509 = arith.constant 1 : index
    %c0_510 = arith.constant 0 : index
    %282 = vector.load %arg2[%c0_507, %c14_508, %c1_509, %c0_510] : memref<1x18x18x4xf32, #tpu.memory_space<vmem>>, vector<1x1x16x4xf32>
    %283 = vector.shape_cast %282 : vector<1x1x16x4xf32> to vector<16x4xf32>
    %c0_511 = arith.constant 0 : index
    %c14_512 = arith.constant 14 : index
    %c2_513 = arith.constant 2 : index
    %c0_514 = arith.constant 0 : index
    %284 = vector.load %arg2[%c0_511, %c14_512, %c2_513, %c0_514] : memref<1x18x18x4xf32, #tpu.memory_space<vmem>>, vector<1x1x16x4xf32>
    %285 = vector.shape_cast %284 : vector<1x1x16x4xf32> to vector<16x4xf32>
    %c0_515 = arith.constant 0 : index
    %c15_516 = arith.constant 15 : index
    %c0_517 = arith.constant 0 : index
    %c0_518 = arith.constant 0 : index
    %286 = vector.load %arg2[%c0_515, %c15_516, %c0_517, %c0_518] : memref<1x18x18x4xf32, #tpu.memory_space<vmem>>, vector<1x1x16x4xf32>
    %287 = vector.shape_cast %286 : vector<1x1x16x4xf32> to vector<16x4xf32>
    %c0_519 = arith.constant 0 : index
    %c15_520 = arith.constant 15 : index
    %c1_521 = arith.constant 1 : index
    %c0_522 = arith.constant 0 : index
    %288 = vector.load %arg2[%c0_519, %c15_520, %c1_521, %c0_522] : memref<1x18x18x4xf32, #tpu.memory_space<vmem>>, vector<1x1x16x4xf32>
    %289 = vector.shape_cast %288 : vector<1x1x16x4xf32> to vector<16x4xf32>
    %c0_523 = arith.constant 0 : index
    %c15_524 = arith.constant 15 : index
    %c2_525 = arith.constant 2 : index
    %c0_526 = arith.constant 0 : index
    %290 = vector.load %arg2[%c0_523, %c15_524, %c2_525, %c0_526] : memref<1x18x18x4xf32, #tpu.memory_space<vmem>>, vector<1x1x16x4xf32>
    %291 = vector.shape_cast %290 : vector<1x1x16x4xf32> to vector<16x4xf32>
    %c0_527 = arith.constant 0 : index
    %c16_528 = arith.constant 16 : index
    %c0_529 = arith.constant 0 : index
    %c0_530 = arith.constant 0 : index
    %292 = vector.load %arg2[%c0_527, %c16_528, %c0_529, %c0_530] : memref<1x18x18x4xf32, #tpu.memory_space<vmem>>, vector<1x1x16x4xf32>
    %293 = vector.shape_cast %292 : vector<1x1x16x4xf32> to vector<16x4xf32>
    %c0_531 = arith.constant 0 : index
    %c16_532 = arith.constant 16 : index
    %c1_533 = arith.constant 1 : index
    %c0_534 = arith.constant 0 : index
    %294 = vector.load %arg2[%c0_531, %c16_532, %c1_533, %c0_534] : memref<1x18x18x4xf32, #tpu.memory_space<vmem>>, vector<1x1x16x4xf32>
    %295 = vector.shape_cast %294 : vector<1x1x16x4xf32> to vector<16x4xf32>
    %c0_535 = arith.constant 0 : index
    %c16_536 = arith.constant 16 : index
    %c2_537 = arith.constant 2 : index
    %c0_538 = arith.constant 0 : index
    %296 = vector.load %arg2[%c0_535, %c16_536, %c2_537, %c0_538] : memref<1x18x18x4xf32, #tpu.memory_space<vmem>>, vector<1x1x16x4xf32>
    %297 = vector.shape_cast %296 : vector<1x1x16x4xf32> to vector<16x4xf32>
    %298 = tpu.concatenate %281, %283, %285, %287, %289, %291, %293, %295, %297 in 1 : vector<16x4xf32>, vector<16x4xf32>, vector<16x4xf32>, vector<16x4xf32>, vector<16x4xf32>, vector<16x4xf32>, vector<16x4xf32>, vector<16x4xf32>, vector<16x4xf32> -> vector<16x36xf32>
    %c224 = arith.constant 224 : index
    %c0_539 = arith.constant 0 : index
    %299 = vector.load %arg6[%c224, %c0_539] : memref<256x36xf32, #tpu.memory_space<vmem>>, vector<16x36xf32>
    tpu.vector_store %arg6[%c224, %c0_539], %298 {strides = array<i32>} : memref<256x36xf32, #tpu.memory_space<vmem>>, vector<16x36xf32>,
    %c0_540 = arith.constant 0 : index
    %c15_541 = arith.constant 15 : index
    %c0_542 = arith.constant 0 : index
    %c0_543 = arith.constant 0 : index
    %300 = vector.load %arg2[%c0_540, %c15_541, %c0_542, %c0_543] : memref<1x18x18x4xf32, #tpu.memory_space<vmem>>, vector<1x1x16x4xf32>
    %301 = vector.shape_cast %300 : vector<1x1x16x4xf32> to vector<16x4xf32>
    %c0_544 = arith.constant 0 : index
    %c15_545 = arith.constant 15 : index
    %c1_546 = arith.constant 1 : index
    %c0_547 = arith.constant 0 : index
    %302 = vector.load %arg2[%c0_544, %c15_545, %c1_546, %c0_547] : memref<1x18x18x4xf32, #tpu.memory_space<vmem>>, vector<1x1x16x4xf32>
    %303 = vector.shape_cast %302 : vector<1x1x16x4xf32> to vector<16x4xf32>
    %c0_548 = arith.constant 0 : index
    %c15_549 = arith.constant 15 : index
    %c2_550 = arith.constant 2 : index
    %c0_551 = arith.constant 0 : index
    %304 = vector.load %arg2[%c0_548, %c15_549, %c2_550, %c0_551] : memref<1x18x18x4xf32, #tpu.memory_space<vmem>>, vector<1x1x16x4xf32>
    %305 = vector.shape_cast %304 : vector<1x1x16x4xf32> to vector<16x4xf32>
    %c0_552 = arith.constant 0 : index
    %c16_553 = arith.constant 16 : index
    %c0_554 = arith.constant 0 : index
    %c0_555 = arith.constant 0 : index
    %306 = vector.load %arg2[%c0_552, %c16_553, %c0_554, %c0_555] : memref<1x18x18x4xf32, #tpu.memory_space<vmem>>, vector<1x1x16x4xf32>
    %307 = vector.shape_cast %306 : vector<1x1x16x4xf32> to vector<16x4xf32>
    %c0_556 = arith.constant 0 : index
    %c16_557 = arith.constant 16 : index
    %c1_558 = arith.constant 1 : index
    %c0_559 = arith.constant 0 : index
    %308 = vector.load %arg2[%c0_556, %c16_557, %c1_558, %c0_559] : memref<1x18x18x4xf32, #tpu.memory_space<vmem>>, vector<1x1x16x4xf32>
    %309 = vector.shape_cast %308 : vector<1x1x16x4xf32> to vector<16x4xf32>
    %c0_560 = arith.constant 0 : index
    %c16_561 = arith.constant 16 : index
    %c2_562 = arith.constant 2 : index
    %c0_563 = arith.constant 0 : index
    %310 = vector.load %arg2[%c0_560, %c16_561, %c2_562, %c0_563] : memref<1x18x18x4xf32, #tpu.memory_space<vmem>>, vector<1x1x16x4xf32>
    %311 = vector.shape_cast %310 : vector<1x1x16x4xf32> to vector<16x4xf32>
    %c0_564 = arith.constant 0 : index
    %c17 = arith.constant 17 : index
    %c0_565 = arith.constant 0 : index
    %c0_566 = arith.constant 0 : index
    %312 = vector.load %arg2[%c0_564, %c17, %c0_565, %c0_566] : memref<1x18x18x4xf32, #tpu.memory_space<vmem>>, vector<1x1x16x4xf32>
    %313 = vector.shape_cast %312 : vector<1x1x16x4xf32> to vector<16x4xf32>
    %c0_567 = arith.constant 0 : index
    %c17_568 = arith.constant 17 : index
    %c1_569 = arith.constant 1 : index
    %c0_570 = arith.constant 0 : index
    %314 = vector.load %arg2[%c0_567, %c17_568, %c1_569, %c0_570] : memref<1x18x18x4xf32, #tpu.memory_space<vmem>>, vector<1x1x16x4xf32>
    %315 = vector.shape_cast %314 : vector<1x1x16x4xf32> to vector<16x4xf32>
    %c0_571 = arith.constant 0 : index
    %c17_572 = arith.constant 17 : index
    %c2_573 = arith.constant 2 : index
    %c0_574 = arith.constant 0 : index
    %316 = vector.load %arg2[%c0_571, %c17_572, %c2_573, %c0_574] : memref<1x18x18x4xf32, #tpu.memory_space<vmem>>, vector<1x1x16x4xf32>
    %317 = vector.shape_cast %316 : vector<1x1x16x4xf32> to vector<16x4xf32>
    %318 = tpu.concatenate %301, %303, %305, %307, %309, %311, %313, %315, %317 in 1 : vector<16x4xf32>, vector<16x4xf32>, vector<16x4xf32>, vector<16x4xf32>, vector<16x4xf32>, vector<16x4xf32>, vector<16x4xf32>, vector<16x4xf32>, vector<16x4xf32> -> vector<16x36xf32>
    %c240 = arith.constant 240 : index
    %c0_575 = arith.constant 0 : index
    %319 = vector.load %arg6[%c240, %c0_575] : memref<256x36xf32, #tpu.memory_space<vmem>>, vector<16x36xf32>
    tpu.vector_store %arg6[%c240, %c0_575], %318 {strides = array<i32>} : memref<256x36xf32, #tpu.memory_space<vmem>>, vector<16x36xf32>,
    %c0_576 = arith.constant 0 : index
    %c0_577 = arith.constant 0 : index
    %320 = vector.load %arg6[%c0_576, %c0_577] : memref<256x36xf32, #tpu.memory_space<vmem>>, vector<256x36xf32>
    %c0_578 = arith.constant 0 : index
    %c0_579 = arith.constant 0 : index
    %321 = vector.load %arg3[%c0_578, %c0_579] : memref<36x128xf32, #tpu.memory_space<vmem>>, vector<36x128xf32>
    %cst = arith.constant dense<0.000000e+00> : vector<256x128xf32>
    %322 = tpu.matmul %320, %321, %cst {dimension_numbers = #tpu.dot_dimension_numbers<[1], [0], [0], [1], [0, 0, 1, 1], [], []>} : vector<256x36xf32>, vector<36x128xf32>, vector<256x128xf32> -> vector<256x128xf32>
    %c0_580 = arith.constant 0 : index
    %c0_581 = arith.constant 0 : index
    %323 = vector.load %arg4[%c0_580, %c0_581] : memref<1x128xf32, #tpu.memory_space<vmem>>, vector<1x128xf32>
    %324 = vector.broadcast %323 : vector<1x128xf32> to vector<256x128xf32>
    %325 = arith.addf %322, %324 : vector<256x128xf32>
    %cst_582 = arith.constant 0.000000e+00 : f32
    %326 = vector.broadcast %cst_582 : f32 to vector<256x128xf32>
    %327 = arith.maximumf %325, %326 : vector<256x128xf32>
    %c0_583 = arith.constant 0 : index
    %c0_584 = arith.constant 0 : index
    %c0_585 = arith.constant 0 : index
    %328 = vector.load %arg5[%c0_583, %c0_584, %c0_585] : memref<1x256x128xf32, #tpu.memory_space<vmem>>, vector<1x256x128xf32>
    %329 = vector.shape_cast %328 : vector<1x256x128xf32> to vector<256x128xf32>
    %330 = vector.shape_cast %327 : vector<256x128xf32> to vector<1x256x128xf32>
    tpu.vector_store %arg5[%c0_583, %c0_584, %c0_585], %330 {strides = array<i32>} : memref<1x256x128xf32, #tpu.memory_space<vmem>>, vector<1x256x128xf32>,
    return
  }
  func.func @transform_0(%arg0: i32, %arg1: i32) -> (i32, i32, i32, i32) {
    %c0_i32 = arith.constant 0 : i32
    %c0_i32_0 = arith.constant 0 : i32
    %c0_i32_1 = arith.constant 0 : i32
    %c0_i32_2 = arith.constant 0 : i32
    return %arg0, %c0_i32, %c0_i32_0, %c0_i32_1 : i32, i32, i32, i32
  }
  func.func @transform_1(%arg0: i32, %arg1: i32) -> (i32, i32) {
    %c0_i32 = arith.constant 0 : i32
    %c0_i32_0 = arith.constant 0 : i32
    return %c0_i32, %arg1 : i32, i32
  }
  func.func @transform_2(%arg0: i32, %arg1: i32) -> (i32, i32) {
    %c0_i32 = arith.constant 0 : i32
    %c0_i32_0 = arith.constant 0 : i32
    return %c0_i32, %arg1 : i32, i32
  }
  func.func @transform_3(%arg0: i32, %arg1: i32) -> (i32, i32, i32) {
    %c0_i32 = arith.constant 0 : i32
    %c0_i32_0 = arith.constant 0 : i32
    return %arg0, %c0_i32, %arg1 : i32, i32, i32
  }
}

</mosaic_0001>

<llo_original>
// kernel: tpu_custom_call.1
$region0: #{tpu_custom_call.1}
  #allocation0 [shape = 'u32[]', space=smem, size = 0x4, offset = 0x4, fixed_abs, tag = 'smem constant byte address 0x4 - core index']
  #allocation1 [shape = 'u32[72,128]{1,0:T(1,128)}', space=vmem, size = 0x9000, scoped, tag = 'internal scratch']
  #allocation2 [shape = 'f32[256,36]{1,0:T(8,128)}', space=vmem, size = 0x20000, scoped, tag = 'scratch operand']
  %s0 = inlined_call_operand.vmem [shape: f32[2,18,18,4], index: 0, kind: input, shape index: {}]
  %s1 = inlined_call_operand.vmem [shape: f32[36,128], index: 1, kind: input, shape index: {}]
  %s2 = inlined_call_operand.vmem [shape: f32[1,128], index: 2, kind: input, shape index: {}]
  %s3 = inlined_call_operand.hbm [shape: f32[2,256,128], index: 3, kind: output, shape index: {}]
  %s4 = sld [smem:[#allocation0]]
  $region45: #{tpu_custom_call.1} parent=0
    _
  %s6 = ssub.s32 1, %s4
  %s7 = scalar_select 0, %s6, %s4
  $region1: #{tpu_custom_call.1} parent=0
    #allocation3 [shape = 'u8[262144]{0}', space=vmem, size = 0x40000, scoped, tag = 'output window, operand 0']
    #allocation4 [shape = 's32[2]{0}', space=sflag, size = 0x8, scoped, tag = 'scoped memory for tpu_custom_call.1']
    %8 = vsyncpa [#allocation4], 0
    %s9 = scalar_lea.sflag [#allocation4], 1
    %10 = vsyncpa %s9, 0
    loop: start=0, step=1, limit=4
    $region2: #{tpu_custom_call.1} parent=1 // loop_pre_header
      _
    $region3: #{tpu_custom_call.1} parent=1 // loop_header
      %s12 = sphi 0, %s16
      %p13 = scmp.ge.s32.totalorder %s12, 4
      %s19 = sphi 0, %s31
      %s20 = sphi 0, %s27
      %s21 = sphi 0, %s19
      %s22 = sphi 0, %s20
      %s23 = sphi 0, %s21
      %s24 = sphi 0, %s22
      %s34 = sphi 0, %s36
      %s37 = sphi 0, %s34
      %s38 = sphi 0, %s37
      %s54 = sphi 0, %s38
      %s60 = sphi 0, %s62
      %s63 = sphi 0, %s60
      %s64 = sphi 0, %s63
      %s80 = sphi 0, %s64
      %s86 = sphi 0, %s88
      %s89 = sphi 0, %s86
      %s90 = sphi 0, %s89
      %s106 = sphi 0, %s90
      %s114 = sphi 0, %s116
      %s117 = sphi 0, %s114
      %s118 = sphi 0, %s117
      %s134 = sphi 0, %s118
    $region4: #{tpu_custom_call.1} parent=1 // loop_header_branch
      %15 = sbr.rel (%p13) target = $region8
    $region5: #{tpu_custom_call.1} parent=1 // loop_body
      %s17 = ssub.s32 %s12, 1
      %s18 = ssub.s32 %s12, 2
      %s25 = sadd.s32 1, %s20
      %p26 = scmp.ge.s32.totalorder %s25, 1
      %s27 = scalar_select %p26, 0, %s25
      %s28 = sadd.s32 1, %s19
      %s29 = scalar_select %p26, %s28, %s19
      %p30 = scmp.ge.s32.totalorder %s29, 2
      %s31 = scalar_select %p30, 0, %s29
      %s32 = ssub.s32 %s19, %s31
      %p33 = scmp.eq.s32.totalorder %s32, 0
      %s35 = sadd.s32 %s34, 1
      %s36 = scalar_select %p33, %s34, %s35
      %p39 = pneg %p33
      %p40 = scmp.eq.s32.totalorder %s12, 1
      %p41 = por %p39, %p40
      %p42 = scmp.ne.s32.totalorder %s34, %s37
      %p43 = scmp.eq.s32.totalorder %s12, 0
      %p44 = por %p42, %p43
      %p45 = scmp.ne.s32.totalorder %s34, %s37
      %p46 = scmp.eq.s32.totalorder %s17, 1
      %p47 = por %p45, %p46
      %p48 = scmp.ne.s32.totalorder %s37, %s38
      %p49 = scmp.eq.s32.totalorder %s17, 0
      %p50 = por %p48, %p49
      %p51 = scmp.ne.s32.totalorder %s37, %s38
      %p52 = scmp.eq.s32.totalorder %s18, 1
      %p53 = por %p51, %p52
      %p55 = scmp.ne.s32.totalorder %s38, %s54
      %p56 = scmp.eq.s32.totalorder %s18, 0
      %p57 = por %p55, %p56
      %s58 = ssub.s32 %s20, %s27
      %p59 = scmp.eq.s32.totalorder %s58, 0
      %s61 = sadd.s32 %s60, 1
      %s62 = scalar_select %p59, %s60, %s61
      %p65 = pneg %p59
      %p66 = scmp.eq.s32.totalorder %s12, 1
      %p67 = por %p65, %p66
      %p68 = scmp.ne.s32.totalorder %s60, %s63
      %p69 = scmp.eq.s32.totalorder %s12, 0
      %p70 = por %p68, %p69
      %p71 = scmp.ne.s32.totalorder %s60, %s63
      %p72 = scmp.eq.s32.totalorder %s17, 1
      %p73 = por %p71, %p72
      %p74 = scmp.ne.s32.totalorder %s63, %s64
      %p75 = scmp.eq.s32.totalorder %s17, 0
      %p76 = por %p74, %p75
      %p77 = scmp.ne.s32.totalorder %s63, %s64
      %p78 = scmp.eq.s32.totalorder %s18, 1
      %p79 = por %p77, %p78
      %p81 = scmp.ne.s32.totalorder %s64, %s80
      %p82 = scmp.eq.s32.totalorder %s18, 0
      %p83 = por %p81, %p82
      %s84 = ssub.s32 %s20, %s27
      %p85 = scmp.eq.s32.totalorder %s84, 0
      %s87 = sadd.s32 %s86, 1
      %s88 = scalar_select %p85, %s86, %s87
      %p91 = pneg %p85
      %p92 = scmp.eq.s32.totalorder %s12, 1
      %p93 = por %p91, %p92
      %p94 = scmp.ne.s32.totalorder %s86, %s89
      %p95 = scmp.eq.s32.totalorder %s12, 0
      %p96 = por %p94, %p95
      %p97 = scmp.ne.s32.totalorder %s86, %s89
      %p98 = scmp.eq.s32.totalorder %s17, 1
      %p99 = por %p97, %p98
      %p100 = scmp.ne.s32.totalorder %s89, %s90
      %p101 = scmp.eq.s32.totalorder %s17, 0
      %p102 = por %p100, %p101
      %p103 = scmp.ne.s32.totalorder %s89, %s90
      %p104 = scmp.eq.s32.totalorder %s18, 1
      %p105 = por %p103, %p104
      %p107 = scmp.ne.s32.totalorder %s90, %s106
      %p108 = scmp.eq.s32.totalorder %s18, 0
      %p109 = por %p107, %p108
      %s110 = ssub.s32 %s19, %s31
      %s111 = ssub.s32 %s20, %s27
      %s112 = sor.u32 %s110, %s111
      %p113 = scmp.eq.s32.totalorder %s112, 0
      %s115 = sadd.s32 %s114, 1
      %s116 = scalar_select %p113, %s114, %s115
      %p119 = pneg %p113
      %p120 = scmp.eq.s32.totalorder %s12, 1
      %p121 = por %p119, %p120
      %p122 = scmp.ne.s32.totalorder %s114, %s117
      %p123 = scmp.eq.s32.totalorder %s12, 0
      %p124 = por %p122, %p123
      %p125 = scmp.ne.s32.totalorder %s114, %s117
      %p126 = scmp.eq.s32.totalorder %s17, 1
      %p127 = por %p125, %p126
      %p128 = scmp.ne.s32.totalorder %s117, %s118
      %p129 = scmp.eq.s32.totalorder %s17, 0
      %p130 = por %p128, %p129
      %p131 = scmp.ne.s32.totalorder %s117, %s118
      %p132 = scmp.eq.s32.totalorder %s18, 1
      %p133 = por %p131, %p132
      %p135 = scmp.ne.s32.totalorder %s118, %s134
      %p136 = scmp.eq.s32.totalorder %s18, 0
      %p137 = por %p135, %p136
      %p138 = scmp.le.s32.totalorder 1, %s12
      %p139 = scmp.lt.s32.totalorder %s12, 3
      %p140 = pnand %p138, %p139
      %p141 = pneg %p140
      // Predicated region
      $region9: #{tpu_custom_call.1} parent=5 // pred_check
        _
      $region10: #{tpu_custom_call.1} parent=5 // pred_check_branch
        %143 = sbr.rel (%p140) target = $region12
      $region11: #{tpu_custom_call.1} parent=5 // pred_region
        %s144 = ssub.s32 %s12, 1
        // Predicated region
        $region13: #{tpu_custom_call.1} parent=11 // pred_check
          %p145 = pneg %p76
        $region14: #{tpu_custom_call.1} parent=11 // pred_check_branch
          %147 = sbr.rel (%p145) target = $region16
        $region15: #{tpu_custom_call.1} parent=11 // pred_region
          %p148 = scmp.lt.s32.totalorder %s22, 0
          %s149 = scalar_select %p148, %s22, 0
          %s150 = smul.addr %s149, 8
          %s151 = scalar_lea.vmem %s1, %s150
        $region16: #{tpu_custom_call.1} parent=11 // pred_fallthru
          _
        // Predicated region
        $region17: #{tpu_custom_call.1} parent=11 // pred_check
          %p152 = pneg %p102
        $region18: #{tpu_custom_call.1} parent=11 // pred_check_branch
          %154 = sbr.rel (%p152) target = $region20
        $region19: #{tpu_custom_call.1} parent=11 // pred_region
          %p155 = scmp.lt.s32.totalorder %s22, 0
          %s156 = scalar_select %p155, %s22, 0
          %s157 = scalar_lea.vmem %s2, %s156
        $region20: #{tpu_custom_call.1} parent=11 // pred_fallthru
          _
      $region12: #{tpu_custom_call.1} parent=5 // pred_fallthru
        _
      %p158 = scmp.lt.s32.totalorder %s12, 2
      // Predicated region
      $region21: #{tpu_custom_call.1} parent=5 // pred_check
        %p159 = pneg %p158
      $region22: #{tpu_custom_call.1} parent=5 // pred_check_branch
        %161 = sbr.rel (%p159) target = $region24
      $region23: #{tpu_custom_call.1} parent=5 // pred_region
        // Predicated region
        $region25: #{tpu_custom_call.1} parent=23 // pred_check
          %p162 = pneg %p44
        $region26: #{tpu_custom_call.1} parent=23 // pred_check_branch
          %164 = sbr.rel (%p162) target = $region28
        $region27: #{tpu_custom_call.1} parent=23 // pred_region
          %p165 = scmp.lt.s32.totalorder %s19, 1
          %s166 = scalar_select %p165, %s19, 1
          %s167 = smul.addr %s166, 54
          %s168 = smul.addr %s167, 8
          %s169 = scalar_lea.vmem %s0, %s168
        $region28: #{tpu_custom_call.1} parent=23 // pred_fallthru
          _
      $region24: #{tpu_custom_call.1} parent=5 // pred_fallthru
        _
      %p170 = scmp.le.s32.totalorder 1, %s12
      %p171 = scmp.lt.s32.totalorder %s12, 3
      %p172 = pnand %p170, %p171
      %p173 = pneg %p172
      // Predicated region
      $region29: #{tpu_custom_call.1} parent=5 // pred_check
        _
      $region30: #{tpu_custom_call.1} parent=5 // pred_check_branch
        %175 = sbr.rel (%p172) target = $region32
      $region31: #{tpu_custom_call.1} parent=5 // pred_region
        %s176 = ssub.s32 %s12, 1
        %p177 = scmp.lt.s32.totalorder %s21, 1
        %s178 = scalar_select %p177, %s21, 1
        %s179 = smul.addr %s178, 54
        %s180 = smul.addr %s179, 8
        %s181 = scalar_lea.vmem %s0, %s180
        %p182 = pneg %p50
        %p183 = pneg %p47
        %p184 = scmp.lt.s32.totalorder %s22, 0
        %s185 = scalar_select %p184, %s22, 0
        %s186 = smul.addr %s185, 8
        %s187 = scalar_lea.vmem %s1, %s186
        %p188 = pneg %p76
        %p189 = pneg %p73
        %p190 = scmp.lt.s32.totalorder %s22, 0
        %s191 = scalar_select %p190, %s22, 0
        %s192 = scalar_lea.vmem %s2, %s191
        %p193 = pneg %p102
        %p194 = pneg %p99
        %p195 = pneg %p130
        %p196 = pneg %p127
        %s197 = sand.u32 %s117, 1
        %s198 = scalar_lea.sflag [#allocation4], %s197
        %s199 = sand.u32 %s117, 1
        %s200 = smul.addr %s199, 256
        %s201 = scalar_lea.vmem [#allocation3], %s200
        %p202 = scmp.lt.s32.totalorder %s21, 1
        %s203 = scalar_select %p202, %s21, 1
        %s204 = smul.addr %s203, 54
        %s205 = smul.addr %s204, 8
        %s206 = scalar_lea.vmem %s0, %s205
        %p207 = scmp.lt.s32.totalorder %s22, 0
        %s208 = scalar_select %p207, %s22, 0
        %s209 = smul.addr %s208, 8
        %s210 = scalar_lea.vmem %s1, %s209
        %p211 = scmp.lt.s32.totalorder %s22, 0
        %s212 = scalar_select %p211, %s22, 0
        %s213 = scalar_lea.vmem %s2, %s212
        %v214 = vld [vmem:[%s206] sm:$0xff]
        %v215 = vld [vmem:[%s206 + $0x8] sm:$0xff]
        %v216 = vld [vmem:[%s206 + $0x1] sm:$0xff]
        %v217 = vld [vmem:[%s206 + $0x9] sm:$0xff]
        %v218 = vld [vmem:[%s206 + $0x2] sm:$0xff]
        %v219 = vld [vmem:[%s206 + $0xa] sm:$0xff]
        %s220 = scalar_lea.vmem %s206, 24
        %v221 = vld [vmem:[%s220] sm:$0xff]
        %v222 = vld [vmem:[%s220 + $0x8] sm:$0xff]
        %v223 = vld [vmem:[%s220 + $0x1] sm:$0xff]
        %v224 = vld [vmem:[%s220 + $0x9] sm:$0xff]
        %v225 = vld [vmem:[%s220 + $0x2] sm:$0xff]
        %v226 = vld [vmem:[%s220 + $0xa] sm:$0xff]
        %s227 = scalar_lea.vmem %s206, 48
        %v228 = vld [vmem:[%s227] sm:$0xff]
        %v229 = vld [vmem:[%s227 + $0x8] sm:$0xff]
        %v230 = vld [vmem:[%s227 + $0x1] sm:$0xff]
        %v231 = vld [vmem:[%s227 + $0x9] sm:$0xff]
        %v232 = vld [vmem:[%s227 + $0x2] sm:$0xff]
        %v233 = vld [vmem:[%s227 + $0xa] sm:$0xff]
        %236 = vrot.lane.b32.xlu0 %v216, 4
        %v237 = vpop.permute.xlu0 %236
        %238 = vrot.lane.b32.xlu0 %v217, 4
        %v239 = vpop.permute.xlu0 %238
        %244 = vrot.lane.b32.xlu0 %v218, 8
        %v245 = vpop.permute.xlu0 %244
        %246 = vrot.lane.b32.xlu0 %v219, 8
        %v247 = vpop.permute.xlu0 %246
        %252 = vrot.lane.b32.xlu0 %v221, 12
        %v253 = vpop.permute.xlu0 %252
        %254 = vrot.lane.b32.xlu0 %v222, 12
        %v255 = vpop.permute.xlu0 %254
        %260 = vrot.lane.b32.xlu0 %v223, 16
        %v261 = vpop.permute.xlu0 %260
        %262 = vrot.lane.b32.xlu0 %v224, 16
        %v263 = vpop.permute.xlu0 %262
        %268 = vrot.lane.b32.xlu0 %v225, 20
        %v269 = vpop.permute.xlu0 %268
        %270 = vrot.lane.b32.xlu0 %v226, 20
        %v271 = vpop.permute.xlu0 %270
        %276 = vrot.lane.b32.xlu0 %v228, 24
        %v277 = vpop.permute.xlu0 %276
        %278 = vrot.lane.b32.xlu0 %v229, 24
        %v279 = vpop.permute.xlu0 %278
        %284 = vrot.lane.b32.xlu0 %v230, 28
        %v285 = vpop.permute.xlu0 %284
        %286 = vrot.lane.b32.xlu0 %v231, 28
        %v287 = vpop.permute.xlu0 %286
        %292 = vrot.lane.b32.xlu0 %v232, 32
        %v293 = vpop.permute.xlu0 %292
        %294 = vrot.lane.b32.xlu0 %v233, 32
        %v295 = vpop.permute.xlu0 %294
        %vm298 = vcmask 31744
        %v299 = vsel %vm298, %v214, %v237
        %v300 = vsel %vm298, %v215, %v239
        %vm301 = vcmask 64512
        %v302 = vsel %vm301, %v299, %v245
        %v303 = vsel %vm301, %v300, %v247
        %vm304 = vcmask 97280
        %v305 = vsel %vm304, %v302, %v253
        %v306 = vsel %vm304, %v303, %v255
        %vm307 = vcmask 130048
        %v308 = vsel %vm307, %v305, %v261
        %v309 = vsel %vm307, %v306, %v263
        %vm310 = vcmask 162816
        %v311 = vsel %vm310, %v308, %v269
        %v312 = vsel %vm310, %v309, %v271
        %vm313 = vcmask 195584
        %v314 = vsel %vm313, %v311, %v277
        %v315 = vsel %vm313, %v312, %v279
        %vm316 = vcmask 228352
        %v317 = vsel %vm316, %v314, %v285
        %v318 = vsel %vm316, %v315, %v287
        %vm319 = vcmask 261120
        %v320 = vsel %vm319, %v317, %v293
        %v321 = vsel %vm319, %v318, %v295
        %vm322 = vcmask 293888
        %323 = vst.msk [vmem:[#allocation2] sm:$0xff] %vm322, %v320
        %324 = vst.msk [vmem:[#allocation2 + $0x8] sm:$0xff] %vm322, %v321
        %v325 = vld [vmem:[%s220] sm:$0xff]
        %v326 = vld [vmem:[%s220 + $0x8] sm:$0xff]
        %v327 = vld [vmem:[%s220 + $0x1] sm:$0xff]
        %v328 = vld [vmem:[%s220 + $0x9] sm:$0xff]
        %v329 = vld [vmem:[%s220 + $0x2] sm:$0xff]
        %v330 = vld [vmem:[%s220 + $0xa] sm:$0xff]
        %v331 = vld [vmem:[%s227] sm:$0xff]
        %v332 = vld [vmem:[%s227 + $0x8] sm:$0xff]
        %v333 = vld [vmem:[%s227 + $0x1] sm:$0xff]
        %v334 = vld [vmem:[%s227 + $0x9] sm:$0xff]
        %v335 = vld [vmem:[%s227 + $0x2] sm:$0xff]
        %v336 = vld [vmem:[%s227 + $0xa] sm:$0xff]
        %s337 = scalar_lea.vmem %s206, 72
        %v338 = vld [vmem:[%s337] sm:$0xff]
        %v339 = vld [vmem:[%s337 + $0x8] sm:$0xff]
        %v340 = vld [vmem:[%s337 + $0x1] sm:$0xff]
        %v341 = vld [vmem:[%s337 + $0x9] sm:$0xff]
        %v342 = vld [vmem:[%s337 + $0x2] sm:$0xff]
        %v343 = vld [vmem:[%s337 + $0xa] sm:$0xff]
        %346 = vrot.lane.b32.xlu0 %v327, 4
        %v347 = vpop.permute.xlu0 %346
        %348 = vrot.lane.b32.xlu0 %v328, 4
        %v349 = vpop.permute.xlu0 %348
        %354 = vrot.lane.b32.xlu0 %v329, 8
        %v355 = vpop.permute.xlu0 %354
        %356 = vrot.lane.b32.xlu0 %v330, 8
        %v357 = vpop.permute.xlu0 %356
        %362 = vrot.lane.b32.xlu0 %v331, 12
        %v363 = vpop.permute.xlu0 %362
        %364 = vrot.lane.b32.xlu0 %v332, 12
        %v365 = vpop.permute.xlu0 %364
        %370 = vrot.lane.b32.xlu0 %v333, 16
        %v371 = vpop.permute.xlu0 %370
        %372 = vrot.lane.b32.xlu0 %v334, 16
        %v373 = vpop.permute.xlu0 %372
        %378 = vrot.lane.b32.xlu0 %v335, 20
        %v379 = vpop.permute.xlu0 %378
        %380 = vrot.lane.b32.xlu0 %v336, 20
        %v381 = vpop.permute.xlu0 %380
        %386 = vrot.lane.b32.xlu0 %v338, 24
        %v387 = vpop.permute.xlu0 %386
        %388 = vrot.lane.b32.xlu0 %v339, 24
        %v389 = vpop.permute.xlu0 %388
        %394 = vrot.lane.b32.xlu0 %v340, 28
        %v395 = vpop.permute.xlu0 %394
        %396 = vrot.lane.b32.xlu0 %v341, 28
        %v397 = vpop.permute.xlu0 %396
        %402 = vrot.lane.b32.xlu0 %v342, 32
        %v403 = vpop.permute.xlu0 %402
        %404 = vrot.lane.b32.xlu0 %v343, 32
        %v405 = vpop.permute.xlu0 %404
        %v408 = vsel %vm298, %v325, %v347
        %v409 = vsel %vm298, %v326, %v349
        %v410 = vsel %vm301, %v408, %v355
        %v411 = vsel %vm301, %v409, %v357
        %v412 = vsel %vm304, %v410, %v363
        %v413 = vsel %vm304, %v411, %v365
        %v414 = vsel %vm307, %v412, %v371
        %v415 = vsel %vm307, %v413, %v373
        %v416 = vsel %vm310, %v414, %v379
        %v417 = vsel %vm310, %v415, %v381
        %v418 = vsel %vm313, %v416, %v387
        %v419 = vsel %vm313, %v417, %v389
        %v420 = vsel %vm316, %v418, %v395
        %v421 = vsel %vm316, %v419, %v397
        %v422 = vsel %vm319, %v420, %v403
        %v423 = vsel %vm319, %v421, %v405
        %424 = vst.msk [vmem:[#allocation2 + $0x10] sm:$0xff] %vm322, %v422
        %425 = vst.msk [vmem:[#allocation2 + $0x18] sm:$0xff] %vm322, %v423
        %v426 = vld [vmem:[%s227] sm:$0xff]
        %v427 = vld [vmem:[%s227 + $0x8] sm:$0xff]
        %v428 = vld [vmem:[%s227 + $0x1] sm:$0xff]
        %v429 = vld [vmem:[%s227 + $0x9] sm:$0xff]
        %v430 = vld [vmem:[%s227 + $0x2] sm:$0xff]
        %v431 = vld [vmem:[%s227 + $0xa] sm:$0xff]
        %v432 = vld [vmem:[%s337] sm:$0xff]
        %v433 = vld [vmem:[%s337 + $0x8] sm:$0xff]
        %v434 = vld [vmem:[%s337 + $0x1] sm:$0xff]
        %v435 = vld [vmem:[%s337 + $0x9] sm:$0xff]
        %v436 = vld [vmem:[%s337 + $0x2] sm:$0xff]
        %v437 = vld [vmem:[%s337 + $0xa] sm:$0xff]
        %s438 = scalar_lea.vmem %s206, 96
        %v439 = vld [vmem:[%s438] sm:$0xff]
        %v440 = vld [vmem:[%s438 + $0x8] sm:$0xff]
        %v441 = vld [vmem:[%s438 + $0x1] sm:$0xff]
        %v442 = vld [vmem:[%s438 + $0x9] sm:$0xff]
        %v443 = vld [vmem:[%s438 + $0x2] sm:$0xff]
        %v444 = vld [vmem:[%s438 + $0xa] sm:$0xff]
        %447 = vrot.lane.b32.xlu0 %v428, 4
        %v448 = vpop.permute.xlu0 %447
        %449 = vrot.lane.b32.xlu0 %v429, 4
        %v450 = vpop.permute.xlu0 %449
        %455 = vrot.lane.b32.xlu0 %v430, 8
        %v456 = vpop.permute.xlu0 %455
        %457 = vrot.lane.b32.xlu0 %v431, 8
        %v458 = vpop.permute.xlu0 %457
        %463 = vrot.lane.b32.xlu0 %v432, 12
        %v464 = vpop.permute.xlu0 %463
        %465 = vrot.lane.b32.xlu0 %v433, 12
        %v466 = vpop.permute.xlu0 %465
        %471 = vrot.lane.b32.xlu0 %v434, 16
        %v472 = vpop.permute.xlu0 %471
        %473 = vrot.lane.b32.xlu0 %v435, 16
        %v474 = vpop.permute.xlu0 %473
        %479 = vrot.lane.b32.xlu0 %v436, 20
        %v480 = vpop.permute.xlu0 %479
        %481 = vrot.lane.b32.xlu0 %v437, 20
        %v482 = vpop.permute.xlu0 %481
        %487 = vrot.lane.b32.xlu0 %v439, 24
        %v488 = vpop.permute.xlu0 %487
        %489 = vrot.lane.b32.xlu0 %v440, 24
        %v490 = vpop.permute.xlu0 %489
        %495 = vrot.lane.b32.xlu0 %v441, 28
        %v496 = vpop.permute.xlu0 %495
        %497 = vrot.lane.b32.xlu0 %v442, 28
        %v498 = vpop.permute.xlu0 %497
        %503 = vrot.lane.b32.xlu0 %v443, 32
        %v504 = vpop.permute.xlu0 %503
        %505 = vrot.lane.b32.xlu0 %v444, 32
        %v506 = vpop.permute.xlu0 %505
        %v509 = vsel %vm298, %v426, %v448
        %v510 = vsel %vm298, %v427, %v450
        %v511 = vsel %vm301, %v509, %v456
        %v512 = vsel %vm301, %v510, %v458
        %v513 = vsel %vm304, %v511, %v464
        %v514 = vsel %vm304, %v512, %v466
        %v515 = vsel %vm307, %v513, %v472
        %v516 = vsel %vm307, %v514, %v474
        %v517 = vsel %vm310, %v515, %v480
        %v518 = vsel %vm310, %v516, %v482
        %v519 = vsel %vm313, %v517, %v488
        %v520 = vsel %vm313, %v518, %v490
        %v521 = vsel %vm316, %v519, %v496
        %v522 = vsel %vm316, %v520, %v498
        %v523 = vsel %vm319, %v521, %v504
        %v524 = vsel %vm319, %v522, %v506
        %525 = vst.msk [vmem:[#allocation2 + $0x20] sm:$0xff] %vm322, %v523
        %526 = vst.msk [vmem:[#allocation2 + $0x28] sm:$0xff] %vm322, %v524
        %v527 = vld [vmem:[%s337] sm:$0xff]
        %v528 = vld [vmem:[%s337 + $0x8] sm:$0xff]
        %v529 = vld [vmem:[%s337 + $0x1] sm:$0xff]
        %v530 = vld [vmem:[%s337 + $0x9] sm:$0xff]
        %v531 = vld [vmem:[%s337 + $0x2] sm:$0xff]
        %v532 = vld [vmem:[%s337 + $0xa] sm:$0xff]
        %v533 = vld [vmem:[%s438] sm:$0xff]
        %v534 = vld [vmem:[%s438 + $0x8] sm:$0xff]
        %v535 = vld [vmem:[%s438 + $0x1] sm:$0xff]
        %v536 = vld [vmem:[%s438 + $0x9] sm:$0xff]
        %v537 = vld [vmem:[%s438 + $0x2] sm:$0xff]
        %v538 = vld [vmem:[%s438 + $0xa] sm:$0xff]
        %s539 = scalar_lea.vmem %s206, 120
        %v540 = vld [vmem:[%s539] sm:$0xff]
        %v541 = vld [vmem:[%s539 + $0x8] sm:$0xff]
        %v542 = vld [vmem:[%s539 + $0x1] sm:$0xff]
        %v543 = vld [vmem:[%s539 + $0x9] sm:$0xff]
        %v544 = vld [vmem:[%s539 + $0x2] sm:$0xff]
        %v545 = vld [vmem:[%s539 + $0xa] sm:$0xff]
        %548 = vrot.lane.b32.xlu0 %v529, 4
        %v549 = vpop.permute.xlu0 %548
        %550 = vrot.lane.b32.xlu0 %v530, 4
        %v551 = vpop.permute.xlu0 %550
        %556 = vrot.lane.b32.xlu0 %v531, 8
        %v557 = vpop.permute.xlu0 %556
        %558 = vrot.lane.b32.xlu0 %v532, 8
        %v559 = vpop.permute.xlu0 %558
        %564 = vrot.lane.b32.xlu0 %v533, 12
        %v565 = vpop.permute.xlu0 %564
        %566 = vrot.lane.b32.xlu0 %v534, 12
        %v567 = vpop.permute.xlu0 %566
        %572 = vrot.lane.b32.xlu0 %v535, 16
        %v573 = vpop.permute.xlu0 %572
        %574 = vrot.lane.b32.xlu0 %v536, 16
        %v575 = vpop.permute.xlu0 %574
        %580 = vrot.lane.b32.xlu0 %v537, 20
        %v581 = vpop.permute.xlu0 %580
        %582 = vrot.lane.b32.xlu0 %v538, 20
        %v583 = vpop.permute.xlu0 %582
        %588 = vrot.lane.b32.xlu0 %v540, 24
        %v589 = vpop.permute.xlu0 %588
        %590 = vrot.lane.b32.xlu0 %v541, 24
        %v591 = vpop.permute.xlu0 %590
        %596 = vrot.lane.b32.xlu0 %v542, 28
        %v597 = vpop.permute.xlu0 %596
        %598 = vrot.lane.b32.xlu0 %v543, 28
        %v599 = vpop.permute.xlu0 %598
        %604 = vrot.lane.b32.xlu0 %v544, 32
        %v605 = vpop.permute.xlu0 %604
        %606 = vrot.lane.b32.xlu0 %v545, 32
        %v607 = vpop.permute.xlu0 %606
        %v610 = vsel %vm298, %v527, %v549
        %v611 = vsel %vm298, %v528, %v551
        %v612 = vsel %vm301, %v610, %v557
        %v613 = vsel %vm301, %v611, %v559
        %v614 = vsel %vm304, %v612, %v565
        %v615 = vsel %vm304, %v613, %v567
        %v616 = vsel %vm307, %v614, %v573
        %v617 = vsel %vm307, %v615, %v575
        %v618 = vsel %vm310, %v616, %v581
        %v619 = vsel %vm310, %v617, %v583
        %v620 = vsel %vm313, %v618, %v589
        %v621 = vsel %vm313, %v619, %v591
        %v622 = vsel %vm316, %v620, %v597
        %v623 = vsel %vm316, %v621, %v599
        %v624 = vsel %vm319, %v622, %v605
        %v625 = vsel %vm319, %v623, %v607
        %626 = vst.msk [vmem:[#allocation2 + $0x30] sm:$0xff] %vm322, %v624
        %627 = vst.msk [vmem:[#allocation2 + $0x38] sm:$0xff] %vm322, %v625
        %v628 = vld [vmem:[%s438] sm:$0xff]
        %v629 = vld [vmem:[%s438 + $0x8] sm:$0xff]
        %v630 = vld [vmem:[%s438 + $0x1] sm:$0xff]
        %v631 = vld [vmem:[%s438 + $0x9] sm:$0xff]
        %v632 = vld [vmem:[%s438 + $0x2] sm:$0xff]
        %v633 = vld [vmem:[%s438 + $0xa] sm:$0xff]
        %v634 = vld [vmem:[%s539] sm:$0xff]
        %v635 = vld [vmem:[%s539 + $0x8] sm:$0xff]
        %v636 = vld [vmem:[%s539 + $0x1] sm:$0xff]
        %v637 = vld [vmem:[%s539 + $0x9] sm:$0xff]
        %v638 = vld [vmem:[%s539 + $0x2] sm:$0xff]
        %v639 = vld [vmem:[%s539 + $0xa] sm:$0xff]
        %s640 = scalar_lea.vmem %s206, 144
        %v641 = vld [vmem:[%s640] sm:$0xff]
        %v642 = vld [vmem:[%s640 + $0x8] sm:$0xff]
        %v643 = vld [vmem:[%s640 + $0x1] sm:$0xff]
        %v644 = vld [vmem:[%s640 + $0x9] sm:$0xff]
        %v645 = vld [vmem:[%s640 + $0x2] sm:$0xff]
        %v646 = vld [vmem:[%s640 + $0xa] sm:$0xff]
        %649 = vrot.lane.b32.xlu0 %v630, 4
        %v650 = vpop.permute.xlu0 %649
        %651 = vrot.lane.b32.xlu0 %v631, 4
        %v652 = vpop.permute.xlu0 %651
        %657 = vrot.lane.b32.xlu0 %v632, 8
        %v658 = vpop.permute.xlu0 %657
        %659 = vrot.lane.b32.xlu0 %v633, 8
        %v660 = vpop.permute.xlu0 %659
        %665 = vrot.lane.b32.xlu0 %v634, 12
        %v666 = vpop.permute.xlu0 %665
        %667 = vrot.lane.b32.xlu0 %v635, 12
        %v668 = vpop.permute.xlu0 %667
        %673 = vrot.lane.b32.xlu0 %v636, 16
        %v674 = vpop.permute.xlu0 %673
        %675 = vrot.lane.b32.xlu0 %v637, 16
        %v676 = vpop.permute.xlu0 %675
        %681 = vrot.lane.b32.xlu0 %v638, 20
        %v682 = vpop.permute.xlu0 %681
        %683 = vrot.lane.b32.xlu0 %v639, 20
        %v684 = vpop.permute.xlu0 %683
        %689 = vrot.lane.b32.xlu0 %v641, 24
        %v690 = vpop.permute.xlu0 %689
        %691 = vrot.lane.b32.xlu0 %v642, 24
        %v692 = vpop.permute.xlu0 %691
        %697 = vrot.lane.b32.xlu0 %v643, 28
        %v698 = vpop.permute.xlu0 %697
        %699 = vrot.lane.b32.xlu0 %v644, 28
        %v700 = vpop.permute.xlu0 %699
        %705 = vrot.lane.b32.xlu0 %v645, 32
        %v706 = vpop.permute.xlu0 %705
        %707 = vrot.lane.b32.xlu0 %v646, 32
        %v708 = vpop.permute.xlu0 %707
        %v711 = vsel %vm298, %v628, %v650
        %v712 = vsel %vm298, %v629, %v652
        %v713 = vsel %vm301, %v711, %v658
        %v714 = vsel %vm301, %v712, %v660
        %v715 = vsel %vm304, %v713, %v666
        %v716 = vsel %vm304, %v714, %v668
        %v717 = vsel %vm307, %v715, %v674
        %v718 = vsel %vm307, %v716, %v676
        %v719 = vsel %vm310, %v717, %v682
        %v720 = vsel %vm310, %v718, %v684
        %v721 = vsel %vm313, %v719, %v690
        %v722 = vsel %vm313, %v720, %v692
        %v723 = vsel %vm316, %v721, %v698
        %v724 = vsel %vm316, %v722, %v700
        %v725 = vsel %vm319, %v723, %v706
        %v726 = vsel %vm319, %v724, %v708
        %727 = vst.msk [vmem:[#allocation2 + $0x40] sm:$0xff] %vm322, %v725
        %728 = vst.msk [vmem:[#allocation2 + $0x48] sm:$0xff] %vm322, %v726
        %v729 = vld [vmem:[%s539] sm:$0xff]
        %v730 = vld [vmem:[%s539 + $0x8] sm:$0xff]
        %v731 = vld [vmem:[%s539 + $0x1] sm:$0xff]
        %v732 = vld [vmem:[%s539 + $0x9] sm:$0xff]
        %v733 = vld [vmem:[%s539 + $0x2] sm:$0xff]
        %v734 = vld [vmem:[%s539 + $0xa] sm:$0xff]
        %v735 = vld [vmem:[%s640] sm:$0xff]
        %v736 = vld [vmem:[%s640 + $0x8] sm:$0xff]
        %v737 = vld [vmem:[%s640 + $0x1] sm:$0xff]
        %v738 = vld [vmem:[%s640 + $0x9] sm:$0xff]
        %v739 = vld [vmem:[%s640 + $0x2] sm:$0xff]
        %v740 = vld [vmem:[%s640 + $0xa] sm:$0xff]
        %s741 = scalar_lea.vmem %s206, 168
        %v742 = vld [vmem:[%s741] sm:$0xff]
        %v743 = vld [vmem:[%s741 + $0x8] sm:$0xff]
        %v744 = vld [vmem:[%s741 + $0x1] sm:$0xff]
        %v745 = vld [vmem:[%s741 + $0x9] sm:$0xff]
        %v746 = vld [vmem:[%s741 + $0x2] sm:$0xff]
        %v747 = vld [vmem:[%s741 + $0xa] sm:$0xff]
        %750 = vrot.lane.b32.xlu0 %v731, 4
        %v751 = vpop.permute.xlu0 %750
        %752 = vrot.lane.b32.xlu0 %v732, 4
        %v753 = vpop.permute.xlu0 %752
        %758 = vrot.lane.b32.xlu0 %v733, 8
        %v759 = vpop.permute.xlu0 %758
        %760 = vrot.lane.b32.xlu0 %v734, 8
        %v761 = vpop.permute.xlu0 %760
        %766 = vrot.lane.b32.xlu0 %v735, 12
        %v767 = vpop.permute.xlu0 %766
        %768 = vrot.lane.b32.xlu0 %v736, 12
        %v769 = vpop.permute.xlu0 %768
        %774 = vrot.lane.b32.xlu0 %v737, 16
        %v775 = vpop.permute.xlu0 %774
        %776 = vrot.lane.b32.xlu0 %v738, 16
        %v777 = vpop.permute.xlu0 %776
        %782 = vrot.lane.b32.xlu0 %v739, 20
        %v783 = vpop.permute.xlu0 %782
        %784 = vrot.lane.b32.xlu0 %v740, 20
        %v785 = vpop.permute.xlu0 %784
        %790 = vrot.lane.b32.xlu0 %v742, 24
        %v791 = vpop.permute.xlu0 %790
        %792 = vrot.lane.b32.xlu0 %v743, 24
        %v793 = vpop.permute.xlu0 %792
        %798 = vrot.lane.b32.xlu0 %v744, 28
        %v799 = vpop.permute.xlu0 %798
        %800 = vrot.lane.b32.xlu0 %v745, 28
        %v801 = vpop.permute.xlu0 %800
        %806 = vrot.lane.b32.xlu0 %v746, 32
        %v807 = vpop.permute.xlu0 %806
        %808 = vrot.lane.b32.xlu0 %v747, 32
        %v809 = vpop.permute.xlu0 %808
        %v812 = vsel %vm298, %v729, %v751
        %v813 = vsel %vm298, %v730, %v753
        %v814 = vsel %vm301, %v812, %v759
        %v815 = vsel %vm301, %v813, %v761
        %v816 = vsel %vm304, %v814, %v767
        %v817 = vsel %vm304, %v815, %v769
        %v818 = vsel %vm307, %v816, %v775
        %v819 = vsel %vm307, %v817, %v777
        %v820 = vsel %vm310, %v818, %v783
        %v821 = vsel %vm310, %v819, %v785
        %v822 = vsel %vm313, %v820, %v791
        %v823 = vsel %vm313, %v821, %v793
        %v824 = vsel %vm316, %v822, %v799
        %v825 = vsel %vm316, %v823, %v801
        %v826 = vsel %vm319, %v824, %v807
        %v827 = vsel %vm319, %v825, %v809
        %828 = vst.msk [vmem:[#allocation2 + $0x50] sm:$0xff] %vm322, %v826
        %829 = vst.msk [vmem:[#allocation2 + $0x58] sm:$0xff] %vm322, %v827
        %v830 = vld [vmem:[%s640] sm:$0xff]
        %v831 = vld [vmem:[%s640 + $0x8] sm:$0xff]
        %v832 = vld [vmem:[%s640 + $0x1] sm:$0xff]
        %v833 = vld [vmem:[%s640 + $0x9] sm:$0xff]
        %v834 = vld [vmem:[%s640 + $0x2] sm:$0xff]
        %v835 = vld [vmem:[%s640 + $0xa] sm:$0xff]
        %v836 = vld [vmem:[%s741] sm:$0xff]
        %v837 = vld [vmem:[%s741 + $0x8] sm:$0xff]
        %v838 = vld [vmem:[%s741 + $0x1] sm:$0xff]
        %v839 = vld [vmem:[%s741 + $0x9] sm:$0xff]
        %v840 = vld [vmem:[%s741 + $0x2] sm:$0xff]
        %v841 = vld [vmem:[%s741 + $0xa] sm:$0xff]
        %s842 = scalar_lea.vmem %s206, 192
        %v843 = vld [vmem:[%s842] sm:$0xff]
        %v844 = vld [vmem:[%s842 + $0x8] sm:$0xff]
        %v845 = vld [vmem:[%s842 + $0x1] sm:$0xff]
        %v846 = vld [vmem:[%s842 + $0x9] sm:$0xff]
        %v847 = vld [vmem:[%s842 + $0x2] sm:$0xff]
        %v848 = vld [vmem:[%s842 + $0xa] sm:$0xff]
        %851 = vrot.lane.b32.xlu0 %v832, 4
        %v852 = vpop.permute.xlu0 %851
        %853 = vrot.lane.b32.xlu0 %v833, 4
        %v854 = vpop.permute.xlu0 %853
        %859 = vrot.lane.b32.xlu0 %v834, 8
        %v860 = vpop.permute.xlu0 %859
        %861 = vrot.lane.b32.xlu0 %v835, 8
        %v862 = vpop.permute.xlu0 %861
        %867 = vrot.lane.b32.xlu0 %v836, 12
        %v868 = vpop.permute.xlu0 %867
        %869 = vrot.lane.b32.xlu0 %v837, 12
        %v870 = vpop.permute.xlu0 %869
        %875 = vrot.lane.b32.xlu0 %v838, 16
        %v876 = vpop.permute.xlu0 %875
        %877 = vrot.lane.b32.xlu0 %v839, 16
        %v878 = vpop.permute.xlu0 %877
        %883 = vrot.lane.b32.xlu0 %v840, 20
        %v884 = vpop.permute.xlu0 %883
        %885 = vrot.lane.b32.xlu0 %v841, 20
        %v886 = vpop.permute.xlu0 %885
        %891 = vrot.lane.b32.xlu0 %v843, 24
        %v892 = vpop.permute.xlu0 %891
        %893 = vrot.lane.b32.xlu0 %v844, 24
        %v894 = vpop.permute.xlu0 %893
        %899 = vrot.lane.b32.xlu0 %v845, 28
        %v900 = vpop.permute.xlu0 %899
        %901 = vrot.lane.b32.xlu0 %v846, 28
        %v902 = vpop.permute.xlu0 %901
        %907 = vrot.lane.b32.xlu0 %v847, 32
        %v908 = vpop.permute.xlu0 %907
        %909 = vrot.lane.b32.xlu0 %v848, 32
        %v910 = vpop.permute.xlu0 %909
        %v913 = vsel %vm298, %v830, %v852
        %v914 = vsel %vm298, %v831, %v854
        %v915 = vsel %vm301, %v913, %v860
        %v916 = vsel %vm301, %v914, %v862
        %v917 = vsel %vm304, %v915, %v868
        %v918 = vsel %vm304, %v916, %v870
        %v919 = vsel %vm307, %v917, %v876
        %v920 = vsel %vm307, %v918, %v878
        %v921 = vsel %vm310, %v919, %v884
        %v922 = vsel %vm310, %v920, %v886
        %v923 = vsel %vm313, %v921, %v892
        %v924 = vsel %vm313, %v922, %v894
        %v925 = vsel %vm316, %v923, %v900
        %v926 = vsel %vm316, %v924, %v902
        %v927 = vsel %vm319, %v925, %v908
        %v928 = vsel %vm319, %v926, %v910
        %929 = vst.msk [vmem:[#allocation2 + $0x60] sm:$0xff] %vm322, %v927
        %930 = vst.msk [vmem:[#allocation2 + $0x68] sm:$0xff] %vm322, %v928
        %v931 = vld [vmem:[%s741] sm:$0xff]
        %v932 = vld [vmem:[%s741 + $0x8] sm:$0xff]
        %v933 = vld [vmem:[%s741 + $0x1] sm:$0xff]
        %v934 = vld [vmem:[%s741 + $0x9] sm:$0xff]
        %v935 = vld [vmem:[%s741 + $0x2] sm:$0xff]
        %v936 = vld [vmem:[%s741 + $0xa] sm:$0xff]
        %v937 = vld [vmem:[%s842] sm:$0xff]
        %v938 = vld [vmem:[%s842 + $0x8] sm:$0xff]
        %v939 = vld [vmem:[%s842 + $0x1] sm:$0xff]
        %v940 = vld [vmem:[%s842 + $0x9] sm:$0xff]
        %v941 = vld [vmem:[%s842 + $0x2] sm:$0xff]
        %v942 = vld [vmem:[%s842 + $0xa] sm:$0xff]
        %s943 = scalar_lea.vmem %s206, 216
        %v944 = vld [vmem:[%s943] sm:$0xff]
        %v945 = vld [vmem:[%s943 + $0x8] sm:$0xff]
        %v946 = vld [vmem:[%s943 + $0x1] sm:$0xff]
        %v947 = vld [vmem:[%s943 + $0x9] sm:$0xff]
        %v948 = vld [vmem:[%s943 + $0x2] sm:$0xff]
        %v949 = vld [vmem:[%s943 + $0xa] sm:$0xff]
        %952 = vrot.lane.b32.xlu0 %v933, 4
        %v953 = vpop.permute.xlu0 %952
        %954 = vrot.lane.b32.xlu0 %v934, 4
        %v955 = vpop.permute.xlu0 %954
        %960 = vrot.lane.b32.xlu0 %v935, 8
        %v961 = vpop.permute.xlu0 %960
        %962 = vrot.lane.b32.xlu0 %v936, 8
        %v963 = vpop.permute.xlu0 %962
        %968 = vrot.lane.b32.xlu0 %v937, 12
        %v969 = vpop.permute.xlu0 %968
        %970 = vrot.lane.b32.xlu0 %v938, 12
        %v971 = vpop.permute.xlu0 %970
        %976 = vrot.lane.b32.xlu0 %v939, 16
        %v977 = vpop.permute.xlu0 %976
        %978 = vrot.lane.b32.xlu0 %v940, 16
        %v979 = vpop.permute.xlu0 %978
        %984 = vrot.lane.b32.xlu0 %v941, 20
        %v985 = vpop.permute.xlu0 %984
        %986 = vrot.lane.b32.xlu0 %v942, 20
        %v987 = vpop.permute.xlu0 %986
        %992 = vrot.lane.b32.xlu0 %v944, 24
        %v993 = vpop.permute.xlu0 %992
        %994 = vrot.lane.b32.xlu0 %v945, 24
        %v995 = vpop.permute.xlu0 %994
        %1000 = vrot.lane.b32.xlu0 %v946, 28
        %v1001 = vpop.permute.xlu0 %1000
        %1002 = vrot.lane.b32.xlu0 %v947, 28
        %v1003 = vpop.permute.xlu0 %1002
        %1008 = vrot.lane.b32.xlu0 %v948, 32
        %v1009 = vpop.permute.xlu0 %1008
        %1010 = vrot.lane.b32.xlu0 %v949, 32
        %v1011 = vpop.permute.xlu0 %1010
        %v1014 = vsel %vm298, %v931, %v953
        %v1015 = vsel %vm298, %v932, %v955
        %v1016 = vsel %vm301, %v1014, %v961
        %v1017 = vsel %vm301, %v1015, %v963
        %v1018 = vsel %vm304, %v1016, %v969
        %v1019 = vsel %vm304, %v1017, %v971
        %v1020 = vsel %vm307, %v1018, %v977
        %v1021 = vsel %vm307, %v1019, %v979
        %v1022 = vsel %vm310, %v1020, %v985
        %v1023 = vsel %vm310, %v1021, %v987
        %v1024 = vsel %vm313, %v1022, %v993
        %v1025 = vsel %vm313, %v1023, %v995
        %v1026 = vsel %vm316, %v1024, %v1001
        %v1027 = vsel %vm316, %v1025, %v1003
        %v1028 = vsel %vm319, %v1026, %v1009
        %v1029 = vsel %vm319, %v1027, %v1011
        %1030 = vst.msk [vmem:[#allocation2 + $0x70] sm:$0xff] %vm322, %v1028
        %1031 = vst.msk [vmem:[#allocation2 + $0x78] sm:$0xff] %vm322, %v1029
        %v1032 = vld [vmem:[%s842] sm:$0xff]
        %v1033 = vld [vmem:[%s842 + $0x8] sm:$0xff]
        %v1034 = vld [vmem:[%s842 + $0x1] sm:$0xff]
        %v1035 = vld [vmem:[%s842 + $0x9] sm:$0xff]
        %v1036 = vld [vmem:[%s842 + $0x2] sm:$0xff]
        %v1037 = vld [vmem:[%s842 + $0xa] sm:$0xff]
        %v1038 = vld [vmem:[%s943] sm:$0xff]
        %v1039 = vld [vmem:[%s943 + $0x8] sm:$0xff]
        %v1040 = vld [vmem:[%s943 + $0x1] sm:$0xff]
        %v1041 = vld [vmem:[%s943 + $0x9] sm:$0xff]
        %v1042 = vld [vmem:[%s943 + $0x2] sm:$0xff]
        %v1043 = vld [vmem:[%s943 + $0xa] sm:$0xff]
        %s1044 = scalar_lea.vmem %s206, 240
        %v1045 = vld [vmem:[%s1044] sm:$0xff]
        %v1046 = vld [vmem:[%s1044 + $0x8] sm:$0xff]
        %v1047 = vld [vmem:[%s1044 + $0x1] sm:$0xff]
        %v1048 = vld [vmem:[%s1044 + $0x9] sm:$0xff]
        %v1049 = vld [vmem:[%s1044 + $0x2] sm:$0xff]
        %v1050 = vld [vmem:[%s1044 + $0xa] sm:$0xff]
        %1053 = vrot.lane.b32.xlu0 %v1034, 4
        %v1054 = vpop.permute.xlu0 %1053
        %1055 = vrot.lane.b32.xlu0 %v1035, 4
        %v1056 = vpop.permute.xlu0 %1055
        %1061 = vrot.lane.b32.xlu0 %v1036, 8
        %v1062 = vpop.permute.xlu0 %1061
        %1063 = vrot.lane.b32.xlu0 %v1037, 8
        %v1064 = vpop.permute.xlu0 %1063
        %1069 = vrot.lane.b32.xlu0 %v1038, 12
        %v1070 = vpop.permute.xlu0 %1069
        %1071 = vrot.lane.b32.xlu0 %v1039, 12
        %v1072 = vpop.permute.xlu0 %1071
        %1077 = vrot.lane.b32.xlu0 %v1040, 16
        %v1078 = vpop.permute.xlu0 %1077
        %1079 = vrot.lane.b32.xlu0 %v1041, 16
        %v1080 = vpop.permute.xlu0 %1079
        %1085 = vrot.lane.b32.xlu0 %v1042, 20
        %v1086 = vpop.permute.xlu0 %1085
        %1087 = vrot.lane.b32.xlu0 %v1043, 20
        %v1088 = vpop.permute.xlu0 %1087
        %1093 = vrot.lane.b32.xlu0 %v1045, 24
        %v1094 = vpop.permute.xlu0 %1093
        %1095 = vrot.lane.b32.xlu0 %v1046, 24
        %v1096 = vpop.permute.xlu0 %1095
        %1101 = vrot.lane.b32.xlu0 %v1047, 28
        %v1102 = vpop.permute.xlu0 %1101
        %1103 = vrot.lane.b32.xlu0 %v1048, 28
        %v1104 = vpop.permute.xlu0 %1103
        %1109 = vrot.lane.b32.xlu0 %v1049, 32
        %v1110 = vpop.permute.xlu0 %1109
        %1111 = vrot.lane.b32.xlu0 %v1050, 32
        %v1112 = vpop.permute.xlu0 %1111
        %v1115 = vsel %vm298, %v1032, %v1054
        %v1116 = vsel %vm298, %v1033, %v1056
        %v1117 = vsel %vm301, %v1115, %v1062
        %v1118 = vsel %vm301, %v1116, %v1064
        %v1119 = vsel %vm304, %v1117, %v1070
        %v1120 = vsel %vm304, %v1118, %v1072
        %v1121 = vsel %vm307, %v1119, %v1078
        %v1122 = vsel %vm307, %v1120, %v1080
        %v1123 = vsel %vm310, %v1121, %v1086
        %v1124 = vsel %vm310, %v1122, %v1088
        %v1125 = vsel %vm313, %v1123, %v1094
        %v1126 = vsel %vm313, %v1124, %v1096
        %v1127 = vsel %vm316, %v1125, %v1102
        %v1128 = vsel %vm316, %v1126, %v1104
        %v1129 = vsel %vm319, %v1127, %v1110
        %v1130 = vsel %vm319, %v1128, %v1112
        %1131 = vst.msk [vmem:[#allocation2 + $0x80] sm:$0xff] %vm322, %v1129
        %1132 = vst.msk [vmem:[#allocation2 + $0x88] sm:$0xff] %vm322, %v1130
        %v1133 = vld [vmem:[%s943] sm:$0xff]
        %v1134 = vld [vmem:[%s943 + $0x8] sm:$0xff]
        %v1135 = vld [vmem:[%s943 + $0x1] sm:$0xff]
        %v1136 = vld [vmem:[%s943 + $0x9] sm:$0xff]
        %v1137 = vld [vmem:[%s943 + $0x2] sm:$0xff]
        %v1138 = vld [vmem:[%s943 + $0xa] sm:$0xff]
        %v1139 = vld [vmem:[%s1044] sm:$0xff]
        %v1140 = vld [vmem:[%s1044 + $0x8] sm:$0xff]
        %v1141 = vld [vmem:[%s1044 + $0x1] sm:$0xff]
        %v1142 = vld [vmem:[%s1044 + $0x9] sm:$0xff]
        %v1143 = vld [vmem:[%s1044 + $0x2] sm:$0xff]
        %v1144 = vld [vmem:[%s1044 + $0xa] sm:$0xff]
        %s1145 = scalar_lea.vmem %s206, 264
        %v1146 = vld [vmem:[%s1145] sm:$0xff]
        %v1147 = vld [vmem:[%s1145 + $0x8] sm:$0xff]
        %v1148 = vld [vmem:[%s1145 + $0x1] sm:$0xff]
        %v1149 = vld [vmem:[%s1145 + $0x9] sm:$0xff]
        %v1150 = vld [vmem:[%s1145 + $0x2] sm:$0xff]
        %v1151 = vld [vmem:[%s1145 + $0xa] sm:$0xff]
        %1154 = vrot.lane.b32.xlu0 %v1135, 4
        %v1155 = vpop.permute.xlu0 %1154
        %1156 = vrot.lane.b32.xlu0 %v1136, 4
        %v1157 = vpop.permute.xlu0 %1156
        %1162 = vrot.lane.b32.xlu0 %v1137, 8
        %v1163 = vpop.permute.xlu0 %1162
        %1164 = vrot.lane.b32.xlu0 %v1138, 8
        %v1165 = vpop.permute.xlu0 %1164
        %1170 = vrot.lane.b32.xlu0 %v1139, 12
        %v1171 = vpop.permute.xlu0 %1170
        %1172 = vrot.lane.b32.xlu0 %v1140, 12
        %v1173 = vpop.permute.xlu0 %1172
        %1178 = vrot.lane.b32.xlu0 %v1141, 16
        %v1179 = vpop.permute.xlu0 %1178
        %1180 = vrot.lane.b32.xlu0 %v1142, 16
        %v1181 = vpop.permute.xlu0 %1180
        %1186 = vrot.lane.b32.xlu0 %v1143, 20
        %v1187 = vpop.permute.xlu0 %1186
        %1188 = vrot.lane.b32.xlu0 %v1144, 20
        %v1189 = vpop.permute.xlu0 %1188
        %1194 = vrot.lane.b32.xlu0 %v1146, 24
        %v1195 = vpop.permute.xlu0 %1194
        %1196 = vrot.lane.b32.xlu0 %v1147, 24
        %v1197 = vpop.permute.xlu0 %1196
        %1202 = vrot.lane.b32.xlu0 %v1148, 28
        %v1203 = vpop.permute.xlu0 %1202
        %1204 = vrot.lane.b32.xlu0 %v1149, 28
        %v1205 = vpop.permute.xlu0 %1204
        %1210 = vrot.lane.b32.xlu0 %v1150, 32
        %v1211 = vpop.permute.xlu0 %1210
        %1212 = vrot.lane.b32.xlu0 %v1151, 32
        %v1213 = vpop.permute.xlu0 %1212
        %v1216 = vsel %vm298, %v1133, %v1155
        %v1217 = vsel %vm298, %v1134, %v1157
        %v1218 = vsel %vm301, %v1216, %v1163
        %v1219 = vsel %vm301, %v1217, %v1165
        %v1220 = vsel %vm304, %v1218, %v1171
        %v1221 = vsel %vm304, %v1219, %v1173
        %v1222 = vsel %vm307, %v1220, %v1179
        %v1223 = vsel %vm307, %v1221, %v1181
        %v1224 = vsel %vm310, %v1222, %v1187
        %v1225 = vsel %vm310, %v1223, %v1189
        %v1226 = vsel %vm313, %v1224, %v1195
        %v1227 = vsel %vm313, %v1225, %v1197
        %v1228 = vsel %vm316, %v1226, %v1203
        %v1229 = vsel %vm316, %v1227, %v1205
        %v1230 = vsel %vm319, %v1228, %v1211
        %v1231 = vsel %vm319, %v1229, %v1213
        %1232 = vst.msk [vmem:[#allocation2 + $0x90] sm:$0xff] %vm322, %v1230
        %1233 = vst.msk [vmem:[#allocation2 + $0x98] sm:$0xff] %vm322, %v1231
        %v1234 = vld [vmem:[%s1044] sm:$0xff]
        %v1235 = vld [vmem:[%s1044 + $0x8] sm:$0xff]
        %v1236 = vld [vmem:[%s1044 + $0x1] sm:$0xff]
        %v1237 = vld [vmem:[%s1044 + $0x9] sm:$0xff]
        %v1238 = vld [vmem:[%s1044 + $0x2] sm:$0xff]
        %v1239 = vld [vmem:[%s1044 + $0xa] sm:$0xff]
        %v1240 = vld [vmem:[%s1145] sm:$0xff]
        %v1241 = vld [vmem:[%s1145 + $0x8] sm:$0xff]
        %v1242 = vld [vmem:[%s1145 + $0x1] sm:$0xff]
        %v1243 = vld [vmem:[%s1145 + $0x9] sm:$0xff]
        %v1244 = vld [vmem:[%s1145 + $0x2] sm:$0xff]
        %v1245 = vld [vmem:[%s1145 + $0xa] sm:$0xff]
        %s1246 = scalar_lea.vmem %s206, 288
        %v1247 = vld [vmem:[%s1246] sm:$0xff]
        %v1248 = vld [vmem:[%s1246 + $0x8] sm:$0xff]
        %v1249 = vld [vmem:[%s1246 + $0x1] sm:$0xff]
        %v1250 = vld [vmem:[%s1246 + $0x9] sm:$0xff]
        %v1251 = vld [vmem:[%s1246 + $0x2] sm:$0xff]
        %v1252 = vld [vmem:[%s1246 + $0xa] sm:$0xff]
        %1255 = vrot.lane.b32.xlu0 %v1236, 4
        %v1256 = vpop.permute.xlu0 %1255
        %1257 = vrot.lane.b32.xlu0 %v1237, 4
        %v1258 = vpop.permute.xlu0 %1257
        %1263 = vrot.lane.b32.xlu0 %v1238, 8
        %v1264 = vpop.permute.xlu0 %1263
        %1265 = vrot.lane.b32.xlu0 %v1239, 8
        %v1266 = vpop.permute.xlu0 %1265
        %1271 = vrot.lane.b32.xlu0 %v1240, 12
        %v1272 = vpop.permute.xlu0 %1271
        %1273 = vrot.lane.b32.xlu0 %v1241, 12
        %v1274 = vpop.permute.xlu0 %1273
        %1279 = vrot.lane.b32.xlu0 %v1242, 16
        %v1280 = vpop.permute.xlu0 %1279
        %1281 = vrot.lane.b32.xlu0 %v1243, 16
        %v1282 = vpop.permute.xlu0 %1281
        %1287 = vrot.lane.b32.xlu0 %v1244, 20
        %v1288 = vpop.permute.xlu0 %1287
        %1289 = vrot.lane.b32.xlu0 %v1245, 20
        %v1290 = vpop.permute.xlu0 %1289
        %1295 = vrot.lane.b32.xlu0 %v1247, 24
        %v1296 = vpop.permute.xlu0 %1295
        %1297 = vrot.lane.b32.xlu0 %v1248, 24
        %v1298 = vpop.permute.xlu0 %1297
        %1303 = vrot.lane.b32.xlu0 %v1249, 28
        %v1304 = vpop.permute.xlu0 %1303
        %1305 = vrot.lane.b32.xlu0 %v1250, 28
        %v1306 = vpop.permute.xlu0 %1305
        %1311 = vrot.lane.b32.xlu0 %v1251, 32
        %v1312 = vpop.permute.xlu0 %1311
        %1313 = vrot.lane.b32.xlu0 %v1252, 32
        %v1314 = vpop.permute.xlu0 %1313
        %v1317 = vsel %vm298, %v1234, %v1256
        %v1318 = vsel %vm298, %v1235, %v1258
        %v1319 = vsel %vm301, %v1317, %v1264
        %v1320 = vsel %vm301, %v1318, %v1266
        %v1321 = vsel %vm304, %v1319, %v1272
        %v1322 = vsel %vm304, %v1320, %v1274
        %v1323 = vsel %vm307, %v1321, %v1280
        %v1324 = vsel %vm307, %v1322, %v1282
        %v1325 = vsel %vm310, %v1323, %v1288
        %v1326 = vsel %vm310, %v1324, %v1290
        %v1327 = vsel %vm313, %v1325, %v1296
        %v1328 = vsel %vm313, %v1326, %v1298
        %v1329 = vsel %vm316, %v1327, %v1304
        %v1330 = vsel %vm316, %v1328, %v1306
        %v1331 = vsel %vm319, %v1329, %v1312
        %v1332 = vsel %vm319, %v1330, %v1314
        %1333 = vst.msk [vmem:[#allocation2 + $0xa0] sm:$0xff] %vm322, %v1331
        %1334 = vst.msk [vmem:[#allocation2 + $0xa8] sm:$0xff] %vm322, %v1332
        %v1335 = vld [vmem:[%s1145] sm:$0xff]
        %v1336 = vld [vmem:[%s1145 + $0x8] sm:$0xff]
        %v1337 = vld [vmem:[%s1145 + $0x1] sm:$0xff]
        %v1338 = vld [vmem:[%s1145 + $0x9] sm:$0xff]
        %v1339 = vld [vmem:[%s1145 + $0x2] sm:$0xff]
        %v1340 = vld [vmem:[%s1145 + $0xa] sm:$0xff]
        %v1341 = vld [vmem:[%s1246] sm:$0xff]
        %v1342 = vld [vmem:[%s1246 + $0x8] sm:$0xff]
        %v1343 = vld [vmem:[%s1246 + $0x1] sm:$0xff]
        %v1344 = vld [vmem:[%s1246 + $0x9] sm:$0xff]
        %v1345 = vld [vmem:[%s1246 + $0x2] sm:$0xff]
        %v1346 = vld [vmem:[%s1246 + $0xa] sm:$0xff]
        %s1347 = scalar_lea.vmem %s206, 312
        %v1348 = vld [vmem:[%s1347] sm:$0xff]
        %v1349 = vld [vmem:[%s1347 + $0x8] sm:$0xff]
        %v1350 = vld [vmem:[%s1347 + $0x1] sm:$0xff]
        %v1351 = vld [vmem:[%s1347 + $0x9] sm:$0xff]
        %v1352 = vld [vmem:[%s1347 + $0x2] sm:$0xff]
        %v1353 = vld [vmem:[%s1347 + $0xa] sm:$0xff]
        %1356 = vrot.lane.b32.xlu0 %v1337, 4
        %v1357 = vpop.permute.xlu0 %1356
        %1358 = vrot.lane.b32.xlu0 %v1338, 4
        %v1359 = vpop.permute.xlu0 %1358
        %1364 = vrot.lane.b32.xlu0 %v1339, 8
        %v1365 = vpop.permute.xlu0 %1364
        %1366 = vrot.lane.b32.xlu0 %v1340, 8
        %v1367 = vpop.permute.xlu0 %1366
        %1372 = vrot.lane.b32.xlu0 %v1341, 12
        %v1373 = vpop.permute.xlu0 %1372
        %1374 = vrot.lane.b32.xlu0 %v1342, 12
        %v1375 = vpop.permute.xlu0 %1374
        %1380 = vrot.lane.b32.xlu0 %v1343, 16
        %v1381 = vpop.permute.xlu0 %1380
        %1382 = vrot.lane.b32.xlu0 %v1344, 16
        %v1383 = vpop.permute.xlu0 %1382
        %1388 = vrot.lane.b32.xlu0 %v1345, 20
        %v1389 = vpop.permute.xlu0 %1388
        %1390 = vrot.lane.b32.xlu0 %v1346, 20
        %v1391 = vpop.permute.xlu0 %1390
        %1396 = vrot.lane.b32.xlu0 %v1348, 24
        %v1397 = vpop.permute.xlu0 %1396
        %1398 = vrot.lane.b32.xlu0 %v1349, 24
        %v1399 = vpop.permute.xlu0 %1398
        %1404 = vrot.lane.b32.xlu0 %v1350, 28
        %v1405 = vpop.permute.xlu0 %1404
        %1406 = vrot.lane.b32.xlu0 %v1351, 28
        %v1407 = vpop.permute.xlu0 %1406
        %1412 = vrot.lane.b32.xlu0 %v1352, 32
        %v1413 = vpop.permute.xlu0 %1412
        %1414 = vrot.lane.b32.xlu0 %v1353, 32
        %v1415 = vpop.permute.xlu0 %1414
        %v1418 = vsel %vm298, %v1335, %v1357
        %v1419 = vsel %vm298, %v1336, %v1359
        %v1420 = vsel %vm301, %v1418, %v1365
        %v1421 = vsel %vm301, %v1419, %v1367
        %v1422 = vsel %vm304, %v1420, %v1373
        %v1423 = vsel %vm304, %v1421, %v1375
        %v1424 = vsel %vm307, %v1422, %v1381
        %v1425 = vsel %vm307, %v1423, %v1383
        %v1426 = vsel %vm310, %v1424, %v1389
        %v1427 = vsel %vm310, %v1425, %v1391
        %v1428 = vsel %vm313, %v1426, %v1397
        %v1429 = vsel %vm313, %v1427, %v1399
        %v1430 = vsel %vm316, %v1428, %v1405
        %v1431 = vsel %vm316, %v1429, %v1407
        %v1432 = vsel %vm319, %v1430, %v1413
        %v1433 = vsel %vm319, %v1431, %v1415
        %1434 = vst.msk [vmem:[#allocation2 + $0xb0] sm:$0xff] %vm322, %v1432
        %1435 = vst.msk [vmem:[#allocation2 + $0xb8] sm:$0xff] %vm322, %v1433
        %v1436 = vld [vmem:[%s1246] sm:$0xff]
        %v1437 = vld [vmem:[%s1246 + $0x8] sm:$0xff]
        %v1438 = vld [vmem:[%s1246 + $0x1] sm:$0xff]
        %v1439 = vld [vmem:[%s1246 + $0x9] sm:$0xff]
        %v1440 = vld [vmem:[%s1246 + $0x2] sm:$0xff]
        %v1441 = vld [vmem:[%s1246 + $0xa] sm:$0xff]
        %v1442 = vld [vmem:[%s1347] sm:$0xff]
        %v1443 = vld [vmem:[%s1347 + $0x8] sm:$0xff]
        %v1444 = vld [vmem:[%s1347 + $0x1] sm:$0xff]
        %v1445 = vld [vmem:[%s1347 + $0x9] sm:$0xff]
        %v1446 = vld [vmem:[%s1347 + $0x2] sm:$0xff]
        %v1447 = vld [vmem:[%s1347 + $0xa] sm:$0xff]
        %s1448 = scalar_lea.vmem %s206, 336
        %v1449 = vld [vmem:[%s1448] sm:$0xff]
        %v1450 = vld [vmem:[%s1448 + $0x8] sm:$0xff]
        %v1451 = vld [vmem:[%s1448 + $0x1] sm:$0xff]
        %v1452 = vld [vmem:[%s1448 + $0x9] sm:$0xff]
        %v1453 = vld [vmem:[%s1448 + $0x2] sm:$0xff]
        %v1454 = vld [vmem:[%s1448 + $0xa] sm:$0xff]
        %1457 = vrot.lane.b32.xlu0 %v1438, 4
        %v1458 = vpop.permute.xlu0 %1457
        %1459 = vrot.lane.b32.xlu0 %v1439, 4
        %v1460 = vpop.permute.xlu0 %1459
        %1465 = vrot.lane.b32.xlu0 %v1440, 8
        %v1466 = vpop.permute.xlu0 %1465
        %1467 = vrot.lane.b32.xlu0 %v1441, 8
        %v1468 = vpop.permute.xlu0 %1467
        %1473 = vrot.lane.b32.xlu0 %v1442, 12
        %v1474 = vpop.permute.xlu0 %1473
        %1475 = vrot.lane.b32.xlu0 %v1443, 12
        %v1476 = vpop.permute.xlu0 %1475
        %1481 = vrot.lane.b32.xlu0 %v1444, 16
        %v1482 = vpop.permute.xlu0 %1481
        %1483 = vrot.lane.b32.xlu0 %v1445, 16
        %v1484 = vpop.permute.xlu0 %1483
        %1489 = vrot.lane.b32.xlu0 %v1446, 20
        %v1490 = vpop.permute.xlu0 %1489
        %1491 = vrot.lane.b32.xlu0 %v1447, 20
        %v1492 = vpop.permute.xlu0 %1491
        %1497 = vrot.lane.b32.xlu0 %v1449, 24
        %v1498 = vpop.permute.xlu0 %1497
        %1499 = vrot.lane.b32.xlu0 %v1450, 24
        %v1500 = vpop.permute.xlu0 %1499
        %1505 = vrot.lane.b32.xlu0 %v1451, 28
        %v1506 = vpop.permute.xlu0 %1505
        %1507 = vrot.lane.b32.xlu0 %v1452, 28
        %v1508 = vpop.permute.xlu0 %1507
        %1513 = vrot.lane.b32.xlu0 %v1453, 32
        %v1514 = vpop.permute.xlu0 %1513
        %1515 = vrot.lane.b32.xlu0 %v1454, 32
        %v1516 = vpop.permute.xlu0 %1515
        %v1519 = vsel %vm298, %v1436, %v1458
        %v1520 = vsel %vm298, %v1437, %v1460
        %v1521 = vsel %vm301, %v1519, %v1466
        %v1522 = vsel %vm301, %v1520, %v1468
        %v1523 = vsel %vm304, %v1521, %v1474
        %v1524 = vsel %vm304, %v1522, %v1476
        %v1525 = vsel %vm307, %v1523, %v1482
        %v1526 = vsel %vm307, %v1524, %v1484
        %v1527 = vsel %vm310, %v1525, %v1490
        %v1528 = vsel %vm310, %v1526, %v1492
        %v1529 = vsel %vm313, %v1527, %v1498
        %v1530 = vsel %vm313, %v1528, %v1500
        %v1531 = vsel %vm316, %v1529, %v1506
        %v1532 = vsel %vm316, %v1530, %v1508
        %v1533 = vsel %vm319, %v1531, %v1514
        %v1534 = vsel %vm319, %v1532, %v1516
        %1535 = vst.msk [vmem:[#allocation2 + $0xc0] sm:$0xff] %vm322, %v1533
        %1536 = vst.msk [vmem:[#allocation2 + $0xc8] sm:$0xff] %vm322, %v1534
        %v1537 = vld [vmem:[%s1347] sm:$0xff]
        %v1538 = vld [vmem:[%s1347 + $0x8] sm:$0xff]
        %v1539 = vld [vmem:[%s1347 + $0x1] sm:$0xff]
        %v1540 = vld [vmem:[%s1347 + $0x9] sm:$0xff]
        %v1541 = vld [vmem:[%s1347 + $0x2] sm:$0xff]
        %v1542 = vld [vmem:[%s1347 + $0xa] sm:$0xff]
        %v1543 = vld [vmem:[%s1448] sm:$0xff]
        %v1544 = vld [vmem:[%s1448 + $0x8] sm:$0xff]
        %v1545 = vld [vmem:[%s1448 + $0x1] sm:$0xff]
        %v1546 = vld [vmem:[%s1448 + $0x9] sm:$0xff]
        %v1547 = vld [vmem:[%s1448 + $0x2] sm:$0xff]
        %v1548 = vld [vmem:[%s1448 + $0xa] sm:$0xff]
        %s1549 = scalar_lea.vmem %s206, 360
        %v1550 = vld [vmem:[%s1549] sm:$0xff]
        %v1551 = vld [vmem:[%s1549 + $0x8] sm:$0xff]
        %v1552 = vld [vmem:[%s1549 + $0x1] sm:$0xff]
        %v1553 = vld [vmem:[%s1549 + $0x9] sm:$0xff]
        %v1554 = vld [vmem:[%s1549 + $0x2] sm:$0xff]
        %v1555 = vld [vmem:[%s1549 + $0xa] sm:$0xff]
        %1558 = vrot.lane.b32.xlu0 %v1539, 4
        %v1559 = vpop.permute.xlu0 %1558
        %1560 = vrot.lane.b32.xlu0 %v1540, 4
        %v1561 = vpop.permute.xlu0 %1560
        %1566 = vrot.lane.b32.xlu0 %v1541, 8
        %v1567 = vpop.permute.xlu0 %1566
        %1568 = vrot.lane.b32.xlu0 %v1542, 8
        %v1569 = vpop.permute.xlu0 %1568
        %1574 = vrot.lane.b32.xlu0 %v1543, 12
        %v1575 = vpop.permute.xlu0 %1574
        %1576 = vrot.lane.b32.xlu0 %v1544, 12
        %v1577 = vpop.permute.xlu0 %1576
        %1582 = vrot.lane.b32.xlu0 %v1545, 16
        %v1583 = vpop.permute.xlu0 %1582
        %1584 = vrot.lane.b32.xlu0 %v1546, 16
        %v1585 = vpop.permute.xlu0 %1584
        %1590 = vrot.lane.b32.xlu0 %v1547, 20
        %v1591 = vpop.permute.xlu0 %1590
        %1592 = vrot.lane.b32.xlu0 %v1548, 20
        %v1593 = vpop.permute.xlu0 %1592
        %1598 = vrot.lane.b32.xlu0 %v1550, 24
        %v1599 = vpop.permute.xlu0 %1598
        %1600 = vrot.lane.b32.xlu0 %v1551, 24
        %v1601 = vpop.permute.xlu0 %1600
        %1606 = vrot.lane.b32.xlu0 %v1552, 28
        %v1607 = vpop.permute.xlu0 %1606
        %1608 = vrot.lane.b32.xlu0 %v1553, 28
        %v1609 = vpop.permute.xlu0 %1608
        %1614 = vrot.lane.b32.xlu0 %v1554, 32
        %v1615 = vpop.permute.xlu0 %1614
        %1616 = vrot.lane.b32.xlu0 %v1555, 32
        %v1617 = vpop.permute.xlu0 %1616
        %v1620 = vsel %vm298, %v1537, %v1559
        %v1621 = vsel %vm298, %v1538, %v1561
        %v1622 = vsel %vm301, %v1620, %v1567
        %v1623 = vsel %vm301, %v1621, %v1569
        %v1624 = vsel %vm304, %v1622, %v1575
        %v1625 = vsel %vm304, %v1623, %v1577
        %v1626 = vsel %vm307, %v1624, %v1583
        %v1627 = vsel %vm307, %v1625, %v1585
        %v1628 = vsel %vm310, %v1626, %v1591
        %v1629 = vsel %vm310, %v1627, %v1593
        %v1630 = vsel %vm313, %v1628, %v1599
        %v1631 = vsel %vm313, %v1629, %v1601
        %v1632 = vsel %vm316, %v1630, %v1607
        %v1633 = vsel %vm316, %v1631, %v1609
        %v1634 = vsel %vm319, %v1632, %v1615
        %v1635 = vsel %vm319, %v1633, %v1617
        %1636 = vst.msk [vmem:[#allocation2 + $0xd0] sm:$0xff] %vm322, %v1634
        %1637 = vst.msk [vmem:[#allocation2 + $0xd8] sm:$0xff] %vm322, %v1635
        %v1638 = vld [vmem:[%s1448] sm:$0xff]
        %v1639 = vld [vmem:[%s1448 + $0x8] sm:$0xff]
        %v1640 = vld [vmem:[%s1448 + $0x1] sm:$0xff]
        %v1641 = vld [vmem:[%s1448 + $0x9] sm:$0xff]
        %v1642 = vld [vmem:[%s1448 + $0x2] sm:$0xff]
        %v1643 = vld [vmem:[%s1448 + $0xa] sm:$0xff]
        %v1644 = vld [vmem:[%s1549] sm:$0xff]
        %v1645 = vld [vmem:[%s1549 + $0x8] sm:$0xff]
        %v1646 = vld [vmem:[%s1549 + $0x1] sm:$0xff]
        %v1647 = vld [vmem:[%s1549 + $0x9] sm:$0xff]
        %v1648 = vld [vmem:[%s1549 + $0x2] sm:$0xff]
        %v1649 = vld [vmem:[%s1549 + $0xa] sm:$0xff]
        %s1650 = scalar_lea.vmem %s206, 384
        %v1651 = vld [vmem:[%s1650] sm:$0xff]
        %v1652 = vld [vmem:[%s1650 + $0x8] sm:$0xff]
        %v1653 = vld [vmem:[%s1650 + $0x1] sm:$0xff]
        %v1654 = vld [vmem:[%s1650 + $0x9] sm:$0xff]
        %v1655 = vld [vmem:[%s1650 + $0x2] sm:$0xff]
        %v1656 = vld [vmem:[%s1650 + $0xa] sm:$0xff]
        %1659 = vrot.lane.b32.xlu0 %v1640, 4
        %v1660 = vpop.permute.xlu0 %1659
        %1661 = vrot.lane.b32.xlu0 %v1641, 4
        %v1662 = vpop.permute.xlu0 %1661
        %1667 = vrot.lane.b32.xlu0 %v1642, 8
        %v1668 = vpop.permute.xlu0 %1667
        %1669 = vrot.lane.b32.xlu0 %v1643, 8
        %v1670 = vpop.permute.xlu0 %1669
        %1675 = vrot.lane.b32.xlu0 %v1644, 12
        %v1676 = vpop.permute.xlu0 %1675
        %1677 = vrot.lane.b32.xlu0 %v1645, 12
        %v1678 = vpop.permute.xlu0 %1677
        %1683 = vrot.lane.b32.xlu0 %v1646, 16
        %v1684 = vpop.permute.xlu0 %1683
        %1685 = vrot.lane.b32.xlu0 %v1647, 16
        %v1686 = vpop.permute.xlu0 %1685
        %1691 = vrot.lane.b32.xlu0 %v1648, 20
        %v1692 = vpop.permute.xlu0 %1691
        %1693 = vrot.lane.b32.xlu0 %v1649, 20
        %v1694 = vpop.permute.xlu0 %1693
        %1699 = vrot.lane.b32.xlu0 %v1651, 24
        %v1700 = vpop.permute.xlu0 %1699
        %1701 = vrot.lane.b32.xlu0 %v1652, 24
        %v1702 = vpop.permute.xlu0 %1701
        %1707 = vrot.lane.b32.xlu0 %v1653, 28
        %v1708 = vpop.permute.xlu0 %1707
        %1709 = vrot.lane.b32.xlu0 %v1654, 28
        %v1710 = vpop.permute.xlu0 %1709
        %1715 = vrot.lane.b32.xlu0 %v1655, 32
        %v1716 = vpop.permute.xlu0 %1715
        %1717 = vrot.lane.b32.xlu0 %v1656, 32
        %v1718 = vpop.permute.xlu0 %1717
        %v1721 = vsel %vm298, %v1638, %v1660
        %v1722 = vsel %vm298, %v1639, %v1662
        %v1723 = vsel %vm301, %v1721, %v1668
        %v1724 = vsel %vm301, %v1722, %v1670
        %v1725 = vsel %vm304, %v1723, %v1676
        %v1726 = vsel %vm304, %v1724, %v1678
        %v1727 = vsel %vm307, %v1725, %v1684
        %v1728 = vsel %vm307, %v1726, %v1686
        %v1729 = vsel %vm310, %v1727, %v1692
        %v1730 = vsel %vm310, %v1728, %v1694
        %v1731 = vsel %vm313, %v1729, %v1700
        %v1732 = vsel %vm313, %v1730, %v1702
        %v1733 = vsel %vm316, %v1731, %v1708
        %v1734 = vsel %vm316, %v1732, %v1710
        %v1735 = vsel %vm319, %v1733, %v1716
        %v1736 = vsel %vm319, %v1734, %v1718
        %1737 = vst.msk [vmem:[#allocation2 + $0xe0] sm:$0xff] %vm322, %v1735
        %1738 = vst.msk [vmem:[#allocation2 + $0xe8] sm:$0xff] %vm322, %v1736
        %v1739 = vld [vmem:[%s1549] sm:$0xff]
        %v1740 = vld [vmem:[%s1549 + $0x8] sm:$0xff]
        %v1741 = vld [vmem:[%s1549 + $0x1] sm:$0xff]
        %v1742 = vld [vmem:[%s1549 + $0x9] sm:$0xff]
        %v1743 = vld [vmem:[%s1549 + $0x2] sm:$0xff]
        %v1744 = vld [vmem:[%s1549 + $0xa] sm:$0xff]
        %v1745 = vld [vmem:[%s1650] sm:$0xff]
        %v1746 = vld [vmem:[%s1650 + $0x8] sm:$0xff]
        %v1747 = vld [vmem:[%s1650 + $0x1] sm:$0xff]
        %v1748 = vld [vmem:[%s1650 + $0x9] sm:$0xff]
        %v1749 = vld [vmem:[%s1650 + $0x2] sm:$0xff]
        %v1750 = vld [vmem:[%s1650 + $0xa] sm:$0xff]
        %s1751 = scalar_lea.vmem %s206, 408
        %v1752 = vld [vmem:[%s1751] sm:$0xff]
        %v1753 = vld [vmem:[%s1751 + $0x8] sm:$0xff]
        %v1754 = vld [vmem:[%s1751 + $0x1] sm:$0xff]
        %v1755 = vld [vmem:[%s1751 + $0x9] sm:$0xff]
        %v1756 = vld [vmem:[%s1751 + $0x2] sm:$0xff]
        %v1757 = vld [vmem:[%s1751 + $0xa] sm:$0xff]
        %1760 = vrot.lane.b32.xlu0 %v1741, 4
        %v1761 = vpop.permute.xlu0 %1760
        %1762 = vrot.lane.b32.xlu0 %v1742, 4
        %v1763 = vpop.permute.xlu0 %1762
        %1768 = vrot.lane.b32.xlu0 %v1743, 8
        %v1769 = vpop.permute.xlu0 %1768
        %1770 = vrot.lane.b32.xlu0 %v1744, 8
        %v1771 = vpop.permute.xlu0 %1770
        %1776 = vrot.lane.b32.xlu0 %v1745, 12
        %v1777 = vpop.permute.xlu0 %1776
        %1778 = vrot.lane.b32.xlu0 %v1746, 12
        %v1779 = vpop.permute.xlu0 %1778
        %1784 = vrot.lane.b32.xlu0 %v1747, 16
        %v1785 = vpop.permute.xlu0 %1784
        %1786 = vrot.lane.b32.xlu0 %v1748, 16
        %v1787 = vpop.permute.xlu0 %1786
        %1792 = vrot.lane.b32.xlu0 %v1749, 20
        %v1793 = vpop.permute.xlu0 %1792
        %1794 = vrot.lane.b32.xlu0 %v1750, 20
        %v1795 = vpop.permute.xlu0 %1794
        %1800 = vrot.lane.b32.xlu0 %v1752, 24
        %v1801 = vpop.permute.xlu0 %1800
        %1802 = vrot.lane.b32.xlu0 %v1753, 24
        %v1803 = vpop.permute.xlu0 %1802
        %1808 = vrot.lane.b32.xlu0 %v1754, 28
        %v1809 = vpop.permute.xlu0 %1808
        %1810 = vrot.lane.b32.xlu0 %v1755, 28
        %v1811 = vpop.permute.xlu0 %1810
        %1816 = vrot.lane.b32.xlu0 %v1756, 32
        %v1817 = vpop.permute.xlu0 %1816
        %1818 = vrot.lane.b32.xlu0 %v1757, 32
        %v1819 = vpop.permute.xlu0 %1818
        %v1822 = vsel %vm298, %v1739, %v1761
        %v1823 = vsel %vm298, %v1740, %v1763
        %v1824 = vsel %vm301, %v1822, %v1769
        %v1825 = vsel %vm301, %v1823, %v1771
        %v1826 = vsel %vm304, %v1824, %v1777
        %v1827 = vsel %vm304, %v1825, %v1779
        %v1828 = vsel %vm307, %v1826, %v1785
        %v1829 = vsel %vm307, %v1827, %v1787
        %v1830 = vsel %vm310, %v1828, %v1793
        %v1831 = vsel %vm310, %v1829, %v1795
        %v1832 = vsel %vm313, %v1830, %v1801
        %v1833 = vsel %vm313, %v1831, %v1803
        %v1834 = vsel %vm316, %v1832, %v1809
        %v1835 = vsel %vm316, %v1833, %v1811
        %v1836 = vsel %vm319, %v1834, %v1817
        %v1837 = vsel %vm319, %v1835, %v1819
        %1838 = vst.msk [vmem:[#allocation2 + $0xf0] sm:$0xff] %vm322, %v1836
        %1839 = vst.msk [vmem:[#allocation2 + $0xf8] sm:$0xff] %vm322, %v1837
        %v1840 = vld [vmem:[#allocation2] sm:$0xff]
        %v1841 = vld [vmem:[#allocation2 + $0x8] sm:$0xff]
        %v1842 = vld [vmem:[#allocation2 + $0x10] sm:$0xff]
        %v1843 = vld [vmem:[#allocation2 + $0x18] sm:$0xff]
        %v1844 = vld [vmem:[#allocation2 + $0x20] sm:$0xff]
        %v1845 = vld [vmem:[#allocation2 + $0x28] sm:$0xff]
        %v1846 = vld [vmem:[#allocation2 + $0x30] sm:$0xff]
        %v1847 = vld [vmem:[#allocation2 + $0x38] sm:$0xff]
        %v1848 = vld [vmem:[#allocation2 + $0x40] sm:$0xff]
        %v1849 = vld [vmem:[#allocation2 + $0x48] sm:$0xff]
        %v1850 = vld [vmem:[#allocation2 + $0x50] sm:$0xff]
        %v1851 = vld [vmem:[#allocation2 + $0x58] sm:$0xff]
        %v1852 = vld [vmem:[#allocation2 + $0x60] sm:$0xff]
        %v1853 = vld [vmem:[#allocation2 + $0x68] sm:$0xff]
        %v1854 = vld [vmem:[#allocation2 + $0x70] sm:$0xff]
        %v1855 = vld [vmem:[#allocation2 + $0x78] sm:$0xff]
        %v1856 = vld [vmem:[#allocation2 + $0x80] sm:$0xff]
        %v1857 = vld [vmem:[#allocation2 + $0x88] sm:$0xff]
        %v1858 = vld [vmem:[#allocation2 + $0x90] sm:$0xff]
        %v1859 = vld [vmem:[#allocation2 + $0x98] sm:$0xff]
        %v1860 = vld [vmem:[#allocation2 + $0xa0] sm:$0xff]
        %v1861 = vld [vmem:[#allocation2 + $0xa8] sm:$0xff]
        %v1862 = vld [vmem:[#allocation2 + $0xb0] sm:$0xff]
        %v1863 = vld [vmem:[#allocation2 + $0xb8] sm:$0xff]
        %v1864 = vld [vmem:[#allocation2 + $0xc0] sm:$0xff]
        %v1865 = vld [vmem:[#allocation2 + $0xc8] sm:$0xff]
        %v1866 = vld [vmem:[#allocation2 + $0xd0] sm:$0xff]
        %v1867 = vld [vmem:[#allocation2 + $0xd8] sm:$0xff]
        %v1868 = vld [vmem:[#allocation2 + $0xe0] sm:$0xff]
        %v1869 = vld [vmem:[#allocation2 + $0xe8] sm:$0xff]
        %v1870 = vld [vmem:[#allocation2 + $0xf0] sm:$0xff]
        %v1871 = vld [vmem:[#allocation2 + $0xf8] sm:$0xff]
        %v1872 = vld [vmem:[%s210] sm:$0xff]
        %v1873 = vld [vmem:[%s210 + $0x8] sm:$0xff]
        %v1874 = vld [vmem:[%s210 + $0x10] sm:$0xff]
        %v1875 = vld [vmem:[%s210 + $0x18] sm:$0xff]
        %v1876 = vld [vmem:[%s210 + $0x20] sm:$0xf]
        %v1877 = vld [vmem:[%s213] sm:$0x1]
        %v1879 = vperm.slane %v1877, 0
        %v1882 = vsel %vm322, %v1840, 0
        %v1885 = vsel %vm322, %v1841, 0
        %v1888 = vsel %vm322, %v1842, 0
        %v1891 = vsel %vm322, %v1843, 0
        %v1894 = vsel %vm322, %v1844, 0
        %v1897 = vsel %vm322, %v1845, 0
        %v1900 = vsel %vm322, %v1846, 0
        %v1903 = vsel %vm322, %v1847, 0
        %v1906 = vsel %vm322, %v1848, 0
        %v1909 = vsel %vm322, %v1849, 0
        %v1912 = vsel %vm322, %v1850, 0
        %v1915 = vsel %vm322, %v1851, 0
        %v1918 = vsel %vm322, %v1852, 0
        %v1921 = vsel %vm322, %v1853, 0
        %v1924 = vsel %vm322, %v1854, 0
        %v1927 = vsel %vm322, %v1855, 0
        %v1930 = vsel %vm322, %v1856, 0
        %v1933 = vsel %vm322, %v1857, 0
        %v1936 = vsel %vm322, %v1858, 0
        %v1939 = vsel %vm322, %v1859, 0
        %v1942 = vsel %vm322, %v1860, 0
        %v1945 = vsel %vm322, %v1861, 0
        %v1948 = vsel %vm322, %v1862, 0
        %v1951 = vsel %vm322, %v1863, 0
        %v1954 = vsel %vm322, %v1864, 0
        %v1957 = vsel %vm322, %v1865, 0
        %v1960 = vsel %vm322, %v1866, 0
        %v1963 = vsel %vm322, %v1867, 0
        %v1966 = vsel %vm322, %v1868, 0
        %v1969 = vsel %vm322, %v1869, 0
        %v1972 = vsel %vm322, %v1870, 0
        %v1975 = vsel %vm322, %v1871, 0
        %vm1977 = vcmask 1043456
        %v1979 = vsel %vm1977, %v1876, 0
        %1981 = vmatpush.msra.mxu0 0.0
        %1982 = vmatpush.msra.mxu0 0.0
        %1983 = vmatpush.msra.mxu0 0.0
        %1984 = vmatpush.msra.mxu0 0.0
        %1985 = vmatpush.msra.mxu0 0.0
        %1986 = vmatpush.msra.mxu0 0.0
        %1987 = vmatpush.msra.mxu0 0.0
        %1988 = vmatpush.msra.mxu0 0.0
        %1989 = vmatpush.msra.mxu0 0.0
        %1990 = vmatpush.msra.mxu0 0.0
        %1991 = vmatpush.msra.mxu0 0.0
        %1992 = vmatpush.msra.mxu0 %v1979
        %1993 = vmatpush.msra.mxu0 %v1875
        %1994 = vmatpush.msra.mxu0 %v1874
        %1995 = vmatpush.msra.mxu0 %v1873
        %1996 = vmatpush.msra.mxu0 %v1872
        %1997 = vmatmul.f32.gmra.mxu0 %v1882
        %v1998 = vpop.f32.mrf.mxu0
        %v1999 = vadd.f32 %v1879, %v1998
        %2000 = vmatmul.f32.gmra.mxu0 %v1885
        %v2001 = vpop.f32.mrf.mxu0
        %v2002 = vadd.f32 %v1879, %v2001
        %2003 = vmatmul.f32.gmra.mxu0 %v1888
        %v2004 = vpop.f32.mrf.mxu0
        %v2005 = vadd.f32 %v1879, %v2004
        %2006 = vmatmul.f32.gmra.mxu0 %v1891
        %v2007 = vpop.f32.mrf.mxu0
        %v2008 = vadd.f32 %v1879, %v2007
        %2009 = vmatmul.f32.gmra.mxu0 %v1894
        %v2010 = vpop.f32.mrf.mxu0
        %v2011 = vadd.f32 %v1879, %v2010
        %2012 = vmatmul.f32.gmra.mxu0 %v1897
        %v2013 = vpop.f32.mrf.mxu0
        %v2014 = vadd.f32 %v1879, %v2013
        %2015 = vmatmul.f32.gmra.mxu0 %v1900
        %v2016 = vpop.f32.mrf.mxu0
        %v2017 = vadd.f32 %v1879, %v2016
        %2018 = vmatmul.f32.gmra.mxu0 %v1903
        %v2019 = vpop.f32.mrf.mxu0
        %v2020 = vadd.f32 %v1879, %v2019
        %2021 = vmatmul.f32.gmra.mxu0 %v1906
        %v2022 = vpop.f32.mrf.mxu0
        %v2023 = vadd.f32 %v1879, %v2022
        %2024 = vmatmul.f32.gmra.mxu0 %v1909
        %v2025 = vpop.f32.mrf.mxu0
        %v2026 = vadd.f32 %v1879, %v2025
        %2027 = vmatmul.f32.gmra.mxu0 %v1912
        %v2028 = vpop.f32.mrf.mxu0
        %v2029 = vadd.f32 %v1879, %v2028
        %2030 = vmatmul.f32.gmra.mxu0 %v1915
        %v2031 = vpop.f32.mrf.mxu0
        %v2032 = vadd.f32 %v1879, %v2031
        %2033 = vmatmul.f32.gmra.mxu0 %v1918
        %v2034 = vpop.f32.mrf.mxu0
        %v2035 = vadd.f32 %v1879, %v2034
        %2036 = vmatmul.f32.gmra.mxu0 %v1921
        %v2037 = vpop.f32.mrf.mxu0
        %v2038 = vadd.f32 %v1879, %v2037
        %2039 = vmatmul.f32.gmra.mxu0 %v1924
        %v2040 = vpop.f32.mrf.mxu0
        %v2041 = vadd.f32 %v1879, %v2040
        %2042 = vmatmul.f32.gmra.mxu0 %v1927
        %v2043 = vpop.f32.mrf.mxu0
        %v2044 = vadd.f32 %v1879, %v2043
        %2045 = vmatmul.f32.gmra.mxu0 %v1930
        %v2046 = vpop.f32.mrf.mxu0
        %v2047 = vadd.f32 %v1879, %v2046
        %2048 = vmatmul.f32.gmra.mxu0 %v1933
        %v2049 = vpop.f32.mrf.mxu0
        %v2050 = vadd.f32 %v1879, %v2049
        %2051 = vmatmul.f32.gmra.mxu0 %v1936
        %v2052 = vpop.f32.mrf.mxu0
        %v2053 = vadd.f32 %v1879, %v2052
        %2054 = vmatmul.f32.gmra.mxu0 %v1939
        %v2055 = vpop.f32.mrf.mxu0
        %v2056 = vadd.f32 %v1879, %v2055
        %2057 = vmatmul.f32.gmra.mxu0 %v1942
        %v2058 = vpop.f32.mrf.mxu0
        %v2059 = vadd.f32 %v1879, %v2058
        %2060 = vmatmul.f32.gmra.mxu0 %v1945
        %v2061 = vpop.f32.mrf.mxu0
        %v2062 = vadd.f32 %v1879, %v2061
        %2063 = vmatmul.f32.gmra.mxu0 %v1948
        %v2064 = vpop.f32.mrf.mxu0
        %v2065 = vadd.f32 %v1879, %v2064
        %2066 = vmatmul.f32.gmra.mxu0 %v1951
        %v2067 = vpop.f32.mrf.mxu0
        %v2068 = vadd.f32 %v1879, %v2067
        %2069 = vmatmul.f32.gmra.mxu0 %v1954
        %v2070 = vpop.f32.mrf.mxu0
        %v2071 = vadd.f32 %v1879, %v2070
        %2072 = vmatmul.f32.gmra.mxu0 %v1957
        %v2073 = vpop.f32.mrf.mxu0
        %v2074 = vadd.f32 %v1879, %v2073
        %2075 = vmatmul.f32.gmra.mxu0 %v1960
        %v2076 = vpop.f32.mrf.mxu0
        %v2077 = vadd.f32 %v1879, %v2076
        %2078 = vmatmul.f32.gmra.mxu0 %v1963
        %v2079 = vpop.f32.mrf.mxu0
        %v2080 = vadd.f32 %v1879, %v2079
        %2081 = vmatmul.f32.gmra.mxu0 %v1966
        %v2082 = vpop.f32.mrf.mxu0
        %v2083 = vadd.f32 %v1879, %v2082
        %2084 = vmatmul.f32.gmra.mxu0 %v1969
        %v2085 = vpop.f32.mrf.mxu0
        %v2086 = vadd.f32 %v1879, %v2085
        %2087 = vmatmul.f32.gmra.mxu0 %v1972
        %v2088 = vpop.f32.mrf.mxu0
        %v2089 = vadd.f32 %v1879, %v2088
        %2090 = vmatmul.f32.gmra.mxu0 %v1975
        %v2091 = vpop.f32.mrf.mxu0
        %v2092 = vadd.f32 %v1879, %v2091
        %2093 = vdwg.mxu0
        %v2094 = vmax.f32 %v1999, 0.0
        %v2095 = vmax.f32 %v2002, 0.0
        %v2096 = vmax.f32 %v2005, 0.0
        %v2097 = vmax.f32 %v2008, 0.0
        %v2098 = vmax.f32 %v2011, 0.0
        %v2099 = vmax.f32 %v2014, 0.0
        %v2100 = vmax.f32 %v2017, 0.0
        %v2101 = vmax.f32 %v2020, 0.0
        %v2102 = vmax.f32 %v2023, 0.0
        %v2103 = vmax.f32 %v2026, 0.0
        %v2104 = vmax.f32 %v2029, 0.0
        %v2105 = vmax.f32 %v2032, 0.0
        %v2106 = vmax.f32 %v2035, 0.0
        %v2107 = vmax.f32 %v2038, 0.0
        %v2108 = vmax.f32 %v2041, 0.0
        %v2109 = vmax.f32 %v2044, 0.0
        %v2110 = vmax.f32 %v2047, 0.0
        %v2111 = vmax.f32 %v2050, 0.0
        %v2112 = vmax.f32 %v2053, 0.0
        %v2113 = vmax.f32 %v2056, 0.0
        %v2114 = vmax.f32 %v2059, 0.0
        %v2115 = vmax.f32 %v2062, 0.0
        %v2116 = vmax.f32 %v2065, 0.0
        %v2117 = vmax.f32 %v2068, 0.0
        %v2118 = vmax.f32 %v2071, 0.0
        %v2119 = vmax.f32 %v2074, 0.0
        %v2120 = vmax.f32 %v2077, 0.0
        %v2121 = vmax.f32 %v2080, 0.0
        %v2122 = vmax.f32 %v2083, 0.0
        %v2123 = vmax.f32 %v2086, 0.0
        %v2124 = vmax.f32 %v2089, 0.0
        %v2125 = vmax.f32 %v2092, 0.0
        %2126 = vst [vmem:[%s201] sm:$0xff] %v2094
        %2127 = vst [vmem:[%s201 + $0x8] sm:$0xff] %v2095
        %2128 = vst [vmem:[%s201 + $0x10] sm:$0xff] %v2096
        %2129 = vst [vmem:[%s201 + $0x18] sm:$0xff] %v2097
        %2130 = vst [vmem:[%s201 + $0x20] sm:$0xff] %v2098
        %2131 = vst [vmem:[%s201 + $0x28] sm:$0xff] %v2099
        %2132 = vst [vmem:[%s201 + $0x30] sm:$0xff] %v2100
        %2133 = vst [vmem:[%s201 + $0x38] sm:$0xff] %v2101
        %2134 = vst [vmem:[%s201 + $0x40] sm:$0xff] %v2102
        %2135 = vst [vmem:[%s201 + $0x48] sm:$0xff] %v2103
        %2136 = vst [vmem:[%s201 + $0x50] sm:$0xff] %v2104
        %2137 = vst [vmem:[%s201 + $0x58] sm:$0xff] %v2105
        %2138 = vst [vmem:[%s201 + $0x60] sm:$0xff] %v2106
        %2139 = vst [vmem:[%s201 + $0x68] sm:$0xff] %v2107
        %2140 = vst [vmem:[%s201 + $0x70] sm:$0xff] %v2108
        %2141 = vst [vmem:[%s201 + $0x78] sm:$0xff] %v2109
        %2142 = vst [vmem:[%s201 + $0x80] sm:$0xff] %v2110
        %2143 = vst [vmem:[%s201 + $0x88] sm:$0xff] %v2111
        %2144 = vst [vmem:[%s201 + $0x90] sm:$0xff] %v2112
        %2145 = vst [vmem:[%s201 + $0x98] sm:$0xff] %v2113
        %2146 = vst [vmem:[%s201 + $0xa0] sm:$0xff] %v2114
        %2147 = vst [vmem:[%s201 + $0xa8] sm:$0xff] %v2115
        %2148 = vst [vmem:[%s201 + $0xb0] sm:$0xff] %v2116
        %2149 = vst [vmem:[%s201 + $0xb8] sm:$0xff] %v2117
        %2150 = vst [vmem:[%s201 + $0xc0] sm:$0xff] %v2118
        %2151 = vst [vmem:[%s201 + $0xc8] sm:$0xff] %v2119
        %2152 = vst [vmem:[%s201 + $0xd0] sm:$0xff] %v2120
        %2153 = vst [vmem:[%s201 + $0xd8] sm:$0xff] %v2121
        %2154 = vst [vmem:[%s201 + $0xe0] sm:$0xff] %v2122
        %2155 = vst [vmem:[%s201 + $0xe8] sm:$0xff] %v2123
        %2156 = vst [vmem:[%s201 + $0xf0] sm:$0xff] %v2124
        %2157 = vst [vmem:[%s201 + $0xf8] sm:$0xff] %v2125
        %s2158 = sand.u32 %s117, 1
        %s2159 = scalar_lea.sflag [#allocation4], %s2158
        %s2160 = sand.u32 %s117, 1
        %s2161 = smul.addr %s2160, 256
        %s2162 = scalar_lea.vmem [#allocation3], %s2161
        // Predicated region
        $region33: #{tpu_custom_call.1} parent=31 // pred_check
          %p2163 = pneg %p127
        $region34: #{tpu_custom_call.1} parent=31 // pred_check_branch
          %2165 = sbr.rel (%p2163) target = $region36
        $region35: #{tpu_custom_call.1} parent=31 // pred_region
          %2167 = vsyncadd %s2159, 0
          %s2168 = smul.addr %s21, 32
          %s2169 = sadd.s32 %s22, %s2168
          %s2170 = smul.addr %s2169, 8
          %s2171 = scalar_lea.hbm %s3, %s2170
          %s2172 = sshll.u32 %s2162, 4
          %s2173 = int_to_ptr.vmem [resolvable:$true] %s2172
          %s2174 = sshll.u32 %s2171, 4
          %s2175 = int_to_ptr.hbm [resolvable:$true] %s2174
          %2180 = dma.vmem_to_hbm [thread:$0]  %s2173, 4096, %s2175, %s2159, 128, 128, 8
        $region36: #{tpu_custom_call.1} parent=31 // pred_fallthru
          _
      $region32: #{tpu_custom_call.1} parent=5 // pred_fallthru
        _
      %p2181 = scmp.le.s32.totalorder 2, %s12
      // Predicated region
      $region37: #{tpu_custom_call.1} parent=5 // pred_check
        %p2182 = pneg %p2181
      $region38: #{tpu_custom_call.1} parent=5 // pred_check_branch
        %2184 = sbr.rel (%p2182) target = $region40
      $region39: #{tpu_custom_call.1} parent=5 // pred_region
        %s2185 = ssub.s32 %s12, 2
        // Predicated region
        $region41: #{tpu_custom_call.1} parent=39 // pred_check
          %p2186 = pneg %p133
        $region42: #{tpu_custom_call.1} parent=39 // pred_check_branch
          %2188 = sbr.rel (%p2186) target = $region44
        $region43: #{tpu_custom_call.1} parent=39 // pred_region
          %s2189 = sand.u32 %s118, 1
          %s2190 = scalar_lea.sflag [#allocation4], %s2189
          %s2191 = sand.u32 %s118, 1
          %s2192 = smul.addr %s2191, 256
          %s2193 = scalar_lea.vmem [#allocation3], %s2192
          %2195 = dma.done %s2190, 4096
        $region44: #{tpu_custom_call.1} parent=39 // pred_fallthru
          _
      $region40: #{tpu_custom_call.1} parent=5 // pred_fallthru
        _
    $region6: #{tpu_custom_call.1} parent=1 // loop_footer
      %s16 = sadd.s32 1, %s12
    $region7: #{tpu_custom_call.1} parent=1 // loop_footer_branch
      %11 = sbr.rel target = $region3
    $region8: #{tpu_custom_call.1} parent=1 // loop_exit
      _
    %2196 = vsyncpa [#allocation4], 1
    %s2197 = scalar_lea.sflag [#allocation4], 1
    %2198 = vsyncpa %s2197, 1

</llo_original>
